<compile_context>
chip_gen: v7x
topology: tpu7x:2x2x1
jax: 0.10.0
libtpu: 0.0.40
codegen_flags: <defaults>
</compile_context>

<pallas_src>
import functools

import jax
import jax.numpy as jnp
from jax.experimental import pallas as pl
from jax.experimental.pallas import tpu as pltpu

PAD_ID = 0            # tokenizer.pad_token_id stand-in (cross_entropy ignore_index)
_CDT = jnp.bfloat16   # MXU-input dtype for weights (accumulation stays fp32)

# packed attention-weight rows inside the (L, 8, D, D) array
_SA_WQ, _SA_WK, _SA_WV, _SA_WO, _CA_WQ, _CA_WK, _CA_WV, _CA_WO = range(8)
# packed small per-layer params inside the (L, 15, D) array
(_LN1G, _LN1B, _SA_BQ, _SA_BK, _SA_BV, _SA_BO,
 _LN2G, _LN2B, _CA_BQ, _CA_BK, _CA_BV, _CA_BO,
 _LN3G, _LN3B, _PJ_B) = range(15)
_N_SMALL = 15


# ------------------------------ small helpers ------------------------------

def _round_up(a, m):
    return (a + m - 1) // m * m


def _chip_vmem_cap():
    """~75% of the physical per-core VMEM (v5e/v6e 128 MiB, v7x 64 MiB)."""
    try:
        cap = int(pltpu.get_tpu_info().vmem_capacity_bytes)
    except Exception:  # conservative fallback that is valid on every chip
        cap = 64 << 20
    return (cap * 3) // 4


def _vmem_limit(need_bytes):
    cap = _chip_vmem_cap()
    return int(min(max(need_bytes + (8 << 20), 32 << 20), cap))


def _pick_bt(batch, est_fn):
    """Largest divisor of `batch` whose VMEM estimate fits the chip budget."""
    cap = _chip_vmem_cap()
    for bt in range(batch, 0, -1):
        if batch % bt == 0 and est_fn(bt) + (8 << 20) <= cap:
            return bt
    return 1


def _layer_norm(x, g, b, eps=1e-5):
    mu = jnp.mean(x, axis=-1, keepdims=True)
    var = jnp.mean(jnp.square(x - mu), axis=-1, keepdims=True)
    return (x - mu) * jax.lax.rsqrt(var + eps) * g + b


# ----------------------- fused decoder stack kernel ------------------------

def _decoder_stack_kernel(x_ref, enc_ref, attw_ref, fcw_ref, pjw_ref,
                          small_ref, fcb_ref, out_ref,
                          resid_sc, mask_sc, ctx_sc, *, n_heads, bt):
    layer = pl.program_id(1)
    _, T, D = x_ref.shape
    S = enc_ref.shape[1]
    M = bt * T
    hd = D // n_heads
    cdt = attw_ref.dtype

    # per-batch-block init: seed the fp32 residual stream, build the causal mask
    @pl.when(layer == 0)
    def _():
        resid_sc[...] = x_ref[...].reshape(M, D).astype(jnp.float32)
        row = jax.lax.broadcasted_iota(jnp.int32, (T, T), 0)
        col = jax.lax.broadcasted_iota(jnp.int32, (T, T), 1)
        mask_sc[...] = jnp.where(col > row, -1e30, 0.0).astype(jnp.float32)

    small = small_ref[0]                           # (15, D) f32 packed params

    def p1(i):                                     # (1, D) broadcastable row
        return small[i:i + 1, :]

    def mha(q_in, kv_in, n_kv, iq, ik, iv, io, bq, bk, bv, bo, causal):
        """Multi-head attention: projections flattened over the whole Bt-block
        (wide MXU M dim); scores per batch element with heads batched on MXU."""
        wq = attw_ref[0, iq]
        wk = attw_ref[0, ik]
        wv = attw_ref[0, iv]
        wo = attw_ref[0, io]
        q = jnp.dot(q_in.astype(cdt), wq, preferred_element_type=jnp.float32) + bq
        k = jnp.dot(kv_in.astype(cdt), wk, preferred_element_type=jnp.float32) + bk
        v = jnp.dot(kv_in.astype(cdt), wv, preferred_element_type=jnp.float32) + bv
        q = q * (hd ** -0.5)
        for b in range(bt):
            qb = jnp.swapaxes(q[b * T:(b + 1) * T].reshape(T, n_heads, hd), 0, 1)
            kb = jnp.swapaxes(k[b * n_kv:(b + 1) * n_kv].reshape(n_kv, n_heads, hd),
                              0, 1)
            vb = jnp.swapaxes(v[b * n_kv:(b + 1) * n_kv].reshape(n_kv, n_heads, hd),
                              0, 1)
            s = jax.lax.dot_general(qb.astype(cdt), kb.astype(cdt),
                                    (((2,), (2,)), ((0,), (0,))),
                                    preferred_element_type=jnp.float32)  # (H,T,n_kv)
            if causal:
                s = s + mask_sc[...][None, :, :]
            s = s - jnp.max(s, axis=-1, keepdims=True)
            p = jnp.exp(s)
            p = p / jnp.sum(p, axis=-1, keepdims=True)        # exact softmax
            ob = jax.lax.dot_general(p.astype(cdt), vb.astype(cdt),
                                     (((2,), (1,)), ((0,), (0,))),
                                     preferred_element_type=jnp.float32)  # (H,T,hd)
            ctx_sc[b * T:(b + 1) * T, :] = (
                jnp.swapaxes(ob, 0, 1).reshape(T, D).astype(ctx_sc.dtype))
        return jnp.dot(ctx_sc[...], wo, preferred_element_type=jnp.float32) + bo

    x = resid_sc[...]                                          # (M, D) fp32
    enc2d = enc_ref[...].reshape(bt * S, D).astype(jnp.float32)

    # causal multi-head self-attention (pre-LN, residual)
    xn = _layer_norm(x, p1(_LN1G), p1(_LN1B))
    x = x + mha(xn, xn, T, _SA_WQ, _SA_WK, _SA_WV, _SA_WO,
                p1(_SA_BQ), p1(_SA_BK), p1(_SA_BV), p1(_SA_BO), True)

    # cross-attention to encoder hidden states (source_attn_mask=None)
    xn = _layer_norm(x, p1(_LN2G), p1(_LN2B))
    x = x + mha(xn, enc2d, S, _CA_WQ, _CA_WK, _CA_WV, _CA_WO,
                p1(_CA_BQ), p1(_CA_BK), p1(_CA_BV), p1(_CA_BO), False)

    # MLP: c_fc -> GELU -> c_proj
    # TODO(synk): reference MLP class not shown (nn.GELU exact-erf vs QuickGELU);
    # tanh-approximate GELU used here.
    xn = _layer_norm(x, p1(_LN3G), p1(_LN3B))
    h = jnp.dot(xn.astype(cdt), fcw_ref[0],
                preferred_element_type=jnp.float32) + fcb_ref[0]
    h = jax.nn.gelu(h, approximate=True)
    x = x + jnp.dot(h.astype(cdt), pjw_ref[0],
                    preferred_element_type=jnp.float32) + p1(_PJ_B)

    resid_sc[...] = x

    @pl.when(layer == pl.num_programs(1) - 1)
    def _():
        out_ref[...] = x.reshape(bt, T, D).astype(out_ref.dtype)


def decoder_stack(x, enc, params, n_heads):
    B, T, D = x.shape
    S = enc.shape[1]
    attn_w, fc_w, pj_w = params['attn_w'], params['fc_w'], params['pj_w']
    small, fc_b = params['small'], params['fc_b']
    L = attn_w.shape[0]

    def est(bt):
        m = bt * T
        act = 4 * m * D * 4 + 2 * bt * S * D * 4                    # x/out + enc (db, f32)
        wts = 2 * (16 * D * D * 2 + _N_SMALL * D * 4 + 4 * D * 4)   # db bf16 weights
        scr = m * D * 4 + T * T * 4 + m * D * 2                     # resid, mask, ctx
        live = (6 * m * D + 2 * bt * n_heads * T * max(T, S) + 2 * m * 4 * D) * 4
        return act + wts + scr + live

    Bt = _pick_bt(B, est)

    return pl.pallas_call(
        functools.partial(_decoder_stack_kernel, n_heads=n_heads, bt=Bt),
        out_shape=jax.ShapeDtypeStruct((B, T, D), jnp.float32),
        grid=(B // Bt, L),
        in_specs=[
            pl.BlockSpec((Bt, T, D), lambda b, l: (b, 0, 0)),
            pl.BlockSpec((Bt, S, D), lambda b, l: (b, 0, 0)),
            pl.BlockSpec((1, 8, D, D), lambda b, l: (l, 0, 0, 0)),
            pl.BlockSpec((1, D, 4 * D), lambda b, l: (l, 0, 0)),
            pl.BlockSpec((1, 4 * D, D), lambda b, l: (l, 0, 0)),
            pl.BlockSpec((1, _N_SMALL, D), lambda b, l: (l, 0, 0)),
            pl.BlockSpec((1, 1, 4 * D), lambda b, l: (l, 0, 0)),
        ],
        out_specs=pl.BlockSpec((Bt, T, D), lambda b, l: (b, 0, 0)),
        scratch_shapes=[pltpu.VMEM((Bt * T, D), jnp.float32),   # residual stream
                        pltpu.VMEM((T, T), jnp.float32),        # causal mask
                        pltpu.VMEM((Bt * T, D), _CDT)],         # attention context
        compiler_params=pltpu.CompilerParams(
            dimension_semantics=("parallel", "arbitrary"),
            vmem_limit_bytes=_vmem_limit(est(Bt))),
    )(x, enc, attn_w, fc_w, pj_w, small, fc_b)


# -------- ln_final + vocab proj + cross entropy (vocab-tiled, fused) --------

def _ce_head_kernel(x_ref, tgt_ref, lnfg, lnfb, pw, pb, loss_ref, cnt_ref,
                    xn_sc, m_sc, l_sc, t_sc, *, pad_id, v_tile):
    v = pl.program_id(1)
    bt, T, D = x_ref.shape
    M = bt * T

    @pl.when(v == 0)
    def _():
        xn_sc[...] = _layer_norm(x_ref[...].reshape(M, D).astype(jnp.float32),
                                 lnfg[...], lnfb[...])
        m_sc[...] = jnp.full_like(m_sc, -1e30)
        l_sc[...] = jnp.zeros_like(l_sc)
        t_sc[...] = jnp.zeros_like(t_sc)

    # (M, VT) logits for this vocab tile; proj_w streamed in (D, VT) blocks
    logits = jnp.dot(xn_sc[...].astype(pw.dtype), pw[...],
                     preferred_element_type=jnp.float32) + pb[...]

    tgt = tgt_ref[...].reshape(M, 1)                            # int32
    col = jax.lax.broadcasted_iota(jnp.int32, (M, v_tile), 1) + v * v_tile
    t_sc[...] += jnp.sum(jnp.where(col == tgt, logits, 0.0),
                         axis=-1, keepdims=True)

    # streaming logsumexp over vocab tiles
    m_prev = m_sc[...]
    m_new = jnp.maximum(m_prev, jnp.max(logits, axis=-1, keepdims=True))
    l_sc[...] = (l_sc[...] * jnp.exp(m_prev - m_new)
                 + jnp.sum(jnp.exp(logits - m_new), axis=-1, keepdims=True))
    m_sc[...] = m_new

    @pl.when(v == pl.num_programs(1) - 1)
    def _():
        nll = m_sc[...] + jnp.log(l_sc[...]) - t_sc[...]        # (M, 1)
        valid = (tgt != pad_id).astype(jnp.float32)             # ignore_index mask
        loss_ref[0] = jnp.sum(nll * valid, keepdims=True)
        cnt_ref[0] = jnp.sum(valid, keepdims=True)


def ce_head(x, tgt, params, pad_id):
    B, T, D = x.shape
    V = params['proj_w'].shape[1]

    # vocab tile: lane-dense multiple of 128, up to 1024; padded columns get a
    # -1e30 bias so they never affect max / logsumexp, and targets never hit them
    VT = min(_round_up(V, 128), 1024)
    Vp = _round_up(V, VT)
    pw, pb = params['proj_w'], params['proj_b']
    if Vp != V:
        pw = jnp.pad(pw, ((0, 0), (0, Vp - V)))
        pb = jnp.pad(pb, ((0, 0), (0, Vp - V)), constant_values=-1e30)
    n_vt = Vp // VT
    lnfg, lnfb = params['lnf_g'], params['lnf_b']

    def est(bt):
        m = bt * T
        act = 2 * (m * D * 4 + m * 4)                       # x + tgt blocks (db)
        wts = 2 * (D * VT * 2 + VT * 4) + 4 * D * 4         # db weight/bias tiles
        scr = m * D * 4 + 3 * m * 128 * 4                   # xn + (M,1) stats (lane-padded)
        live = 3 * m * VT * 4                               # logits + exp temporaries
        return act + wts + scr + live

    Bt = _pick_bt(B, est)
    NB = B // Bt

    return pl.pallas_call(
        functools.partial(_ce_head_kernel, pad_id=pad_id, v_tile=VT),
        out_shape=(jax.ShapeDtypeStruct((NB, 1, 1), jnp.float32),
                   jax.ShapeDtypeStruct((NB, 1, 1), jnp.float32)),
        grid=(NB, n_vt),
        in_specs=[pl.BlockSpec((Bt, T, D), lambda b, v: (b, 0, 0)),
                  pl.BlockSpec((Bt, T, 1), lambda b, v: (b, 0, 0)),
                  pl.BlockSpec((1, D), lambda b, v: (0, 0)),
                  pl.BlockSpec((1, D), lambda b, v: (0, 0)),
                  pl.BlockSpec((D, VT), lambda b, v: (0, v)),
                  pl.BlockSpec((1, VT), lambda b, v: (0, v))],
        out_specs=(pl.BlockSpec((1, 1, 1), lambda b, v: (b, 0, 0)),
                   pl.BlockSpec((1, 1, 1), lambda b, v: (b, 0, 0))),
        scratch_shapes=[pltpu.VMEM((Bt * T, D), jnp.float32),   # ln_final(x), fp32
                        pltpu.VMEM((Bt * T, 1), jnp.float32),   # running max
                        pltpu.VMEM((Bt * T, 1), jnp.float32),   # running sum-exp
                        pltpu.VMEM((Bt * T, 1), jnp.float32)],  # target logit
        compiler_params=pltpu.CompilerParams(
            dimension_semantics=("parallel", "arbitrary"),
            vmem_limit_bytes=_vmem_limit(est(Bt))),
    )(x, tgt, lnfg, lnfb, pw, pb)


# -------------------------------- parameters --------------------------------

def init_params(key, vocab, context_length, width, n_layers):
    D, L = width, n_layers
    proj_std = D ** -0.5 * (2 * n_layers) ** -0.5
    attn_std = D ** -0.5
    fc_std = (2 * D) ** -0.5
    keys = iter(jax.random.split(key, 16))

    def nrm(shape, std, dtype=_CDT):
        return (jax.random.normal(next(keys), shape, jnp.float32) * std).astype(dtype)

    # packed (L, 8, D, D): [sa_wq sa_wk sa_wv sa_wo ca_wq ca_wk ca_wv ca_wo]
    attn_w = jnp.stack(
        [nrm((L, D, D), attn_std), nrm((L, D, D), attn_std),
         nrm((L, D, D), attn_std), nrm((L, D, D), proj_std),
         nrm((L, D, D), attn_std), nrm((L, D, D), attn_std),
         nrm((L, D, D), attn_std), nrm((L, D, D), proj_std)], axis=1)

    # packed (L, 15, D): LayerNorm gains = 1, every bias = 0
    small = jnp.zeros((L, _N_SMALL, D), jnp.float32)
    small = (small.at[:, _LN1G].set(1.0)
                  .at[:, _LN2G].set(1.0)
                  .at[:, _LN3G].set(1.0))

    return {
        'tok_emb': nrm((vocab, D), 0.02, jnp.float32),
        'pos_emb': nrm((context_length, D), 0.01, jnp.float32),
        'attn_w': attn_w,
        'fc_w': nrm((L, D, 4 * D), fc_std),
        'pj_w': nrm((L, 4 * D, D), proj_std),
        'small': small,
        'fc_b': jnp.zeros((L, 1, 4 * D), jnp.float32),
        'lnf_g': jnp.ones((1, D), jnp.float32),
        'lnf_b': jnp.zeros((1, D), jnp.float32),
        # nn.Linear(D, vocab) default init replaced by deterministic normal
        'proj_w': nrm((D, vocab), 0.02),
        'proj_b': jnp.zeros((1, vocab), jnp.float32),
    }


# --------------------------------- forward ----------------------------------

def pepbart_forward(smi_tokens, aa_embd, params, n_heads):
    """PepBART.forward with mlm=False: decoder LM loss only."""
    smi_inputs = smi_tokens[:, :-1]            # (B, T)
    smi_target = smi_tokens[:, 1:]             # (B, T)

    # glue: token-embedding gather + positional embedding add (fp32)
    x = params['tok_emb'][smi_inputs] + params['pos_emb'][None, :, :]
    x = x.astype(jnp.float32)
    enc = aa_embd.astype(jnp.float32)

    x = decoder_stack(x, enc, params, n_heads)

    tgt = smi_target.astype(jnp.int32)[..., None]           # (B, T, 1)
    losses, counts = ce_head(x, tgt, params, PAD_ID)        # per-block partial sums
    # F.cross_entropy(..., ignore_index=pad): mean over non-ignored tokens
    # (denominator clamped to 1 to avoid NaN when every token is padding)
    return jnp.sum(losses) / jnp.maximum(jnp.sum(counts), 1.0)


# ----------------------------------- main ------------------------------------

if __name__ == "__main__":
    B, CTX, S_ENC, D, H, L, V = 2, 8, 8, 32, 2, 2, 40

    key = jax.random.PRNGKey(0)
    k_params, k_tok, k_enc = jax.random.split(key, 3)

    params = init_params(k_params, V, CTX, D, L)

    # smi tokens padded to context_length + 1 (as tokenize_inputs does)
    smi_tokens = jax.random.randint(k_tok, (B, CTX + 1), 1, V, dtype=jnp.int32)
    smi_tokens = smi_tokens.at[:, -2:].set(PAD_ID)  # trailing pad exercises ignore_index

    # encoder hidden states (aa_encoder.embed output stand-in), (B, S, D)
    aa_embd = jax.random.normal(k_enc, (B, S_ENC, D), jnp.float32) * 0.02

    fwd = jax.jit(pepbart_forward, static_argnames=("n_heads",))
    loss = fwd(smi_tokens, aa_embd, params, n_heads=H)
    jax.block_until_ready(loss)
    assert loss.shape == () and jnp.isfinite(loss)
    print("KERNEL_OK")
</pallas_src>

<mosaic_0001>
module attributes {stable_mosaic.version = 11 : i64} {
  func.func @_decoder_stack_kernel(%arg0: i32, %arg1: i32, %arg2: memref<2x8x32xf32, #tpu.memory_space<vmem>>, %arg3: memref<2x8x32xf32, #tpu.memory_space<vmem>>, %arg4: memref<1x8x32x32xbf16, #tpu.memory_space<vmem>>, %arg5: memref<1x32x128xbf16, #tpu.memory_space<vmem>>, %arg6: memref<1x128x32xbf16, #tpu.memory_space<vmem>>, %arg7: memref<1x15x32xf32, #tpu.memory_space<vmem>>, %arg8: memref<1x1x128xf32, #tpu.memory_space<vmem>>, %arg9: memref<2x8x32xf32, #tpu.memory_space<vmem>>, %arg10: memref<16x32xf32, #tpu.memory_space<vmem>>, %arg11: memref<8x8xf32, #tpu.memory_space<vmem>>, %arg12: memref<16x32xbf16, #tpu.memory_space<vmem>>) attributes {dimension_semantics = [#tpu.dimension_semantics<parallel>, #tpu.dimension_semantics<arbitrary>], iteration_bounds = array<i64: 1, 2>, scalar_prefetch = 0 : i64, scratch_operands = 3 : i64, tpu.core_type = #tpu.core_type<tc>, window_params = [{transform_indices = @transform_0, window_bounds = array<i64: 2, 8, 32>}, {transform_indices = @transform_1, window_bounds = array<i64: 2, 8, 32>}, {transform_indices = @transform_2, window_bounds = array<i64: 1, 8, 32, 32>}, {transform_indices = @transform_3, window_bounds = array<i64: 1, 32, 128>}, {transform_indices = @transform_4, window_bounds = array<i64: 1, 128, 32>}, {transform_indices = @transform_5, window_bounds = array<i64: 1, 15, 32>}, {transform_indices = @transform_6, window_bounds = array<i64: 1, 1, 128>}, {transform_indices = @transform_7, window_bounds = array<i64: 2, 8, 32>}]} {
    %c0_i32 = arith.constant 0 : i32
    %0 = arith.cmpi eq, %arg1, %c0_i32 : i32
    %1 = arith.extui %0 : i1 to i32
    %c0_i32_0 = arith.constant 0 : i32
    %2 = arith.cmpi ne, %1, %c0_i32_0 : i32
    scf.if %2 {
      %c0_106 = arith.constant 0 : index
      %c0_107 = arith.constant 0 : index
      %c0_108 = arith.constant 0 : index
      %295 = vector.load %arg2[%c0_106, %c0_107, %c0_108] : memref<2x8x32xf32, #tpu.memory_space<vmem>>, vector<2x8x32xf32>
      %296 = vector.shape_cast %295 : vector<2x8x32xf32> to vector<16x32xf32>
      %c0_109 = arith.constant 0 : index
      %c0_110 = arith.constant 0 : index
      %297 = vector.load %arg10[%c0_109, %c0_110] : memref<16x32xf32, #tpu.memory_space<vmem>>, vector<16x32xf32>
      tpu.vector_store %arg10[%c0_109, %c0_110], %296 {strides = array<i32>} : memref<16x32xf32, #tpu.memory_space<vmem>>, vector<16x32xf32>,
      %298 = tpu.iota {dimensions = array<i32: 0>} : vector<8x8xi32>
      %299 = tpu.iota {dimensions = array<i32: 1>} : vector<8x8xi32>
      %300 = arith.cmpi sgt, %299, %298 : vector<8x8xi32>
      %cst_111 = arith.constant -1.000000e+30 : f32
      %cst_112 = arith.constant 0.000000e+00 : f32
      %301 = vector.broadcast %cst_111 : f32 to vector<8x8xf32>
      %302 = vector.broadcast %cst_112 : f32 to vector<8x8xf32>
      %303 = arith.select %300, %301, %302 : vector<8x8xi1>, vector<8x8xf32>
      %c0_113 = arith.constant 0 : index
      %c0_114 = arith.constant 0 : index
      %304 = vector.load %arg11[%c0_113, %c0_114] : memref<8x8xf32, #tpu.memory_space<vmem>>, vector<8x8xf32>
      tpu.vector_store %arg11[%c0_113, %c0_114], %303 {strides = array<i32>} : memref<8x8xf32, #tpu.memory_space<vmem>>, vector<8x8xf32>,
    } else {
    }
    %c0 = arith.constant 0 : index
    %c0_1 = arith.constant 0 : index
    %c0_2 = arith.constant 0 : index
    %3 = vector.load %arg7[%c0, %c0_1, %c0_2] : memref<1x15x32xf32, #tpu.memory_space<vmem>>, vector<1x15x32xf32>
    %4 = vector.shape_cast %3 : vector<1x15x32xf32> to vector<15x32xf32>
    %c0_3 = arith.constant 0 : index
    %c0_4 = arith.constant 0 : index
    %5 = vector.load %arg10[%c0_3, %c0_4] : memref<16x32xf32, #tpu.memory_space<vmem>>, vector<16x32xf32>
    %c0_5 = arith.constant 0 : index
    %c0_6 = arith.constant 0 : index
    %c0_7 = arith.constant 0 : index
    %6 = vector.load %arg3[%c0_5, %c0_6, %c0_7] : memref<2x8x32xf32, #tpu.memory_space<vmem>>, vector<2x8x32xf32>
    %7 = vector.shape_cast %6 : vector<2x8x32xf32> to vector<16x32xf32>
    %8 = vector.extract_strided_slice %4 {offsets = [0, 0], sizes = [1, 32], strides = [1, 1]} : vector<15x32xf32> to vector<1x32xf32>
    %9 = vector.extract_strided_slice %4 {offsets = [1, 0], sizes = [1, 32], strides = [1, 1]} : vector<15x32xf32> to vector<1x32xf32>
    %cst = arith.constant dense<0.000000e+00> : vector<16xf32>
    %10 = vector.multi_reduction <add>, %5, %cst [1] : vector<16x32xf32> to vector<16xf32>
    %11 = vector.shape_cast %10 : vector<16xf32> to vector<16x1xf32>
    %cst_8 = arith.constant 3.200000e+01 : f32
    %12 = vector.broadcast %cst_8 : f32 to vector<16x1xf32>
    %13 = arith.divf %11, %12 : vector<16x1xf32>
    %14 = vector.broadcast %13 : vector<16x1xf32> to vector<16x32xf32>
    %15 = arith.subf %5, %14 : vector<16x32xf32>
    %16 = arith.mulf %15, %15 : vector<16x32xf32>
    %cst_9 = arith.constant dense<0.000000e+00> : vector<16xf32>
    %17 = vector.multi_reduction <add>, %16, %cst_9 [1] : vector<16x32xf32> to vector<16xf32>
    %18 = vector.shape_cast %17 : vector<16xf32> to vector<16x1xf32>
    %cst_10 = arith.constant 3.200000e+01 : f32
    %19 = vector.broadcast %cst_10 : f32 to vector<16x1xf32>
    %20 = arith.divf %18, %19 : vector<16x1xf32>
    %21 = vector.broadcast %13 : vector<16x1xf32> to vector<16x32xf32>
    %22 = arith.subf %5, %21 : vector<16x32xf32>
    %cst_11 = arith.constant 9.99999974E-6 : f32
    %23 = vector.broadcast %cst_11 : f32 to vector<16x1xf32>
    %24 = arith.addf %20, %23 : vector<16x1xf32>
    %25 = math.rsqrt %24 : vector<16x1xf32>
    %26 = vector.broadcast %25 : vector<16x1xf32> to vector<16x32xf32>
    %27 = arith.mulf %22, %26 : vector<16x32xf32>
    %28 = vector.broadcast %8 : vector<1x32xf32> to vector<16x32xf32>
    %29 = arith.mulf %27, %28 : vector<16x32xf32>
    %30 = vector.broadcast %9 : vector<1x32xf32> to vector<16x32xf32>
    %31 = arith.addf %29, %30 : vector<16x32xf32>
    %32 = vector.extract_strided_slice %4 {offsets = [2, 0], sizes = [1, 32], strides = [1, 1]} : vector<15x32xf32> to vector<1x32xf32>
    %33 = vector.extract_strided_slice %4 {offsets = [3, 0], sizes = [1, 32], strides = [1, 1]} : vector<15x32xf32> to vector<1x32xf32>
    %34 = vector.extract_strided_slice %4 {offsets = [4, 0], sizes = [1, 32], strides = [1, 1]} : vector<15x32xf32> to vector<1x32xf32>
    %35 = vector.extract_strided_slice %4 {offsets = [5, 0], sizes = [1, 32], strides = [1, 1]} : vector<15x32xf32> to vector<1x32xf32>
    %c0_12 = arith.constant 0 : index
    %c0_13 = arith.constant 0 : index
    %c0_14 = arith.constant 0 : index
    %c0_15 = arith.constant 0 : index
    %36 = vector.load %arg4[%c0_12, %c0_13, %c0_14, %c0_15] : memref<1x8x32x32xbf16, #tpu.memory_space<vmem>>, vector<1x1x32x32xbf16>
    %37 = vector.shape_cast %36 : vector<1x1x32x32xbf16> to vector<32x32xbf16>
    %c0_16 = arith.constant 0 : index
    %c1 = arith.constant 1 : index
    %c0_17 = arith.constant 0 : index
    %c0_18 = arith.constant 0 : index
    %38 = vector.load %arg4[%c0_16, %c1, %c0_17, %c0_18] : memref<1x8x32x32xbf16, #tpu.memory_space<vmem>>, vector<1x1x32x32xbf16>
    %39 = vector.shape_cast %38 : vector<1x1x32x32xbf16> to vector<32x32xbf16>
    %c0_19 = arith.constant 0 : index
    %c2 = arith.constant 2 : index
    %c0_20 = arith.constant 0 : index
    %c0_21 = arith.constant 0 : index
    %40 = vector.load %arg4[%c0_19, %c2, %c0_20, %c0_21] : memref<1x8x32x32xbf16, #tpu.memory_space<vmem>>, vector<1x1x32x32xbf16>
    %41 = vector.shape_cast %40 : vector<1x1x32x32xbf16> to vector<32x32xbf16>
    %c0_22 = arith.constant 0 : index
    %c3 = arith.constant 3 : index
    %c0_23 = arith.constant 0 : index
    %c0_24 = arith.constant 0 : index
    %42 = vector.load %arg4[%c0_22, %c3, %c0_23, %c0_24] : memref<1x8x32x32xbf16, #tpu.memory_space<vmem>>, vector<1x1x32x32xbf16>
    %43 = vector.shape_cast %42 : vector<1x1x32x32xbf16> to vector<32x32xbf16>
    %44 = arith.truncf %31 : vector<16x32xf32> to vector<16x32xbf16>
    %cst_25 = arith.constant dense<0.000000e+00> : vector<16x32xf32>
    %45 = tpu.matmul %44, %37, %cst_25 {dimension_numbers = #tpu.dot_dimension_numbers<[1], [0], [0], [1], [0, 0, 1, 1], [], []>} : vector<16x32xbf16>, vector<32x32xbf16>, vector<16x32xf32> -> vector<16x32xf32>
    %46 = vector.broadcast %32 : vector<1x32xf32> to vector<16x32xf32>
    %47 = arith.addf %45, %46 : vector<16x32xf32>
    %48 = arith.truncf %31 : vector<16x32xf32> to vector<16x32xbf16>
    %cst_26 = arith.constant dense<0.000000e+00> : vector<16x32xf32>
    %49 = tpu.matmul %48, %39, %cst_26 {dimension_numbers = #tpu.dot_dimension_numbers<[1], [0], [0], [1], [0, 0, 1, 1], [], []>} : vector<16x32xbf16>, vector<32x32xbf16>, vector<16x32xf32> -> vector<16x32xf32>
    %50 = vector.broadcast %33 : vector<1x32xf32> to vector<16x32xf32>
    %51 = arith.addf %49, %50 : vector<16x32xf32>
    %52 = arith.truncf %31 : vector<16x32xf32> to vector<16x32xbf16>
    %cst_27 = arith.constant dense<0.000000e+00> : vector<16x32xf32>
    %53 = tpu.matmul %52, %41, %cst_27 {dimension_numbers = #tpu.dot_dimension_numbers<[1], [0], [0], [1], [0, 0, 1, 1], [], []>} : vector<16x32xbf16>, vector<32x32xbf16>, vector<16x32xf32> -> vector<16x32xf32>
    %54 = vector.broadcast %34 : vector<1x32xf32> to vector<16x32xf32>
    %55 = arith.addf %53, %54 : vector<16x32xf32>
    %cst_28 = arith.constant 2.500000e-01 : f32
    %56 = vector.broadcast %cst_28 : f32 to vector<16x32xf32>
    %57 = arith.mulf %47, %56 : vector<16x32xf32>
    %58 = vector.extract_strided_slice %57 {offsets = [0, 0], sizes = [8, 32], strides = [1, 1]} : vector<16x32xf32> to vector<8x32xf32>
    %59 = vector.shape_cast %58 : vector<8x32xf32> to vector<8x2x16xf32>
    %60 = tpu.transpose %59, [1, 0, 2] : vector<8x2x16xf32> -> vector<2x8x16xf32>
    %61 = vector.extract_strided_slice %51 {offsets = [0, 0], sizes = [8, 32], strides = [1, 1]} : vector<16x32xf32> to vector<8x32xf32>
    %62 = vector.shape_cast %61 : vector<8x32xf32> to vector<8x2x16xf32>
    %63 = tpu.transpose %62, [1, 0, 2] : vector<8x2x16xf32> -> vector<2x8x16xf32>
    %64 = vector.extract_strided_slice %55 {offsets = [0, 0], sizes = [8, 32], strides = [1, 1]} : vector<16x32xf32> to vector<8x32xf32>
    %65 = vector.shape_cast %64 : vector<8x32xf32> to vector<8x2x16xf32>
    %66 = tpu.transpose %65, [1, 0, 2] : vector<8x2x16xf32> -> vector<2x8x16xf32>
    %67 = arith.truncf %60 : vector<2x8x16xf32> to vector<2x8x16xbf16>
    %68 = arith.truncf %63 : vector<2x8x16xf32> to vector<2x8x16xbf16>
    %cst_29 = arith.constant dense<0.000000e+00> : vector<2x8x8xf32>
    %69 = tpu.matmul %67, %68, %cst_29 {dimension_numbers = #tpu.dot_dimension_numbers<[2], [2], [1], [1], [0, 0, 0, 1, 1, 1], [0], [0]>} : vector<2x8x16xbf16>, vector<2x8x16xbf16>, vector<2x8x8xf32> -> vector<2x8x8xf32>
    %c0_30 = arith.constant 0 : index
    %c0_31 = arith.constant 0 : index
    %70 = vector.load %arg11[%c0_30, %c0_31] : memref<8x8xf32, #tpu.memory_space<vmem>>, vector<8x8xf32>
    %71 = vector.shape_cast %70 : vector<8x8xf32> to vector<1x8x8xf32>
    %72 = vector.broadcast %71 : vector<1x8x8xf32> to vector<2x8x8xf32>
    %73 = arith.addf %69, %72 : vector<2x8x8xf32>
    %cst_32 = arith.constant dense<0xFF800000> : vector<2x8xf32>
    %74 = vector.multi_reduction <maximumf>, %73, %cst_32 [2] : vector<2x8x8xf32> to vector<2x8xf32>
    %75 = vector.shape_cast %74 : vector<2x8xf32> to vector<2x8x1xf32>
    %76 = vector.broadcast %75 : vector<2x8x1xf32> to vector<2x8x8xf32>
    %77 = arith.subf %73, %76 : vector<2x8x8xf32>
    %78 = math.exp %77 : vector<2x8x8xf32>
    %cst_33 = arith.constant dense<0.000000e+00> : vector<2x8xf32>
    %79 = vector.multi_reduction <add>, %78, %cst_33 [2] : vector<2x8x8xf32> to vector<2x8xf32>
    %80 = vector.shape_cast %79 : vector<2x8xf32> to vector<2x8x1xf32>
    %81 = vector.broadcast %80 : vector<2x8x1xf32> to vector<2x8x8xf32>
    %82 = arith.divf %78, %81 : vector<2x8x8xf32>
    %83 = arith.truncf %82 : vector<2x8x8xf32> to vector<2x8x8xbf16>
    %84 = arith.truncf %66 : vector<2x8x16xf32> to vector<2x8x16xbf16>
    %cst_34 = arith.constant dense<0.000000e+00> : vector<2x8x16xf32>
    %85 = tpu.matmul %83, %84, %cst_34 {dimension_numbers = #tpu.dot_dimension_numbers<[2], [1], [1], [2], [0, 0, 0, 1, 1, 2], [0], [0]>} : vector<2x8x8xbf16>, vector<2x8x16xbf16>, vector<2x8x16xf32> -> vector<2x8x16xf32>
    %86 = tpu.transpose %85, [1, 0, 2] : vector<2x8x16xf32> -> vector<8x2x16xf32>
    %87 = vector.shape_cast %86 : vector<8x2x16xf32> to vector<8x32xf32>
    %88 = arith.truncf %87 : vector<8x32xf32> to vector<8x32xbf16>
    %c0_35 = arith.constant 0 : index
    %c0_36 = arith.constant 0 : index
    %89 = vector.load %arg12[%c0_35, %c0_36] : memref<16x32xbf16, #tpu.memory_space<vmem>>, vector<8x32xbf16>
    tpu.vector_store %arg12[%c0_35, %c0_36], %88 {strides = array<i32>} : memref<16x32xbf16, #tpu.memory_space<vmem>>, vector<8x32xbf16>,
    %90 = vector.extract_strided_slice %57 {offsets = [8, 0], sizes = [8, 32], strides = [1, 1]} : vector<16x32xf32> to vector<8x32xf32>
    %91 = vector.shape_cast %90 : vector<8x32xf32> to vector<8x2x16xf32>
    %92 = tpu.transpose %91, [1, 0, 2] : vector<8x2x16xf32> -> vector<2x8x16xf32>
    %93 = vector.extract_strided_slice %51 {offsets = [8, 0], sizes = [8, 32], strides = [1, 1]} : vector<16x32xf32> to vector<8x32xf32>
    %94 = vector.shape_cast %93 : vector<8x32xf32> to vector<8x2x16xf32>
    %95 = tpu.transpose %94, [1, 0, 2] : vector<8x2x16xf32> -> vector<2x8x16xf32>
    %96 = vector.extract_strided_slice %55 {offsets = [8, 0], sizes = [8, 32], strides = [1, 1]} : vector<16x32xf32> to vector<8x32xf32>
    %97 = vector.shape_cast %96 : vector<8x32xf32> to vector<8x2x16xf32>
    %98 = tpu.transpose %97, [1, 0, 2] : vector<8x2x16xf32> -> vector<2x8x16xf32>
    %99 = arith.truncf %92 : vector<2x8x16xf32> to vector<2x8x16xbf16>
    %100 = arith.truncf %95 : vector<2x8x16xf32> to vector<2x8x16xbf16>
    %cst_37 = arith.constant dense<0.000000e+00> : vector<2x8x8xf32>
    %101 = tpu.matmul %99, %100, %cst_37 {dimension_numbers = #tpu.dot_dimension_numbers<[2], [2], [1], [1], [0, 0, 0, 1, 1, 1], [0], [0]>} : vector<2x8x16xbf16>, vector<2x8x16xbf16>, vector<2x8x8xf32> -> vector<2x8x8xf32>
    %c0_38 = arith.constant 0 : index
    %c0_39 = arith.constant 0 : index
    %102 = vector.load %arg11[%c0_38, %c0_39] : memref<8x8xf32, #tpu.memory_space<vmem>>, vector<8x8xf32>
    %103 = vector.shape_cast %102 : vector<8x8xf32> to vector<1x8x8xf32>
    %104 = vector.broadcast %103 : vector<1x8x8xf32> to vector<2x8x8xf32>
    %105 = arith.addf %101, %104 : vector<2x8x8xf32>
    %cst_40 = arith.constant dense<0xFF800000> : vector<2x8xf32>
    %106 = vector.multi_reduction <maximumf>, %105, %cst_40 [2] : vector<2x8x8xf32> to vector<2x8xf32>
    %107 = vector.shape_cast %106 : vector<2x8xf32> to vector<2x8x1xf32>
    %108 = vector.broadcast %107 : vector<2x8x1xf32> to vector<2x8x8xf32>
    %109 = arith.subf %105, %108 : vector<2x8x8xf32>
    %110 = math.exp %109 : vector<2x8x8xf32>
    %cst_41 = arith.constant dense<0.000000e+00> : vector<2x8xf32>
    %111 = vector.multi_reduction <add>, %110, %cst_41 [2] : vector<2x8x8xf32> to vector<2x8xf32>
    %112 = vector.shape_cast %111 : vector<2x8xf32> to vector<2x8x1xf32>
    %113 = vector.broadcast %112 : vector<2x8x1xf32> to vector<2x8x8xf32>
    %114 = arith.divf %110, %113 : vector<2x8x8xf32>
    %115 = arith.truncf %114 : vector<2x8x8xf32> to vector<2x8x8xbf16>
    %116 = arith.truncf %98 : vector<2x8x16xf32> to vector<2x8x16xbf16>
    %cst_42 = arith.constant dense<0.000000e+00> : vector<2x8x16xf32>
    %117 = tpu.matmul %115, %116, %cst_42 {dimension_numbers = #tpu.dot_dimension_numbers<[2], [1], [1], [2], [0, 0, 0, 1, 1, 2], [0], [0]>} : vector<2x8x8xbf16>, vector<2x8x16xbf16>, vector<2x8x16xf32> -> vector<2x8x16xf32>
    %118 = tpu.transpose %117, [1, 0, 2] : vector<2x8x16xf32> -> vector<8x2x16xf32>
    %119 = vector.shape_cast %118 : vector<8x2x16xf32> to vector<8x32xf32>
    %120 = arith.truncf %119 : vector<8x32xf32> to vector<8x32xbf16>
    %c8 = arith.constant 8 : index
    %c0_43 = arith.constant 0 : index
    %121 = vector.load %arg12[%c8, %c0_43] : memref<16x32xbf16, #tpu.memory_space<vmem>>, vector<8x32xbf16>
    tpu.vector_store %arg12[%c8, %c0_43], %120 {strides = array<i32>} : memref<16x32xbf16, #tpu.memory_space<vmem>>, vector<8x32xbf16>,
    %c0_44 = arith.constant 0 : index
    %c0_45 = arith.constant 0 : index
    %122 = vector.load %arg12[%c0_44, %c0_45] : memref<16x32xbf16, #tpu.memory_space<vmem>>, vector<16x32xbf16>
    %cst_46 = arith.constant dense<0.000000e+00> : vector<16x32xf32>
    %123 = tpu.matmul %122, %43, %cst_46 {dimension_numbers = #tpu.dot_dimension_numbers<[1], [0], [0], [1], [0, 0, 1, 1], [], []>} : vector<16x32xbf16>, vector<32x32xbf16>, vector<16x32xf32> -> vector<16x32xf32>
    %124 = vector.broadcast %35 : vector<1x32xf32> to vector<16x32xf32>
    %125 = arith.addf %123, %124 : vector<16x32xf32>
    %126 = arith.addf %5, %125 : vector<16x32xf32>
    %127 = vector.extract_strided_slice %4 {offsets = [6, 0], sizes = [1, 32], strides = [1, 1]} : vector<15x32xf32> to vector<1x32xf32>
    %128 = vector.extract_strided_slice %4 {offsets = [7, 0], sizes = [1, 32], strides = [1, 1]} : vector<15x32xf32> to vector<1x32xf32>
    %cst_47 = arith.constant dense<0.000000e+00> : vector<16xf32>
    %129 = vector.multi_reduction <add>, %126, %cst_47 [1] : vector<16x32xf32> to vector<16xf32>
    %130 = vector.shape_cast %129 : vector<16xf32> to vector<16x1xf32>
    %cst_48 = arith.constant 3.200000e+01 : f32
    %131 = vector.broadcast %cst_48 : f32 to vector<16x1xf32>
    %132 = arith.divf %130, %131 : vector<16x1xf32>
    %133 = vector.broadcast %132 : vector<16x1xf32> to vector<16x32xf32>
    %134 = arith.subf %126, %133 : vector<16x32xf32>
    %135 = arith.mulf %134, %134 : vector<16x32xf32>
    %cst_49 = arith.constant dense<0.000000e+00> : vector<16xf32>
    %136 = vector.multi_reduction <add>, %135, %cst_49 [1] : vector<16x32xf32> to vector<16xf32>
    %137 = vector.shape_cast %136 : vector<16xf32> to vector<16x1xf32>
    %cst_50 = arith.constant 3.200000e+01 : f32
    %138 = vector.broadcast %cst_50 : f32 to vector<16x1xf32>
    %139 = arith.divf %137, %138 : vector<16x1xf32>
    %140 = vector.broadcast %132 : vector<16x1xf32> to vector<16x32xf32>
    %141 = arith.subf %126, %140 : vector<16x32xf32>
    %cst_51 = arith.constant 9.99999974E-6 : f32
    %142 = vector.broadcast %cst_51 : f32 to vector<16x1xf32>
    %143 = arith.addf %139, %142 : vector<16x1xf32>
    %144 = math.rsqrt %143 : vector<16x1xf32>
    %145 = vector.broadcast %144 : vector<16x1xf32> to vector<16x32xf32>
    %146 = arith.mulf %141, %145 : vector<16x32xf32>
    %147 = vector.broadcast %127 : vector<1x32xf32> to vector<16x32xf32>
    %148 = arith.mulf %146, %147 : vector<16x32xf32>
    %149 = vector.broadcast %128 : vector<1x32xf32> to vector<16x32xf32>
    %150 = arith.addf %148, %149 : vector<16x32xf32>
    %151 = vector.extract_strided_slice %4 {offsets = [8, 0], sizes = [1, 32], strides = [1, 1]} : vector<15x32xf32> to vector<1x32xf32>
    %152 = vector.extract_strided_slice %4 {offsets = [9, 0], sizes = [1, 32], strides = [1, 1]} : vector<15x32xf32> to vector<1x32xf32>
    %153 = vector.extract_strided_slice %4 {offsets = [10, 0], sizes = [1, 32], strides = [1, 1]} : vector<15x32xf32> to vector<1x32xf32>
    %154 = vector.extract_strided_slice %4 {offsets = [11, 0], sizes = [1, 32], strides = [1, 1]} : vector<15x32xf32> to vector<1x32xf32>
    %c0_52 = arith.constant 0 : index
    %c4 = arith.constant 4 : index
    %c0_53 = arith.constant 0 : index
    %c0_54 = arith.constant 0 : index
    %155 = vector.load %arg4[%c0_52, %c4, %c0_53, %c0_54] : memref<1x8x32x32xbf16, #tpu.memory_space<vmem>>, vector<1x1x32x32xbf16>
    %156 = vector.shape_cast %155 : vector<1x1x32x32xbf16> to vector<32x32xbf16>
    %c0_55 = arith.constant 0 : index
    %c5 = arith.constant 5 : index
    %c0_56 = arith.constant 0 : index
    %c0_57 = arith.constant 0 : index
    %157 = vector.load %arg4[%c0_55, %c5, %c0_56, %c0_57] : memref<1x8x32x32xbf16, #tpu.memory_space<vmem>>, vector<1x1x32x32xbf16>
    %158 = vector.shape_cast %157 : vector<1x1x32x32xbf16> to vector<32x32xbf16>
    %c0_58 = arith.constant 0 : index
    %c6 = arith.constant 6 : index
    %c0_59 = arith.constant 0 : index
    %c0_60 = arith.constant 0 : index
    %159 = vector.load %arg4[%c0_58, %c6, %c0_59, %c0_60] : memref<1x8x32x32xbf16, #tpu.memory_space<vmem>>, vector<1x1x32x32xbf16>
    %160 = vector.shape_cast %159 : vector<1x1x32x32xbf16> to vector<32x32xbf16>
    %c0_61 = arith.constant 0 : index
    %c7 = arith.constant 7 : index
    %c0_62 = arith.constant 0 : index
    %c0_63 = arith.constant 0 : index
    %161 = vector.load %arg4[%c0_61, %c7, %c0_62, %c0_63] : memref<1x8x32x32xbf16, #tpu.memory_space<vmem>>, vector<1x1x32x32xbf16>
    %162 = vector.shape_cast %161 : vector<1x1x32x32xbf16> to vector<32x32xbf16>
    %163 = arith.truncf %150 : vector<16x32xf32> to vector<16x32xbf16>
    %cst_64 = arith.constant dense<0.000000e+00> : vector<16x32xf32>
    %164 = tpu.matmul %163, %156, %cst_64 {dimension_numbers = #tpu.dot_dimension_numbers<[1], [0], [0], [1], [0, 0, 1, 1], [], []>} : vector<16x32xbf16>, vector<32x32xbf16>, vector<16x32xf32> -> vector<16x32xf32>
    %165 = vector.broadcast %151 : vector<1x32xf32> to vector<16x32xf32>
    %166 = arith.addf %164, %165 : vector<16x32xf32>
    %167 = arith.truncf %7 : vector<16x32xf32> to vector<16x32xbf16>
    %cst_65 = arith.constant dense<0.000000e+00> : vector<16x32xf32>
    %168 = tpu.matmul %167, %158, %cst_65 {dimension_numbers = #tpu.dot_dimension_numbers<[1], [0], [0], [1], [0, 0, 1, 1], [], []>} : vector<16x32xbf16>, vector<32x32xbf16>, vector<16x32xf32> -> vector<16x32xf32>
    %169 = vector.broadcast %152 : vector<1x32xf32> to vector<16x32xf32>
    %170 = arith.addf %168, %169 : vector<16x32xf32>
    %171 = arith.truncf %7 : vector<16x32xf32> to vector<16x32xbf16>
    %cst_66 = arith.constant dense<0.000000e+00> : vector<16x32xf32>
    %172 = tpu.matmul %171, %160, %cst_66 {dimension_numbers = #tpu.dot_dimension_numbers<[1], [0], [0], [1], [0, 0, 1, 1], [], []>} : vector<16x32xbf16>, vector<32x32xbf16>, vector<16x32xf32> -> vector<16x32xf32>
    %173 = vector.broadcast %153 : vector<1x32xf32> to vector<16x32xf32>
    %174 = arith.addf %172, %173 : vector<16x32xf32>
    %cst_67 = arith.constant 2.500000e-01 : f32
    %175 = vector.broadcast %cst_67 : f32 to vector<16x32xf32>
    %176 = arith.mulf %166, %175 : vector<16x32xf32>
    %177 = vector.extract_strided_slice %176 {offsets = [0, 0], sizes = [8, 32], strides = [1, 1]} : vector<16x32xf32> to vector<8x32xf32>
    %178 = vector.shape_cast %177 : vector<8x32xf32> to vector<8x2x16xf32>
    %179 = tpu.transpose %178, [1, 0, 2] : vector<8x2x16xf32> -> vector<2x8x16xf32>
    %180 = vector.extract_strided_slice %170 {offsets = [0, 0], sizes = [8, 32], strides = [1, 1]} : vector<16x32xf32> to vector<8x32xf32>
    %181 = vector.shape_cast %180 : vector<8x32xf32> to vector<8x2x16xf32>
    %182 = tpu.transpose %181, [1, 0, 2] : vector<8x2x16xf32> -> vector<2x8x16xf32>
    %183 = vector.extract_strided_slice %174 {offsets = [0, 0], sizes = [8, 32], strides = [1, 1]} : vector<16x32xf32> to vector<8x32xf32>
    %184 = vector.shape_cast %183 : vector<8x32xf32> to vector<8x2x16xf32>
    %185 = tpu.transpose %184, [1, 0, 2] : vector<8x2x16xf32> -> vector<2x8x16xf32>
    %186 = arith.truncf %179 : vector<2x8x16xf32> to vector<2x8x16xbf16>
    %187 = arith.truncf %182 : vector<2x8x16xf32> to vector<2x8x16xbf16>
    %cst_68 = arith.constant dense<0.000000e+00> : vector<2x8x8xf32>
    %188 = tpu.matmul %186, %187, %cst_68 {dimension_numbers = #tpu.dot_dimension_numbers<[2], [2], [1], [1], [0, 0, 0, 1, 1, 1], [0], [0]>} : vector<2x8x16xbf16>, vector<2x8x16xbf16>, vector<2x8x8xf32> -> vector<2x8x8xf32>
    %cst_69 = arith.constant dense<0xFF800000> : vector<2x8xf32>
    %189 = vector.multi_reduction <maximumf>, %188, %cst_69 [2] : vector<2x8x8xf32> to vector<2x8xf32>
    %190 = vector.shape_cast %189 : vector<2x8xf32> to vector<2x8x1xf32>
    %191 = vector.broadcast %190 : vector<2x8x1xf32> to vector<2x8x8xf32>
    %192 = arith.subf %188, %191 : vector<2x8x8xf32>
    %193 = math.exp %192 : vector<2x8x8xf32>
    %cst_70 = arith.constant dense<0.000000e+00> : vector<2x8xf32>
    %194 = vector.multi_reduction <add>, %193, %cst_70 [2] : vector<2x8x8xf32> to vector<2x8xf32>
    %195 = vector.shape_cast %194 : vector<2x8xf32> to vector<2x8x1xf32>
    %196 = vector.broadcast %195 : vector<2x8x1xf32> to vector<2x8x8xf32>
    %197 = arith.divf %193, %196 : vector<2x8x8xf32>
    %198 = arith.truncf %197 : vector<2x8x8xf32> to vector<2x8x8xbf16>
    %199 = arith.truncf %185 : vector<2x8x16xf32> to vector<2x8x16xbf16>
    %cst_71 = arith.constant dense<0.000000e+00> : vector<2x8x16xf32>
    %200 = tpu.matmul %198, %199, %cst_71 {dimension_numbers = #tpu.dot_dimension_numbers<[2], [1], [1], [2], [0, 0, 0, 1, 1, 2], [0], [0]>} : vector<2x8x8xbf16>, vector<2x8x16xbf16>, vector<2x8x16xf32> -> vector<2x8x16xf32>
    %201 = tpu.transpose %200, [1, 0, 2] : vector<2x8x16xf32> -> vector<8x2x16xf32>
    %202 = vector.shape_cast %201 : vector<8x2x16xf32> to vector<8x32xf32>
    %203 = arith.truncf %202 : vector<8x32xf32> to vector<8x32xbf16>
    %c0_72 = arith.constant 0 : index
    %c0_73 = arith.constant 0 : index
    %204 = vector.load %arg12[%c0_72, %c0_73] : memref<16x32xbf16, #tpu.memory_space<vmem>>, vector<8x32xbf16>
    tpu.vector_store %arg12[%c0_72, %c0_73], %203 {strides = array<i32>} : memref<16x32xbf16, #tpu.memory_space<vmem>>, vector<8x32xbf16>,
    %205 = vector.extract_strided_slice %176 {offsets = [8, 0], sizes = [8, 32], strides = [1, 1]} : vector<16x32xf32> to vector<8x32xf32>
    %206 = vector.shape_cast %205 : vector<8x32xf32> to vector<8x2x16xf32>
    %207 = tpu.transpose %206, [1, 0, 2] : vector<8x2x16xf32> -> vector<2x8x16xf32>
    %208 = vector.extract_strided_slice %170 {offsets = [8, 0], sizes = [8, 32], strides = [1, 1]} : vector<16x32xf32> to vector<8x32xf32>
    %209 = vector.shape_cast %208 : vector<8x32xf32> to vector<8x2x16xf32>
    %210 = tpu.transpose %209, [1, 0, 2] : vector<8x2x16xf32> -> vector<2x8x16xf32>
    %211 = vector.extract_strided_slice %174 {offsets = [8, 0], sizes = [8, 32], strides = [1, 1]} : vector<16x32xf32> to vector<8x32xf32>
    %212 = vector.shape_cast %211 : vector<8x32xf32> to vector<8x2x16xf32>
    %213 = tpu.transpose %212, [1, 0, 2] : vector<8x2x16xf32> -> vector<2x8x16xf32>
    %214 = arith.truncf %207 : vector<2x8x16xf32> to vector<2x8x16xbf16>
    %215 = arith.truncf %210 : vector<2x8x16xf32> to vector<2x8x16xbf16>
    %cst_74 = arith.constant dense<0.000000e+00> : vector<2x8x8xf32>
    %216 = tpu.matmul %214, %215, %cst_74 {dimension_numbers = #tpu.dot_dimension_numbers<[2], [2], [1], [1], [0, 0, 0, 1, 1, 1], [0], [0]>} : vector<2x8x16xbf16>, vector<2x8x16xbf16>, vector<2x8x8xf32> -> vector<2x8x8xf32>
    %cst_75 = arith.constant dense<0xFF800000> : vector<2x8xf32>
    %217 = vector.multi_reduction <maximumf>, %216, %cst_75 [2] : vector<2x8x8xf32> to vector<2x8xf32>
    %218 = vector.shape_cast %217 : vector<2x8xf32> to vector<2x8x1xf32>
    %219 = vector.broadcast %218 : vector<2x8x1xf32> to vector<2x8x8xf32>
    %220 = arith.subf %216, %219 : vector<2x8x8xf32>
    %221 = math.exp %220 : vector<2x8x8xf32>
    %cst_76 = arith.constant dense<0.000000e+00> : vector<2x8xf32>
    %222 = vector.multi_reduction <add>, %221, %cst_76 [2] : vector<2x8x8xf32> to vector<2x8xf32>
    %223 = vector.shape_cast %222 : vector<2x8xf32> to vector<2x8x1xf32>
    %224 = vector.broadcast %223 : vector<2x8x1xf32> to vector<2x8x8xf32>
    %225 = arith.divf %221, %224 : vector<2x8x8xf32>
    %226 = arith.truncf %225 : vector<2x8x8xf32> to vector<2x8x8xbf16>
    %227 = arith.truncf %213 : vector<2x8x16xf32> to vector<2x8x16xbf16>
    %cst_77 = arith.constant dense<0.000000e+00> : vector<2x8x16xf32>
    %228 = tpu.matmul %226, %227, %cst_77 {dimension_numbers = #tpu.dot_dimension_numbers<[2], [1], [1], [2], [0, 0, 0, 1, 1, 2], [0], [0]>} : vector<2x8x8xbf16>, vector<2x8x16xbf16>, vector<2x8x16xf32> -> vector<2x8x16xf32>
    %229 = tpu.transpose %228, [1, 0, 2] : vector<2x8x16xf32> -> vector<8x2x16xf32>
    %230 = vector.shape_cast %229 : vector<8x2x16xf32> to vector<8x32xf32>
    %231 = arith.truncf %230 : vector<8x32xf32> to vector<8x32xbf16>
    %c8_78 = arith.constant 8 : index
    %c0_79 = arith.constant 0 : index
    %232 = vector.load %arg12[%c8_78, %c0_79] : memref<16x32xbf16, #tpu.memory_space<vmem>>, vector<8x32xbf16>
    tpu.vector_store %arg12[%c8_78, %c0_79], %231 {strides = array<i32>} : memref<16x32xbf16, #tpu.memory_space<vmem>>, vector<8x32xbf16>,
    %c0_80 = arith.constant 0 : index
    %c0_81 = arith.constant 0 : index
    %233 = vector.load %arg12[%c0_80, %c0_81] : memref<16x32xbf16, #tpu.memory_space<vmem>>, vector<16x32xbf16>
    %cst_82 = arith.constant dense<0.000000e+00> : vector<16x32xf32>
    %234 = tpu.matmul %233, %162, %cst_82 {dimension_numbers = #tpu.dot_dimension_numbers<[1], [0], [0], [1], [0, 0, 1, 1], [], []>} : vector<16x32xbf16>, vector<32x32xbf16>, vector<16x32xf32> -> vector<16x32xf32>
    %235 = vector.broadcast %154 : vector<1x32xf32> to vector<16x32xf32>
    %236 = arith.addf %234, %235 : vector<16x32xf32>
    %237 = arith.addf %126, %236 : vector<16x32xf32>
    %238 = vector.extract_strided_slice %4 {offsets = [12, 0], sizes = [1, 32], strides = [1, 1]} : vector<15x32xf32> to vector<1x32xf32>
    %239 = vector.extract_strided_slice %4 {offsets = [13, 0], sizes = [1, 32], strides = [1, 1]} : vector<15x32xf32> to vector<1x32xf32>
    %cst_83 = arith.constant dense<0.000000e+00> : vector<16xf32>
    %240 = vector.multi_reduction <add>, %237, %cst_83 [1] : vector<16x32xf32> to vector<16xf32>
    %241 = vector.shape_cast %240 : vector<16xf32> to vector<16x1xf32>
    %cst_84 = arith.constant 3.200000e+01 : f32
    %242 = vector.broadcast %cst_84 : f32 to vector<16x1xf32>
    %243 = arith.divf %241, %242 : vector<16x1xf32>
    %244 = vector.broadcast %243 : vector<16x1xf32> to vector<16x32xf32>
    %245 = arith.subf %237, %244 : vector<16x32xf32>
    %246 = arith.mulf %245, %245 : vector<16x32xf32>
    %cst_85 = arith.constant dense<0.000000e+00> : vector<16xf32>
    %247 = vector.multi_reduction <add>, %246, %cst_85 [1] : vector<16x32xf32> to vector<16xf32>
    %248 = vector.shape_cast %247 : vector<16xf32> to vector<16x1xf32>
    %cst_86 = arith.constant 3.200000e+01 : f32
    %249 = vector.broadcast %cst_86 : f32 to vector<16x1xf32>
    %250 = arith.divf %248, %249 : vector<16x1xf32>
    %251 = vector.broadcast %243 : vector<16x1xf32> to vector<16x32xf32>
    %252 = arith.subf %237, %251 : vector<16x32xf32>
    %cst_87 = arith.constant 9.99999974E-6 : f32
    %253 = vector.broadcast %cst_87 : f32 to vector<16x1xf32>
    %254 = arith.addf %250, %253 : vector<16x1xf32>
    %255 = math.rsqrt %254 : vector<16x1xf32>
    %256 = vector.broadcast %255 : vector<16x1xf32> to vector<16x32xf32>
    %257 = arith.mulf %252, %256 : vector<16x32xf32>
    %258 = vector.broadcast %238 : vector<1x32xf32> to vector<16x32xf32>
    %259 = arith.mulf %257, %258 : vector<16x32xf32>
    %260 = vector.broadcast %239 : vector<1x32xf32> to vector<16x32xf32>
    %261 = arith.addf %259, %260 : vector<16x32xf32>
    %262 = arith.truncf %261 : vector<16x32xf32> to vector<16x32xbf16>
    %c0_88 = arith.constant 0 : index
    %c0_89 = arith.constant 0 : index
    %c0_90 = arith.constant 0 : index
    %263 = vector.load %arg5[%c0_88, %c0_89, %c0_90] : memref<1x32x128xbf16, #tpu.memory_space<vmem>>, vector<1x32x128xbf16>
    %264 = vector.shape_cast %263 : vector<1x32x128xbf16> to vector<32x128xbf16>
    %cst_91 = arith.constant dense<0.000000e+00> : vector<16x128xf32>
    %265 = tpu.matmul %262, %264, %cst_91 {dimension_numbers = #tpu.dot_dimension_numbers<[1], [0], [0], [1], [0, 0, 1, 1], [], []>} : vector<16x32xbf16>, vector<32x128xbf16>, vector<16x128xf32> -> vector<16x128xf32>
    %c0_92 = arith.constant 0 : index
    %c0_93 = arith.constant 0 : index
    %c0_94 = arith.constant 0 : index
    %266 = vector.load %arg8[%c0_92, %c0_93, %c0_94] : memref<1x1x128xf32, #tpu.memory_space<vmem>>, vector<1x1x128xf32>
    %267 = vector.shape_cast %266 : vector<1x1x128xf32> to vector<1x128xf32>
    %268 = vector.broadcast %267 : vector<1x128xf32> to vector<16x128xf32>
    %269 = arith.addf %265, %268 : vector<16x128xf32>
    %270 = arith.mulf %269, %269 : vector<16x128xf32>
    %271 = arith.mulf %269, %270 : vector<16x128xf32>
    %cst_95 = arith.constant 4.471500e-02 : f32
    %272 = vector.broadcast %cst_95 : f32 to vector<16x128xf32>
    %273 = arith.mulf %272, %271 : vector<16x128xf32>
    %274 = arith.addf %269, %273 : vector<16x128xf32>
    %cst_96 = arith.constant 0.797884583 : f32
    %275 = vector.broadcast %cst_96 : f32 to vector<16x128xf32>
    %276 = arith.mulf %275, %274 : vector<16x128xf32>
    %277 = math.tanh %276 : vector<16x128xf32>
    %cst_97 = arith.constant 1.000000e+00 : f32
    %278 = vector.broadcast %cst_97 : f32 to vector<16x128xf32>
    %279 = arith.addf %278, %277 : vector<16x128xf32>
    %cst_98 = arith.constant 5.000000e-01 : f32
    %280 = vector.broadcast %cst_98 : f32 to vector<16x128xf32>
    %281 = arith.mulf %280, %279 : vector<16x128xf32>
    %282 = arith.mulf %269, %281 : vector<16x128xf32>
    %283 = arith.truncf %282 : vector<16x128xf32> to vector<16x128xbf16>
    %c0_99 = arith.constant 0 : index
    %c0_100 = arith.constant 0 : index
    %c0_101 = arith.constant 0 : index
    %284 = vector.load %arg6[%c0_99, %c0_100, %c0_101] : memref<1x128x32xbf16, #tpu.memory_space<vmem>>, vector<1x128x32xbf16>
    %285 = vector.shape_cast %284 : vector<1x128x32xbf16> to vector<128x32xbf16>
    %cst_102 = arith.constant dense<0.000000e+00> : vector<16x32xf32>
    %286 = tpu.matmul %283, %285, %cst_102 {dimension_numbers = #tpu.dot_dimension_numbers<[1], [0], [0], [1], [0, 0, 1, 1], [], []>} : vector<16x128xbf16>, vector<128x32xbf16>, vector<16x32xf32> -> vector<16x32xf32>
    %287 = arith.addf %237, %286 : vector<16x32xf32>
    %288 = vector.extract_strided_slice %4 {offsets = [14, 0], sizes = [1, 32], strides = [1, 1]} : vector<15x32xf32> to vector<1x32xf32>
    %289 = vector.broadcast %288 : vector<1x32xf32> to vector<16x32xf32>
    %290 = arith.addf %287, %289 : vector<16x32xf32>
    %c0_103 = arith.constant 0 : index
    %c0_104 = arith.constant 0 : index
    %291 = vector.load %arg10[%c0_103, %c0_104] : memref<16x32xf32, #tpu.memory_space<vmem>>, vector<16x32xf32>
    tpu.vector_store %arg10[%c0_103, %c0_104], %290 {strides = array<i32>} : memref<16x32xf32, #tpu.memory_space<vmem>>, vector<16x32xf32>,
    %c1_i32 = arith.constant 1 : i32
    %292 = arith.cmpi eq, %arg1, %c1_i32 : i32
    %293 = arith.extui %292 : i1 to i32
    %c0_i32_105 = arith.constant 0 : i32
    %294 = arith.cmpi ne, %293, %c0_i32_105 : i32
    scf.if %294 {
      %295 = vector.shape_cast %290 : vector<16x32xf32> to vector<2x8x32xf32>
      %c0_106 = arith.constant 0 : index
      %c0_107 = arith.constant 0 : index
      %c0_108 = arith.constant 0 : index
      %296 = vector.load %arg9[%c0_106, %c0_107, %c0_108] : memref<2x8x32xf32, #tpu.memory_space<vmem>>, vector<2x8x32xf32>
      tpu.vector_store %arg9[%c0_106, %c0_107, %c0_108], %295 {strides = array<i32>} : memref<2x8x32xf32, #tpu.memory_space<vmem>>, vector<2x8x32xf32>,
    } else {
    }
    return
  }
  func.func @transform_0(%arg0: i32, %arg1: i32) -> (i32, i32, i32) {
    %c0_i32 = arith.constant 0 : i32
    %c0_i32_0 = arith.constant 0 : i32
    %c0_i32_1 = arith.constant 0 : i32
    return %arg0, %c0_i32, %c0_i32_0 : i32, i32, i32
  }
  func.func @transform_1(%arg0: i32, %arg1: i32) -> (i32, i32, i32) {
    %c0_i32 = arith.constant 0 : i32
    %c0_i32_0 = arith.constant 0 : i32
    %c0_i32_1 = arith.constant 0 : i32
    return %arg0, %c0_i32, %c0_i32_0 : i32, i32, i32
  }
  func.func @transform_2(%arg0: i32, %arg1: i32) -> (i32, i32, i32, i32) {
    %c0_i32 = arith.constant 0 : i32
    %c0_i32_0 = arith.constant 0 : i32
    %c0_i32_1 = arith.constant 0 : i32
    %c0_i32_2 = arith.constant 0 : i32
    return %arg1, %c0_i32, %c0_i32_0, %c0_i32_1 : i32, i32, i32, i32
  }
  func.func @transform_3(%arg0: i32, %arg1: i32) -> (i32, i32, i32) {
    %c0_i32 = arith.constant 0 : i32
    %c0_i32_0 = arith.constant 0 : i32
    %c0_i32_1 = arith.constant 0 : i32
    return %arg1, %c0_i32, %c0_i32_0 : i32, i32, i32
  }
  func.func @transform_4(%arg0: i32, %arg1: i32) -> (i32, i32, i32) {
    %c0_i32 = arith.constant 0 : i32
    %c0_i32_0 = arith.constant 0 : i32
    %c0_i32_1 = arith.constant 0 : i32
    return %arg1, %c0_i32, %c0_i32_0 : i32, i32, i32
  }
  func.func @transform_5(%arg0: i32, %arg1: i32) -> (i32, i32, i32) {
    %c0_i32 = arith.constant 0 : i32
    %c0_i32_0 = arith.constant 0 : i32
    %c0_i32_1 = arith.constant 0 : i32
    return %arg1, %c0_i32, %c0_i32_0 : i32, i32, i32
  }
  func.func @transform_6(%arg0: i32, %arg1: i32) -> (i32, i32, i32) {
    %c0_i32 = arith.constant 0 : i32
    %c0_i32_0 = arith.constant 0 : i32
    %c0_i32_1 = arith.constant 0 : i32
    return %arg1, %c0_i32, %c0_i32_0 : i32, i32, i32
  }
  func.func @transform_7(%arg0: i32, %arg1: i32) -> (i32, i32, i32) {
    %c0_i32 = arith.constant 0 : i32
    %c0_i32_0 = arith.constant 0 : i32
    %c0_i32_1 = arith.constant 0 : i32
    return %arg0, %c0_i32, %c0_i32_0 : i32, i32, i32
  }
}

module attributes {stable_mosaic.version = 11 : i64} {
  func.func @_ce_head_kernel(%arg0: i32, %arg1: i32, %arg2: memref<2x8x32xf32, #tpu.memory_space<vmem>>, %arg3: memref<2x8x1xi32, #tpu.memory_space<vmem>>, %arg4: memref<1x32xf32, #tpu.memory_space<vmem>>, %arg5: memref<1x32xf32, #tpu.memory_space<vmem>>, %arg6: memref<32x128xbf16, #tpu.memory_space<vmem>>, %arg7: memref<1x128xf32, #tpu.memory_space<vmem>>, %arg8: memref<1x1x1xf32, #tpu.memory_space<vmem>>, %arg9: memref<1x1x1xf32, #tpu.memory_space<vmem>>, %arg10: memref<16x32xf32, #tpu.memory_space<vmem>>, %arg11: memref<16x1xf32, #tpu.memory_space<vmem>>, %arg12: memref<16x1xf32, #tpu.memory_space<vmem>>, %arg13: memref<16x1xf32, #tpu.memory_space<vmem>>) attributes {dimension_semantics = [#tpu.dimension_semantics<parallel>, #tpu.dimension_semantics<arbitrary>], iteration_bounds = array<i64: 1, 1>, scalar_prefetch = 0 : i64, scratch_operands = 4 : i64, tpu.core_type = #tpu.core_type<tc>, window_params = [{transform_indices = @transform_0, window_bounds = array<i64: 2, 8, 32>}, {transform_indices = @transform_1, window_bounds = array<i64: 2, 8, 1>}, {pipeline_mode = #tpu.pipeline_mode<synchronous>, transform_indices = @transform_2, window_bounds = array<i64: 1, 32>}, {pipeline_mode = #tpu.pipeline_mode<synchronous>, transform_indices = @transform_3, window_bounds = array<i64: 1, 32>}, {transform_indices = @transform_4, window_bounds = array<i64: 32, 128>}, {transform_indices = @transform_5, window_bounds = array<i64: 1, 128>}, {transform_indices = @transform_6, window_bounds = array<i64: 1, 1, 1>}, {transform_indices = @transform_7, window_bounds = array<i64: 1, 1, 1>}]} {
    %c0_i32 = arith.constant 0 : i32
    %0 = arith.cmpi eq, %arg1, %c0_i32 : i32
    %1 = arith.extui %0 : i1 to i32
    %c0_i32_0 = arith.constant 0 : i32
    %2 = arith.cmpi ne, %1, %c0_i32_0 : i32
    scf.if %2 {
      %c0_27 = arith.constant 0 : index
      %c0_28 = arith.constant 0 : index
      %c0_29 = arith.constant 0 : index
      %44 = vector.load %arg2[%c0_27, %c0_28, %c0_29] : memref<2x8x32xf32, #tpu.memory_space<vmem>>, vector<2x8x32xf32>
      %45 = vector.shape_cast %44 : vector<2x8x32xf32> to vector<16x32xf32>
      %c0_30 = arith.constant 0 : index
      %c0_31 = arith.constant 0 : index
      %46 = vector.load %arg4[%c0_30, %c0_31] : memref<1x32xf32, #tpu.memory_space<vmem>>, vector<1x32xf32>
      %c0_32 = arith.constant 0 : index
      %c0_33 = arith.constant 0 : index
      %47 = vector.load %arg5[%c0_32, %c0_33] : memref<1x32xf32, #tpu.memory_space<vmem>>, vector<1x32xf32>
      %cst_34 = arith.constant dense<0.000000e+00> : vector<16xf32>
      %48 = vector.multi_reduction <add>, %45, %cst_34 [1] : vector<16x32xf32> to vector<16xf32>
      %49 = vector.shape_cast %48 : vector<16xf32> to vector<16x1xf32>
      %cst_35 = arith.constant 3.200000e+01 : f32
      %50 = vector.broadcast %cst_35 : f32 to vector<16x1xf32>
      %51 = arith.divf %49, %50 : vector<16x1xf32>
      %52 = vector.broadcast %51 : vector<16x1xf32> to vector<16x32xf32>
      %53 = arith.subf %45, %52 : vector<16x32xf32>
      %54 = arith.mulf %53, %53 : vector<16x32xf32>
      %cst_36 = arith.constant dense<0.000000e+00> : vector<16xf32>
      %55 = vector.multi_reduction <add>, %54, %cst_36 [1] : vector<16x32xf32> to vector<16xf32>
      %56 = vector.shape_cast %55 : vector<16xf32> to vector<16x1xf32>
      %cst_37 = arith.constant 3.200000e+01 : f32
      %57 = vector.broadcast %cst_37 : f32 to vector<16x1xf32>
      %58 = arith.divf %56, %57 : vector<16x1xf32>
      %59 = vector.broadcast %51 : vector<16x1xf32> to vector<16x32xf32>
      %60 = arith.subf %45, %59 : vector<16x32xf32>
      %cst_38 = arith.constant 9.99999974E-6 : f32
      %61 = vector.broadcast %cst_38 : f32 to vector<16x1xf32>
      %62 = arith.addf %58, %61 : vector<16x1xf32>
      %63 = math.rsqrt %62 : vector<16x1xf32>
      %64 = vector.broadcast %63 : vector<16x1xf32> to vector<16x32xf32>
      %65 = arith.mulf %60, %64 : vector<16x32xf32>
      %66 = vector.broadcast %46 : vector<1x32xf32> to vector<16x32xf32>
      %67 = arith.mulf %65, %66 : vector<16x32xf32>
      %68 = vector.broadcast %47 : vector<1x32xf32> to vector<16x32xf32>
      %69 = arith.addf %67, %68 : vector<16x32xf32>
      %c0_39 = arith.constant 0 : index
      %c0_40 = arith.constant 0 : index
      %70 = vector.load %arg10[%c0_39, %c0_40] : memref<16x32xf32, #tpu.memory_space<vmem>>, vector<16x32xf32>
      tpu.vector_store %arg10[%c0_39, %c0_40], %69 {strides = array<i32>} : memref<16x32xf32, #tpu.memory_space<vmem>>, vector<16x32xf32>,
      %cst_41 = arith.constant -1.000000e+30 : f32
      %71 = vector.broadcast %cst_41 : f32 to vector<16x1xf32>
      %c0_42 = arith.constant 0 : index
      %c0_43 = arith.constant 0 : index
      %72 = vector.load %arg11[%c0_42, %c0_43] : memref<16x1xf32, #tpu.memory_space<vmem>>, vector<16x1xf32>
      tpu.vector_store %arg11[%c0_42, %c0_43], %71 {strides = array<i32>} : memref<16x1xf32, #tpu.memory_space<vmem>>, vector<16x1xf32>,
      %cst_44 = arith.constant 0.000000e+00 : f32
      %73 = vector.broadcast %cst_44 : f32 to vector<16x1xf32>
      %c0_45 = arith.constant 0 : index
      %c0_46 = arith.constant 0 : index
      %74 = vector.load %arg12[%c0_45, %c0_46] : memref<16x1xf32, #tpu.memory_space<vmem>>, vector<16x1xf32>
      tpu.vector_store %arg12[%c0_45, %c0_46], %73 {strides = array<i32>} : memref<16x1xf32, #tpu.memory_space<vmem>>, vector<16x1xf32>,
      %cst_47 = arith.constant 0.000000e+00 : f32
      %75 = vector.broadcast %cst_47 : f32 to vector<16x1xf32>
      %c0_48 = arith.constant 0 : index
      %c0_49 = arith.constant 0 : index
      %76 = vector.load %arg13[%c0_48, %c0_49] : memref<16x1xf32, #tpu.memory_space<vmem>>, vector<16x1xf32>
      tpu.vector_store %arg13[%c0_48, %c0_49], %75 {strides = array<i32>} : memref<16x1xf32, #tpu.memory_space<vmem>>, vector<16x1xf32>,
    } else {
    }
    %c0 = arith.constant 0 : index
    %c0_1 = arith.constant 0 : index
    %3 = vector.load %arg10[%c0, %c0_1] : memref<16x32xf32, #tpu.memory_space<vmem>>, vector<16x32xf32>
    %4 = arith.truncf %3 : vector<16x32xf32> to vector<16x32xbf16>
    %c0_2 = arith.constant 0 : index
    %c0_3 = arith.constant 0 : index
    %5 = vector.load %arg6[%c0_2, %c0_3] : memref<32x128xbf16, #tpu.memory_space<vmem>>, vector<32x128xbf16>
    %cst = arith.constant dense<0.000000e+00> : vector<16x128xf32>
    %6 = tpu.matmul %4, %5, %cst {dimension_numbers = #tpu.dot_dimension_numbers<[1], [0], [0], [1], [0, 0, 1, 1], [], []>} : vector<16x32xbf16>, vector<32x128xbf16>, vector<16x128xf32> -> vector<16x128xf32>
    %c0_4 = arith.constant 0 : index
    %c0_5 = arith.constant 0 : index
    %7 = vector.load %arg7[%c0_4, %c0_5] : memref<1x128xf32, #tpu.memory_space<vmem>>, vector<1x128xf32>
    %8 = vector.broadcast %7 : vector<1x128xf32> to vector<16x128xf32>
    %9 = arith.addf %6, %8 : vector<16x128xf32>
    %c0_6 = arith.constant 0 : index
    %c0_7 = arith.constant 0 : index
    %c0_8 = arith.constant 0 : index
    %10 = vector.load %arg3[%c0_6, %c0_7, %c0_8] : memref<2x8x1xi32, #tpu.memory_space<vmem>>, vector<2x8x1xi32>
    %11 = vector.shape_cast %10 : vector<2x8x1xi32> to vector<16x1xi32>
    %12 = tpu.iota {dimensions = array<i32: 1>} : vector<16x128xi32>
    %c128_i32 = arith.constant 128 : i32
    %13 = arith.muli %arg1, %c128_i32 : i32
    %14 = vector.broadcast %13 : i32 to vector<16x128xi32>
    %15 = arith.addi %12, %14 : vector<16x128xi32>
    %c0_9 = arith.constant 0 : index
    %c0_10 = arith.constant 0 : index
    %16 = vector.load %arg13[%c0_9, %c0_10] : memref<16x1xf32, #tpu.memory_space<vmem>>, vector<16x1xf32>
    %17 = vector.broadcast %11 : vector<16x1xi32> to vector<16x128xi32>
    %18 = arith.cmpi eq, %15, %17 : vector<16x128xi32>
    %cst_11 = arith.constant 0.000000e+00 : f32
    %19 = vector.broadcast %cst_11 : f32 to vector<16x128xf32>
    %20 = arith.select %18, %9, %19 : vector<16x128xi1>, vector<16x128xf32>
    %cst_12 = arith.constant dense<0.000000e+00> : vector<16xf32>
    %21 = vector.multi_reduction <add>, %20, %cst_12 [1] : vector<16x128xf32> to vector<16xf32>
    %22 = vector.shape_cast %21 : vector<16xf32> to vector<16x1xf32>
    %23 = arith.addf %16, %22 : vector<16x1xf32>
    %c0_13 = arith.constant 0 : index
    %c0_14 = arith.constant 0 : index
    %24 = vector.load %arg13[%c0_13, %c0_14] : memref<16x1xf32, #tpu.memory_space<vmem>>, vector<16x1xf32>
    tpu.vector_store %arg13[%c0_13, %c0_14], %23 {strides = array<i32>} : memref<16x1xf32, #tpu.memory_space<vmem>>, vector<16x1xf32>,
    %c0_15 = arith.constant 0 : index
    %c0_16 = arith.constant 0 : index
    %25 = vector.load %arg11[%c0_15, %c0_16] : memref<16x1xf32, #tpu.memory_space<vmem>>, vector<16x1xf32>
    %cst_17 = arith.constant dense<0xFF800000> : vector<16xf32>
    %26 = vector.multi_reduction <maximumf>, %9, %cst_17 [1] : vector<16x128xf32> to vector<16xf32>
    %27 = vector.shape_cast %26 : vector<16xf32> to vector<16x1xf32>
    %28 = arith.maximumf %25, %27 : vector<16x1xf32>
    %c0_18 = arith.constant 0 : index
    %c0_19 = arith.constant 0 : index
    %29 = vector.load %arg12[%c0_18, %c0_19] : memref<16x1xf32, #tpu.memory_space<vmem>>, vector<16x1xf32>
    %30 = arith.subf %25, %28 : vector<16x1xf32>
    %31 = math.exp %30 : vector<16x1xf32>
    %32 = arith.mulf %29, %31 : vector<16x1xf32>
    %33 = vector.broadcast %28 : vector<16x1xf32> to vector<16x128xf32>
    %34 = arith.subf %9, %33 : vector<16x128xf32>
    %35 = math.exp %34 : vector<16x128xf32>
    %cst_20 = arith.constant dense<0.000000e+00> : vector<16xf32>
    %36 = vector.multi_reduction <add>, %35, %cst_20 [1] : vector<16x128xf32> to vector<16xf32>
    %37 = vector.shape_cast %36 : vector<16xf32> to vector<16x1xf32>
    %38 = arith.addf %32, %37 : vector<16x1xf32>
    %c0_21 = arith.constant 0 : index
    %c0_22 = arith.constant 0 : index
    %39 = vector.load %arg12[%c0_21, %c0_22] : memref<16x1xf32, #tpu.memory_space<vmem>>, vector<16x1xf32>
    tpu.vector_store %arg12[%c0_21, %c0_22], %38 {strides = array<i32>} : memref<16x1xf32, #tpu.memory_space<vmem>>, vector<16x1xf32>,
    %c0_23 = arith.constant 0 : index
    %c0_24 = arith.constant 0 : index
    %40 = vector.load %arg11[%c0_23, %c0_24] : memref<16x1xf32, #tpu.memory_space<vmem>>, vector<16x1xf32>
    tpu.vector_store %arg11[%c0_23, %c0_24], %28 {strides = array<i32>} : memref<16x1xf32, #tpu.memory_space<vmem>>, vector<16x1xf32>,
    %c0_i32_25 = arith.constant 0 : i32
    %41 = arith.cmpi eq, %arg1, %c0_i32_25 : i32
    %42 = arith.extui %41 : i1 to i32
    %c0_i32_26 = arith.constant 0 : i32
    %43 = arith.cmpi ne, %42, %c0_i32_26 : i32
    scf.if %43 {
      %c0_27 = arith.constant 0 : index
      %c0_28 = arith.constant 0 : index
      %44 = vector.load %arg11[%c0_27, %c0_28] : memref<16x1xf32, #tpu.memory_space<vmem>>, vector<16x1xf32>
      %c0_29 = arith.constant 0 : index
      %c0_30 = arith.constant 0 : index
      %45 = vector.load %arg12[%c0_29, %c0_30] : memref<16x1xf32, #tpu.memory_space<vmem>>, vector<16x1xf32>
      %46 = math.log %45 : vector<16x1xf32>
      %47 = arith.addf %44, %46 : vector<16x1xf32>
      %c0_31 = arith.constant 0 : index
      %c0_32 = arith.constant 0 : index
      %48 = vector.load %arg13[%c0_31, %c0_32] : memref<16x1xf32, #tpu.memory_space<vmem>>, vector<16x1xf32>
      %49 = arith.subf %47, %48 : vector<16x1xf32>
      %c0_i32_33 = arith.constant 0 : i32
      %50 = vector.broadcast %c0_i32_33 : i32 to vector<16x1xi32>
      %51 = arith.cmpi ne, %11, %50 : vector<16x1xi32>
      %52 = arith.extui %51 : vector<16x1xi1> to vector<16x1xi32>
      %53 = arith.sitofp %52 : vector<16x1xi32> to vector<16x1xf32>
      %54 = arith.mulf %49, %53 : vector<16x1xf32>
      %55 = vector.shape_cast %54 : vector<16x1xf32> to vector<1x16x1xf32>
      %cst_34 = arith.constant dense<0.000000e+00> : vector<1xf32>
      %56 = vector.multi_reduction <add>, %55, %cst_34 [1, 2] : vector<1x16x1xf32> to vector<1xf32>
      %57 = vector.shape_cast %56 : vector<1xf32> to vector<1x1x1xf32>
      %58 = vector.extract %57[0, 0, 0] : f32 from vector<1x1x1xf32>
      %59 = vector.broadcast %58 : f32 to vector<1x1xf32>
      %c0_35 = arith.constant 0 : index
      %c0_36 = arith.constant 0 : index
      %c0_37 = arith.constant 0 : index
      %60 = vector.load %arg8[%c0_35, %c0_36, %c0_37] : memref<1x1x1xf32, #tpu.memory_space<vmem>>, vector<1x1x1xf32>
      %61 = vector.shape_cast %60 : vector<1x1x1xf32> to vector<1x1xf32>
      %62 = vector.shape_cast %59 : vector<1x1xf32> to vector<1x1x1xf32>
      tpu.vector_store %arg8[%c0_35, %c0_36, %c0_37], %62 {strides = array<i32>} : memref<1x1x1xf32, #tpu.memory_space<vmem>>, vector<1x1x1xf32>,
      %63 = vector.shape_cast %53 : vector<16x1xf32> to vector<1x16x1xf32>
      %cst_38 = arith.constant dense<0.000000e+00> : vector<1xf32>
      %64 = vector.multi_reduction <add>, %63, %cst_38 [1, 2] : vector<1x16x1xf32> to vector<1xf32>
      %65 = vector.shape_cast %64 : vector<1xf32> to vector<1x1x1xf32>
      %66 = vector.extract %65[0, 0, 0] : f32 from vector<1x1x1xf32>
      %67 = vector.broadcast %66 : f32 to vector<1x1xf32>
      %c0_39 = arith.constant 0 : index
      %c0_40 = arith.constant 0 : index
      %c0_41 = arith.constant 0 : index
      %68 = vector.load %arg9[%c0_39, %c0_40, %c0_41] : memref<1x1x1xf32, #tpu.memory_space<vmem>>, vector<1x1x1xf32>
      %69 = vector.shape_cast %68 : vector<1x1x1xf32> to vector<1x1xf32>
      %70 = vector.shape_cast %67 : vector<1x1xf32> to vector<1x1x1xf32>
      tpu.vector_store %arg9[%c0_39, %c0_40, %c0_41], %70 {strides = array<i32>} : memref<1x1x1xf32, #tpu.memory_space<vmem>>, vector<1x1x1xf32>,
    } else {
    }
    return
  }
  func.func @transform_0(%arg0: i32, %arg1: i32) -> (i32, i32, i32) {
    %c0_i32 = arith.constant 0 : i32
    %c0_i32_0 = arith.constant 0 : i32
    %c0_i32_1 = arith.constant 0 : i32
    return %arg0, %c0_i32, %c0_i32_0 : i32, i32, i32
  }
  func.func @transform_1(%arg0: i32, %arg1: i32) -> (i32, i32, i32) {
    %c0_i32 = arith.constant 0 : i32
    %c0_i32_0 = arith.constant 0 : i32
    %c0_i32_1 = arith.constant 0 : i32
    return %arg0, %c0_i32, %c0_i32_0 : i32, i32, i32
  }
  func.func @transform_2(%arg0: i32, %arg1: i32) -> (i32, i32) {
    %c0_i32 = arith.constant 0 : i32
    %c0_i32_0 = arith.constant 0 : i32
    %c0_i32_1 = arith.constant 0 : i32
    return %c0_i32, %c0_i32_0 : i32, i32
  }
  func.func @transform_3(%arg0: i32, %arg1: i32) -> (i32, i32) {
    %c0_i32 = arith.constant 0 : i32
    %c0_i32_0 = arith.constant 0 : i32
    %c0_i32_1 = arith.constant 0 : i32
    return %c0_i32, %c0_i32_0 : i32, i32
  }
  func.func @transform_4(%arg0: i32, %arg1: i32) -> (i32, i32) {
    %c0_i32 = arith.constant 0 : i32
    %c0_i32_0 = arith.constant 0 : i32
    return %c0_i32, %arg1 : i32, i32
  }
  func.func @transform_5(%arg0: i32, %arg1: i32) -> (i32, i32) {
    %c0_i32 = arith.constant 0 : i32
    %c0_i32_0 = arith.constant 0 : i32
    return %c0_i32, %arg1 : i32, i32
  }
  func.func @transform_6(%arg0: i32, %arg1: i32) -> (i32, i32, i32) {
    %c0_i32 = arith.constant 0 : i32
    %c0_i32_0 = arith.constant 0 : i32
    %c0_i32_1 = arith.constant 0 : i32
    return %arg0, %c0_i32, %c0_i32_0 : i32, i32, i32
  }
  func.func @transform_7(%arg0: i32, %arg1: i32) -> (i32, i32, i32) {
    %c0_i32 = arith.constant 0 : i32
    %c0_i32_0 = arith.constant 0 : i32
    %c0_i32_1 = arith.constant 0 : i32
    return %arg0, %c0_i32, %c0_i32_0 : i32, i32, i32
  }
}

</mosaic_0001>

<llo_original>
// kernel: pepbart_forward.3
$region0: #{pepbart_forward.3}
  #allocation0 [shape = 'u32[]', space=smem, size = 0x4, offset = 0x4, fixed_abs, tag = 'smem constant byte address 0x4 - core index']
  #allocation1 [shape = 'u32[144,128]{1,0:T(1,128)}', space=vmem, size = 0x12000, scoped, tag = 'internal scratch']
  #allocation2 [shape = 'f32[16,32]{1,0:T(8,128)}', space=vmem, size = 0x2000, scoped, tag = 'scratch operand']
  #allocation3 [shape = 'f32[16,1]{1,0:T(8,128)}', space=vmem, size = 0x2000, scoped, tag = 'scratch operand']
  #allocation4 [shape = 'f32[16,1]{1,0:T(8,128)}', space=vmem, size = 0x2000, scoped, tag = 'scratch operand']
  #allocation5 [shape = 'f32[16,1]{1,0:T(8,128)}', space=vmem, size = 0x2000, scoped, tag = 'scratch operand']
  %s0 = inlined_call_operand.vmem [shape: f32[2,8,32], index: 0, kind: input, shape index: {}]
  %s1 = inlined_call_operand.vmem [shape: s32[2,8,1], index: 1, kind: input, shape index: {}]
  %s2 = inlined_call_operand.vmem [shape: f32[1,32], index: 2, kind: input, shape index: {}]
  %s3 = inlined_call_operand.vmem [shape: f32[1,32], index: 3, kind: input, shape index: {}]
  %s4 = inlined_call_operand.vmem [shape: bf16[32,128], index: 4, kind: input, shape index: {}]
  %s5 = inlined_call_operand.vmem [shape: f32[1,128], index: 5, kind: input, shape index: {}]
  %s6 = inlined_call_operand.hbm [shape: f32[1,1,1], index: 6, kind: output, shape index: {0}]
  %s7 = inlined_call_operand.hbm [shape: f32[1,1,1], index: 7, kind: output, shape index: {1}]
  %8 = xla_tuple %s6, %s7
  %s9 = sld [smem:[#allocation0]]
  $region50: #{pepbart_forward.3} parent=0
    _
  %s11 = ssub.s32 1, %s9
  %s12 = scalar_select 0, %s11, %s9
  $region1: #{pepbart_forward.3} parent=0
    #allocation6 [shape = 'u8[512]{0}', space=vmem, size = 0x400, scoped, tag = 'output window, operand 0, single buffered']
    #allocation7 [shape = 's32[1]{0}', space=sflag, size = 0x4, scoped, tag = 'scoped memory for pepbart_forward.3']
    #allocation8 [shape = 'u8[512]{0}', space=vmem, size = 0x400, scoped, tag = 'output window, operand 1, single buffered']
    #allocation9 [shape = 's32[1]{0}', space=sflag, size = 0x4, scoped, tag = 'scoped memory for pepbart_forward.3']
    %13 = vsyncpa [#allocation7], 0
    %14 = vsyncpa [#allocation9], 0
    // Predicated region
    $region2: #{pepbart_forward.3} parent=1 // pred_check
      _
    $region3: #{pepbart_forward.3} parent=1 // pred_check_branch
      %16 = sbr.rel (0) target = $region5
    $region4: #{pepbart_forward.3} parent=1 // pred_region
      _
    $region5: #{pepbart_forward.3} parent=1 // pred_fallthru
      _
    // Predicated region
    $region6: #{pepbart_forward.3} parent=1 // pred_check
      _
    $region7: #{pepbart_forward.3} parent=1 // pred_check_branch
      %18 = sbr.rel (0) target = $region9
    $region8: #{pepbart_forward.3} parent=1 // pred_region
      _
    $region9: #{pepbart_forward.3} parent=1 // pred_fallthru
      _
    // Predicated region
    $region10: #{pepbart_forward.3} parent=1 // pred_check
      _
    $region11: #{pepbart_forward.3} parent=1 // pred_check_branch
      %20 = sbr.rel (0) target = $region13
    $region12: #{pepbart_forward.3} parent=1 // pred_region
      _
    $region13: #{pepbart_forward.3} parent=1 // pred_fallthru
      _
    // Predicated region
    $region14: #{pepbart_forward.3} parent=1 // pred_check
      _
    $region15: #{pepbart_forward.3} parent=1 // pred_check_branch
      %22 = sbr.rel (0) target = $region17
    $region16: #{pepbart_forward.3} parent=1 // pred_region
      _
    $region17: #{pepbart_forward.3} parent=1 // pred_fallthru
      _
    // Predicated region
    $region18: #{pepbart_forward.3} parent=1 // pred_check
      _
    $region19: #{pepbart_forward.3} parent=1 // pred_check_branch
      %24 = sbr.rel (0) target = $region21
    $region20: #{pepbart_forward.3} parent=1 // pred_region
      _
    $region21: #{pepbart_forward.3} parent=1 // pred_fallthru
      _
    // Predicated region
    $region22: #{pepbart_forward.3} parent=1 // pred_check
      _
    $region23: #{pepbart_forward.3} parent=1 // pred_check_branch
      %26 = sbr.rel (0) target = $region25
    $region24: #{pepbart_forward.3} parent=1 // pred_region
      _
    $region25: #{pepbart_forward.3} parent=1 // pred_fallthru
      _
    %p28 = scmp.eq.s32.totalorder 0, 0
    // Predicated region
    $region26: #{pepbart_forward.3} parent=1 // pred_check
      %p29 = pneg %p28
    $region27: #{pepbart_forward.3} parent=1 // pred_check_branch
      %31 = sbr.rel (%p29) target = $region29
    $region28: #{pepbart_forward.3} parent=1 // pred_region
      %v32 = vld [vmem:[%s0] sm:$0xff]
      %v33 = vld [vmem:[%s0 + $0x8] sm:$0xff]
      %v34 = vld [vmem:[%s2] sm:$0x1]
      %v35 = vld [vmem:[%s3] sm:$0x1]
      %vm36 = vcmask 261120
      %v37 = vsel %vm36, %v32, 0.0
      %38 = vadd.xlane.f32.xlu0 %v37
      %v39 = vpop.xlane.xlu0 %38
      %v40 = vsel %vm36, %v33, 0.0
      %41 = vadd.xlane.f32.xlu0 %v40
      %v42 = vpop.xlane.xlu0 %41
      %v43 = vrcp.pop 32.0
      %v44 = vmul.f32 %v39, %v43
      %v45 = vmul.f32 %v42, %v43
      %v46 = vsub.f32 %v32, %v44
      %v47 = vsub.f32 %v33, %v45
      %v48 = vmul.f32 %v46, %v46
      %v49 = vmul.f32 %v47, %v47
      %v50 = vsel %vm36, %v48, 0.0
      %51 = vadd.xlane.f32.xlu0 %v50
      %v52 = vpop.xlane.xlu0 %51
      %v53 = vsel %vm36, %v49, 0.0
      %54 = vadd.xlane.f32.xlu0 %v53
      %v55 = vpop.xlane.xlu0 %54
      %v56 = vmul.f32 %v52, %v43
      %v57 = vmul.f32 %v55, %v43
      %v58 = vadd.f32 %v56, 1e-05
      %v59 = vadd.f32 %v57, 1e-05
      %v60 = vrsqrt.pop %v58
      %v61 = vrsqrt.pop %v59
      %v62 = vmul.f32 %v46, %v60
      %v63 = vmul.f32 %v47, %v61
      %v65 = vlaneseq
      %v66 = vshrl.u32 %v65, 7
      %v67 = vsub.s32 0, %v66
      %v68 = vrot.slane %v34, %v67
      %v70 = vmul.f32 %v62, %v68
      %v71 = vmul.f32 %v63, %v68
      %v73 = vlaneseq
      %v74 = vshrl.u32 %v73, 7
      %v75 = vsub.s32 0, %v74
      %v76 = vrot.slane %v35, %v75
      %v78 = vadd.f32 %v70, %v76
      %v79 = vadd.f32 %v71, %v76
      %80 = vst.msk [vmem:[#allocation2] sm:$0xff] %vm36, %v78
      %81 = vst.msk [vmem:[#allocation2 + $0x8] sm:$0xff] %vm36, %v79
      %vm82 = vcmask 7168
      %83 = vst.msk [vmem:[#allocation3] sm:$0xff] %vm82, -1e+30
      %84 = vst.msk [vmem:[#allocation3 + $0x8] sm:$0xff] %vm82, -1e+30
      %85 = vst.msk [vmem:[#allocation4] sm:$0xff] %vm82, 0.0
      %86 = vst.msk [vmem:[#allocation4 + $0x8] sm:$0xff] %vm82, 0.0
      %87 = vst.msk [vmem:[#allocation5] sm:$0xff] %vm82, 0.0
      %88 = vst.msk [vmem:[#allocation5 + $0x8] sm:$0xff] %vm82, 0.0
    $region29: #{pepbart_forward.3} parent=1 // pred_fallthru
      _
    %v89 = vld [vmem:[#allocation2] sm:$0xff]
    %v90 = vld [vmem:[#allocation2 + $0x8] sm:$0xff]
    %v91 = vpack.c.bf16 %v90, %v89
    %v92 = vld [vmem:[%s4] sm:$0xf]
    %v93 = vld [vmem:[%s4 + $0x4] sm:$0xf]
    %v94 = vld [vmem:[%s4 + $0x8] sm:$0xf]
    %v95 = vld [vmem:[%s4 + $0xc] sm:$0xf]
    %v96 = vld [vmem:[%s5] sm:$0x1]
    %v98 = vlaneseq
    %v99 = vshrl.u32 %v98, 7
    %v100 = vsub.s32 0, %v99
    %v101 = vrot.slane %v96, %v100
    %v107 = vunpack.c.l.b16 %v92
    %v108 = vunpack.c.l.b16 %v93
    %v109 = vunpack.c.l.b16 %v94
    %v110 = vunpack.c.l.b16 %v95
    %v111 = vpack.c.b16 %v108, %v107
    %v112 = vpack.c.b16 %v110, %v109
    %vm115 = vcmask 261120
    %v117 = vsel %vm115, %v91, 0
    %119 = vmatprep.subr.bf16.mxu0 0
    %120 = vmatpush1.bf16.msra.mxu0 %v111
    %121 = vmatprep.subr.bf16.mxu0 0
    %122 = vmatpush1.bf16.msra.mxu0 %v112
    %123 = vmatprep.subr.bf16.mxu0 0
    %124 = vmatpush1.bf16.msra.mxu0 0
    %125 = vmatprep.subr.bf16.mxu0 0
    %126 = vmatpush1.bf16.msra.mxu0 0
    %127 = vmatprep.subr.bf16.mxu0 0
    %128 = vmatpush1.bf16.msra.mxu0 0
    %129 = vmatprep.subr.bf16.mxu0 0
    %130 = vmatpush1.bf16.msra.mxu0 0
    %131 = vmatprep.subr.bf16.mxu0 0
    %132 = vmatpush1.bf16.msra.mxu0 0
    %133 = vmatprep.subr.bf16.mxu0 0
    %134 = vmatpush1.bf16.msra.mxu0 0
    %135 = vmatprep.subr.bf16.mxu0 0
    %136 = vmatpush1.bf16.msra.mxu0 0
    %137 = vmatprep.subr.bf16.mxu0 0
    %138 = vmatpush1.bf16.msra.mxu0 0
    %139 = vmatprep.subr.bf16.mxu0 0
    %140 = vmatpush1.bf16.msra.mxu0 0
    %141 = vmatprep.subr.bf16.mxu0 0
    %142 = vmatpush1.bf16.msra.mxu0 0
    %143 = vmatprep.subr.bf16.mxu0 0
    %144 = vmatpush1.bf16.msra.mxu0 0
    %145 = vmatprep.subr.bf16.mxu0 0
    %146 = vmatpush1.bf16.msra.mxu0 0
    %147 = vmatprep.subr.bf16.mxu0 0
    %148 = vmatpush1.bf16.msra.mxu0 0
    %149 = vmatprep.subr.bf16.mxu0 0
    %150 = vmatpush1.bf16.msra.mxu0 0
    %151 = vmatprep.mubr.bf16.mxu0 0
    %152 = vmatmul.mubr.bf16.gmra.mrb[0].mxu0 %v117
    %v153 = vpop.f32.mrb[0].mxu0
    %v154 = vadd.f32 %v101, %v153
    %v155 = vpop.f32.mrb[0].mxu0
    %v156 = vpop.f32.mrb[0].mxu0
    %v157 = vadd.f32 %v101, %v156
    %v158 = vpop.f32.mrb[0].mxu0
    %159 = vdwg.mxu0
    %v160 = vld [vmem:[%s1] sm:$0xff]
    %v161 = vld [vmem:[%s1 + $0x8] sm:$0xff]
    %v162 = vlaneseq
    %v163 = vand.u32 %v162, 127
    %s164 = smul.u32 0, 128
    %v165 = vstv %s164
    %v166 = vadd.s32 %v163, %v165
    %v167 = vld [vmem:[#allocation5] sm:$0xff]
    %v168 = vld [vmem:[#allocation5 + $0x8] sm:$0xff]
    %169 = vset.pattern.permute.xlu0 0
    %170 = vperm.xlu0 %169, %v160
    %v171 = vpop.permute.xlu0 %170
    %172 = vset.pattern.permute.xlu0 0
    %173 = vperm.xlu0 %172, %v161
    %v174 = vpop.permute.xlu0 %173
    %vm175 = vcmp.eq.s32.totalorder %v166, %v171
    %vm176 = vcmp.eq.s32.totalorder %v166, %v174
    %v177 = vsel %vm175, %v154, 0.0
    %v178 = vsel %vm176, %v157, 0.0
    %179 = vadd.xlane.f32.xlu0 %v177
    %v180 = vpop.xlane.xlu0 %179
    %181 = vadd.xlane.f32.xlu0 %v178
    %v182 = vpop.xlane.xlu0 %181
    %v183 = vadd.f32 %v167, %v180
    %v184 = vadd.f32 %v168, %v182
    %vm185 = vcmask 7168
    %186 = vst.msk [vmem:[#allocation5] sm:$0xff] %vm185, %v183
    %187 = vst.msk [vmem:[#allocation5 + $0x8] sm:$0xff] %vm185, %v184
    %v188 = vld [vmem:[#allocation3] sm:$0xff]
    %v189 = vld [vmem:[#allocation3 + $0x8] sm:$0xff]
    %190 = vmax.xlane.f32.xlu0 %v154
    %v191 = vpop.xlane.xlu0 %190
    %192 = vmax.xlane.f32.xlu0 %v157
    %v193 = vpop.xlane.xlu0 %192
    %v194 = vmax.f32 %v188, %v191
    %v195 = vmax.f32 %v189, %v193
    %v196 = vld [vmem:[#allocation4] sm:$0xff]
    %v197 = vld [vmem:[#allocation4 + $0x8] sm:$0xff]
    %v198 = vsub.f32 %v188, %v194
    %v199 = vsub.f32 %v189, %v195
    %v200 = vmul.f32 %v198, 1.442695
    %v201 = vpow.pop %v200
    %v202 = vmul.f32 %v199, 1.442695
    %v203 = vpow.pop %v202
    %v204 = vmul.f32 %v196, %v201
    %v205 = vmul.f32 %v197, %v203
    %207 = vset.pattern.permute.xlu0 0
    %208 = vperm.xlu0 %207, %v194
    %v209 = vpop.permute.xlu0 %208
    %212 = vset.pattern.permute.xlu0 0
    %213 = vperm.xlu0 %212, %v195
    %v214 = vpop.permute.xlu0 %213
    %v216 = vsub.f32 %v154, %v209
    %v217 = vsub.f32 %v157, %v214
    %v218 = vmul.f32 %v216, 1.442695
    %v219 = vpow.pop %v218
    %v220 = vmul.f32 %v217, 1.442695
    %v221 = vpow.pop %v220
    %222 = vadd.xlane.f32.xlu0 %v219
    %v223 = vpop.xlane.xlu0 %222
    %224 = vadd.xlane.f32.xlu0 %v221
    %v225 = vpop.xlane.xlu0 %224
    %v226 = vadd.f32 %v204, %v223
    %v227 = vadd.f32 %v205, %v225
    %228 = vst.msk [vmem:[#allocation4] sm:$0xff] %vm185, %v226
    %229 = vst.msk [vmem:[#allocation4 + $0x8] sm:$0xff] %vm185, %v227
    %230 = vst.msk [vmem:[#allocation3] sm:$0xff] %vm185, %v194
    %231 = vst.msk [vmem:[#allocation3 + $0x8] sm:$0xff] %vm185, %v195
    // Predicated region
    $region30: #{pepbart_forward.3} parent=1 // pred_check
      %p232 = pneg %p28
    $region31: #{pepbart_forward.3} parent=1 // pred_check_branch
      %234 = sbr.rel (%p232) target = $region33
    $region32: #{pepbart_forward.3} parent=1 // pred_region
      %v235 = vld [vmem:[#allocation3] sm:$0xff]
      %v236 = vld [vmem:[#allocation3 + $0x8] sm:$0xff]
      %v237 = vld [vmem:[#allocation4] sm:$0xff]
      %v238 = vld [vmem:[#allocation4 + $0x8] sm:$0xff]
      %v239 = vlog2.pop %v237
      %v240 = vmul.f32 %v239, 0.6931472
      %v241 = vlog2.pop %v238
      %v242 = vmul.f32 %v241, 0.6931472
      %v243 = vadd.f32 %v235, %v240
      %v244 = vadd.f32 %v236, %v242
      %v245 = vld [vmem:[#allocation5] sm:$0xff]
      %v246 = vld [vmem:[#allocation5 + $0x8] sm:$0xff]
      %v247 = vsub.f32 %v243, %v245
      %v248 = vsub.f32 %v244, %v246
      %vm249 = vcmp.ne.s32.totalorder %v160, 0
      %vm250 = vcmp.ne.s32.totalorder %v161, 0
      %v251 = vsel %vm249, 1, 0
      %v252 = vsel %vm250, 1, 0
      %v253 = vcvt.s32.f32 %v251
      %v254 = vcvt.s32.f32 %v252
      %v255 = vmul.f32 %v247, %v253
      %v256 = vmul.f32 %v248, %v254
      %v257 = vsel %vm185, %v255, 0.0
      %v258 = vsel %vm185, %v256, 0.0
      %v259 = vadd.f32 %v257, %v258
      %260 = vadd.xlane.f32.xlu0 %v259
      %v261 = vpop.xlane.xlu0 %260
      %v262 = vrot.slane %v261, 4
      %v263 = vadd.f32 %v261, %v262
      %v264 = vrot.slane %v263, 2
      %v265 = vadd.f32 %v263, %v264
      %v266 = vrot.slane %v265, 1
      %v267 = vadd.f32 %v265, %v266
      %s268 = vtos %v267
      %v269 = vstv %s268
      %vm270 = vcmask 0
      %271 = vst.msk [vmem:[#allocation6] sm:$0x1] %vm270, %v269
      %v272 = vsel %vm185, %v253, 0.0
      %v273 = vsel %vm185, %v254, 0.0
      %v274 = vadd.f32 %v272, %v273
      %275 = vadd.xlane.f32.xlu0 %v274
      %v276 = vpop.xlane.xlu0 %275
      %v277 = vrot.slane %v276, 4
      %v278 = vadd.f32 %v276, %v277
      %v279 = vrot.slane %v278, 2
      %v280 = vadd.f32 %v278, %v279
      %v281 = vrot.slane %v280, 1
      %v282 = vadd.f32 %v280, %v281
      %s283 = vtos %v282
      %v284 = vstv %s283
      %285 = vst.msk [vmem:[#allocation8] sm:$0x1] %vm270, %v284
    $region33: #{pepbart_forward.3} parent=1 // pred_fallthru
      _
    // Predicated region
    $region34: #{pepbart_forward.3} parent=1 // pred_check
      _
    $region35: #{pepbart_forward.3} parent=1 // pred_check_branch
      %287 = sbr.rel (0) target = $region37
    $region36: #{pepbart_forward.3} parent=1 // pred_region
      %s289 = ssub.s32 16, 16
      %290 = vsyncadd [#allocation7], %s289
      %s292 = sshll.u32 [#allocation6], 4
      %s293 = int_to_ptr.vmem [resolvable:$true] %s292
      %295 = dma.vmem_to_hbm [thread:$0]  %s293, 16, %s6, [#allocation7]
    $region37: #{pepbart_forward.3} parent=1 // pred_fallthru
      _
    // Predicated region
    $region38: #{pepbart_forward.3} parent=1 // pred_check
      _
    $region39: #{pepbart_forward.3} parent=1 // pred_check_branch
      %297 = sbr.rel (0) target = $region41
    $region40: #{pepbart_forward.3} parent=1 // pred_region
      %s299 = ssub.s32 16, 16
      %300 = vsyncadd [#allocation9], %s299
      %s302 = sshll.u32 [#allocation8], 4
      %s303 = int_to_ptr.vmem [resolvable:$true] %s302
      %305 = dma.vmem_to_hbm [thread:$0]  %s303, 16, %s7, [#allocation9]
    $region41: #{pepbart_forward.3} parent=1 // pred_fallthru
      _
    // Predicated region
    $region42: #{pepbart_forward.3} parent=1 // pred_check
      _
    $region43: #{pepbart_forward.3} parent=1 // pred_check_branch
      %307 = sbr.rel (0) target = $region45
    $region44: #{pepbart_forward.3} parent=1 // pred_region
      %308 = dma.done [#allocation7], 16
    $region45: #{pepbart_forward.3} parent=1 // pred_fallthru
      _
    // Predicated region
    $region46: #{pepbart_forward.3} parent=1 // pred_check
      _
    $region47: #{pepbart_forward.3} parent=1 // pred_check_branch
      %310 = sbr.rel (0) target = $region49
    $region48: #{pepbart_forward.3} parent=1 // pred_region
      %311 = dma.done [#allocation9], 16
    $region49: #{pepbart_forward.3} parent=1 // pred_fallthru
      _
    %312 = vsyncpa [#allocation7], 1
    %313 = vsyncpa [#allocation9], 1

// kernel: pepbart_forward.2
$region0: #{pepbart_forward.2}
  #allocation0 [shape = 'u32[]', space=smem, size = 0x4, offset = 0x4, fixed_abs, tag = 'smem constant byte address 0x4 - core index']
  #allocation1 [shape = 'u32[144,128]{1,0:T(1,128)}', space=vmem, size = 0x12000, scoped, tag = 'internal scratch']
  #allocation2 [shape = 'f32[16,32]{1,0:T(8,128)}', space=vmem, size = 0x2000, scoped, tag = 'scratch operand']
  #allocation3 [shape = 'f32[8,8]{1,0:T(8,128)}', space=vmem, size = 0x1000, scoped, tag = 'scratch operand']
  #allocation4 [shape = 'bf16[16,32]{1,0:T(16,128)(2,1)}', space=vmem, size = 0x1000, scoped, tag = 'scratch operand']
  %s0 = inlined_call_operand.vmem [shape: f32[2,8,32], index: 0, kind: input, shape index: {}]
  %s1 = inlined_call_operand.vmem [shape: f32[2,8,32], index: 1, kind: input, shape index: {}]
  %s2 = inlined_call_operand.vmem [shape: bf16[2,8,32,32], index: 2, kind: input, shape index: {}]
  %s3 = inlined_call_operand.vmem [shape: bf16[2,32,128], index: 3, kind: input, shape index: {}]
  %s4 = inlined_call_operand.vmem [shape: bf16[2,128,32], index: 4, kind: input, shape index: {}]
  %s5 = inlined_call_operand.vmem [shape: f32[2,15,32], index: 5, kind: input, shape index: {}]
  %s6 = inlined_call_operand.vmem [shape: f32[2,1,128], index: 6, kind: input, shape index: {}]
  %s7 = inlined_call_operand.vmem [shape: f32[2,8,32], index: 7, kind: output, shape index: {}]
  %s8 = sld [smem:[#allocation0]]
  $region69: #{pepbart_forward.2} parent=0
    _
  %s10 = ssub.s32 1, %s8
  %s11 = scalar_select 0, %s10, %s8
  loop: start=0, step=1, limit=4
  $region2: #{pepbart_forward.2} parent=0 // loop_pre_header
    _
  $region3: #{pepbart_forward.2} parent=0 // loop_header
    %s13 = sphi 0, %s17
    %p14 = scmp.ge.s32.totalorder %s13, 4
    %s20 = sphi 0, %s32
    %s21 = sphi 0, %s28
    %s22 = sphi 0, %s20
    %s23 = sphi 0, %s21
    %s24 = sphi 0, %s22
    %s25 = sphi 0, %s23
    %s35 = sphi 0, %s37
    %s38 = sphi 0, %s35
    %s39 = sphi 0, %s38
    %s55 = sphi 0, %s39
    %s61 = sphi 0, %s63
    %s64 = sphi 0, %s61
    %s65 = sphi 0, %s64
    %s81 = sphi 0, %s65
    %s87 = sphi 0, %s89
    %s90 = sphi 0, %s87
    %s91 = sphi 0, %s90
    %s107 = sphi 0, %s91
    %s113 = sphi 0, %s115
    %s116 = sphi 0, %s113
    %s117 = sphi 0, %s116
    %s133 = sphi 0, %s117
    %s139 = sphi 0, %s141
    %s142 = sphi 0, %s139
    %s143 = sphi 0, %s142
    %s159 = sphi 0, %s143
    %s165 = sphi 0, %s167
    %s168 = sphi 0, %s165
    %s169 = sphi 0, %s168
    %s185 = sphi 0, %s169
    %s191 = sphi 0, %s193
    %s194 = sphi 0, %s191
    %s195 = sphi 0, %s194
    %s211 = sphi 0, %s195
    %s217 = sphi 0, %s219
    %s220 = sphi 0, %s217
    %s221 = sphi 0, %s220
    %s237 = sphi 0, %s221
  $region4: #{pepbart_forward.2} parent=0 // loop_header_branch
    %16 = sbr.rel (%p14) target = $region8
  $region5: #{pepbart_forward.2} parent=0 // loop_body
    %s18 = ssub.s32 %s13, 1
    %s19 = ssub.s32 %s13, 2
    %s26 = sadd.s32 1, %s21
    %p27 = scmp.ge.s32.totalorder %s26, 2
    %s28 = scalar_select %p27, 0, %s26
    %s29 = sadd.s32 1, %s20
    %s30 = scalar_select %p27, %s29, %s20
    %p31 = scmp.ge.s32.totalorder %s30, 1
    %s32 = scalar_select %p31, 0, %s30
    %s33 = ssub.s32 %s20, %s32
    %p34 = scmp.eq.s32.totalorder %s33, 0
    %s36 = sadd.s32 %s35, 1
    %s37 = scalar_select %p34, %s35, %s36
    %p40 = pneg %p34
    %p41 = scmp.eq.s32.totalorder %s13, 1
    %p42 = por %p40, %p41
    %p43 = scmp.ne.s32.totalorder %s35, %s38
    %p44 = scmp.eq.s32.totalorder %s13, 0
    %p45 = por %p43, %p44
    %p46 = scmp.ne.s32.totalorder %s35, %s38
    %p47 = scmp.eq.s32.totalorder %s18, 1
    %p48 = por %p46, %p47
    %p49 = scmp.ne.s32.totalorder %s38, %s39
    %p50 = scmp.eq.s32.totalorder %s18, 0
    %p51 = por %p49, %p50
    %p52 = scmp.ne.s32.totalorder %s38, %s39
    %p53 = scmp.eq.s32.totalorder %s19, 1
    %p54 = por %p52, %p53
    %p56 = scmp.ne.s32.totalorder %s39, %s55
    %p57 = scmp.eq.s32.totalorder %s19, 0
    %p58 = por %p56, %p57
    %s59 = ssub.s32 %s20, %s32
    %p60 = scmp.eq.s32.totalorder %s59, 0
    %s62 = sadd.s32 %s61, 1
    %s63 = scalar_select %p60, %s61, %s62
    %p66 = pneg %p60
    %p67 = scmp.eq.s32.totalorder %s13, 1
    %p68 = por %p66, %p67
    %p69 = scmp.ne.s32.totalorder %s61, %s64
    %p70 = scmp.eq.s32.totalorder %s13, 0
    %p71 = por %p69, %p70
    %p72 = scmp.ne.s32.totalorder %s61, %s64
    %p73 = scmp.eq.s32.totalorder %s18, 1
    %p74 = por %p72, %p73
    %p75 = scmp.ne.s32.totalorder %s64, %s65
    %p76 = scmp.eq.s32.totalorder %s18, 0
    %p77 = por %p75, %p76
    %p78 = scmp.ne.s32.totalorder %s64, %s65
    %p79 = scmp.eq.s32.totalorder %s19, 1
    %p80 = por %p78, %p79
    %p82 = scmp.ne.s32.totalorder %s65, %s81
    %p83 = scmp.eq.s32.totalorder %s19, 0
    %p84 = por %p82, %p83
    %s85 = ssub.s32 %s21, %s28
    %p86 = scmp.eq.s32.totalorder %s85, 0
    %s88 = sadd.s32 %s87, 1
    %s89 = scalar_select %p86, %s87, %s88
    %p92 = pneg %p86
    %p93 = scmp.eq.s32.totalorder %s13, 1
    %p94 = por %p92, %p93
    %p95 = scmp.ne.s32.totalorder %s87, %s90
    %p96 = scmp.eq.s32.totalorder %s13, 0
    %p97 = por %p95, %p96
    %p98 = scmp.ne.s32.totalorder %s87, %s90
    %p99 = scmp.eq.s32.totalorder %s18, 1
    %p100 = por %p98, %p99
    %p101 = scmp.ne.s32.totalorder %s90, %s91
    %p102 = scmp.eq.s32.totalorder %s18, 0
    %p103 = por %p101, %p102
    %p104 = scmp.ne.s32.totalorder %s90, %s91
    %p105 = scmp.eq.s32.totalorder %s19, 1
    %p106 = por %p104, %p105
    %p108 = scmp.ne.s32.totalorder %s91, %s107
    %p109 = scmp.eq.s32.totalorder %s19, 0
    %p110 = por %p108, %p109
    %s111 = ssub.s32 %s21, %s28
    %p112 = scmp.eq.s32.totalorder %s111, 0
    %s114 = sadd.s32 %s113, 1
    %s115 = scalar_select %p112, %s113, %s114
    %p118 = pneg %p112
    %p119 = scmp.eq.s32.totalorder %s13, 1
    %p120 = por %p118, %p119
    %p121 = scmp.ne.s32.totalorder %s113, %s116
    %p122 = scmp.eq.s32.totalorder %s13, 0
    %p123 = por %p121, %p122
    %p124 = scmp.ne.s32.totalorder %s113, %s116
    %p125 = scmp.eq.s32.totalorder %s18, 1
    %p126 = por %p124, %p125
    %p127 = scmp.ne.s32.totalorder %s116, %s117
    %p128 = scmp.eq.s32.totalorder %s18, 0
    %p129 = por %p127, %p128
    %p130 = scmp.ne.s32.totalorder %s116, %s117
    %p131 = scmp.eq.s32.totalorder %s19, 1
    %p132 = por %p130, %p131
    %p134 = scmp.ne.s32.totalorder %s117, %s133
    %p135 = scmp.eq.s32.totalorder %s19, 0
    %p136 = por %p134, %p135
    %s137 = ssub.s32 %s21, %s28
    %p138 = scmp.eq.s32.totalorder %s137, 0
    %s140 = sadd.s32 %s139, 1
    %s141 = scalar_select %p138, %s139, %s140
    %p144 = pneg %p138
    %p145 = scmp.eq.s32.totalorder %s13, 1
    %p146 = por %p144, %p145
    %p147 = scmp.ne.s32.totalorder %s139, %s142
    %p148 = scmp.eq.s32.totalorder %s13, 0
    %p149 = por %p147, %p148
    %p150 = scmp.ne.s32.totalorder %s139, %s142
    %p151 = scmp.eq.s32.totalorder %s18, 1
    %p152 = por %p150, %p151
    %p153 = scmp.ne.s32.totalorder %s142, %s143
    %p154 = scmp.eq.s32.totalorder %s18, 0
    %p155 = por %p153, %p154
    %p156 = scmp.ne.s32.totalorder %s142, %s143
    %p157 = scmp.eq.s32.totalorder %s19, 1
    %p158 = por %p156, %p157
    %p160 = scmp.ne.s32.totalorder %s143, %s159
    %p161 = scmp.eq.s32.totalorder %s19, 0
    %p162 = por %p160, %p161
    %s163 = ssub.s32 %s21, %s28
    %p164 = scmp.eq.s32.totalorder %s163, 0
    %s166 = sadd.s32 %s165, 1
    %s167 = scalar_select %p164, %s165, %s166
    %p170 = pneg %p164
    %p171 = scmp.eq.s32.totalorder %s13, 1
    %p172 = por %p170, %p171
    %p173 = scmp.ne.s32.totalorder %s165, %s168
    %p174 = scmp.eq.s32.totalorder %s13, 0
    %p175 = por %p173, %p174
    %p176 = scmp.ne.s32.totalorder %s165, %s168
    %p177 = scmp.eq.s32.totalorder %s18, 1
    %p178 = por %p176, %p177
    %p179 = scmp.ne.s32.totalorder %s168, %s169
    %p180 = scmp.eq.s32.totalorder %s18, 0
    %p181 = por %p179, %p180
    %p182 = scmp.ne.s32.totalorder %s168, %s169
    %p183 = scmp.eq.s32.totalorder %s19, 1
    %p184 = por %p182, %p183
    %p186 = scmp.ne.s32.totalorder %s169, %s185
    %p187 = scmp.eq.s32.totalorder %s19, 0
    %p188 = por %p186, %p187
    %s189 = ssub.s32 %s21, %s28
    %p190 = scmp.eq.s32.totalorder %s189, 0
    %s192 = sadd.s32 %s191, 1
    %s193 = scalar_select %p190, %s191, %s192
    %p196 = pneg %p190
    %p197 = scmp.eq.s32.totalorder %s13, 1
    %p198 = por %p196, %p197
    %p199 = scmp.ne.s32.totalorder %s191, %s194
    %p200 = scmp.eq.s32.totalorder %s13, 0
    %p201 = por %p199, %p200
    %p202 = scmp.ne.s32.totalorder %s191, %s194
    %p203 = scmp.eq.s32.totalorder %s18, 1
    %p204 = por %p202, %p203
    %p205 = scmp.ne.s32.totalorder %s194, %s195
    %p206 = scmp.eq.s32.totalorder %s18, 0
    %p207 = por %p205, %p206
    %p208 = scmp.ne.s32.totalorder %s194, %s195
    %p209 = scmp.eq.s32.totalorder %s19, 1
    %p210 = por %p208, %p209
    %p212 = scmp.ne.s32.totalorder %s195, %s211
    %p213 = scmp.eq.s32.totalorder %s19, 0
    %p214 = por %p212, %p213
    %s215 = ssub.s32 %s20, %s32
    %p216 = scmp.eq.s32.totalorder %s215, 0
    %s218 = sadd.s32 %s217, 1
    %s219 = scalar_select %p216, %s217, %s218
    %p222 = pneg %p216
    %p223 = scmp.eq.s32.totalorder %s13, 1
    %p224 = por %p222, %p223
    %p225 = scmp.ne.s32.totalorder %s217, %s220
    %p226 = scmp.eq.s32.totalorder %s13, 0
    %p227 = por %p225, %p226
    %p228 = scmp.ne.s32.totalorder %s217, %s220
    %p229 = scmp.eq.s32.totalorder %s18, 1
    %p230 = por %p228, %p229
    %p231 = scmp.ne.s32.totalorder %s220, %s221
    %p232 = scmp.eq.s32.totalorder %s18, 0
    %p233 = por %p231, %p232
    %p234 = scmp.ne.s32.totalorder %s220, %s221
    %p235 = scmp.eq.s32.totalorder %s19, 1
    %p236 = por %p234, %p235
    %p238 = scmp.ne.s32.totalorder %s221, %s237
    %p239 = scmp.eq.s32.totalorder %s19, 0
    %p240 = por %p238, %p239
    %p241 = scmp.le.s32.totalorder 1, %s13
    %p242 = scmp.lt.s32.totalorder %s13, 3
    %p243 = pnand %p241, %p242
    %p244 = pneg %p243
    // Predicated region
    $region9: #{pepbart_forward.2} parent=5 // pred_check
      _
    $region10: #{pepbart_forward.2} parent=5 // pred_check_branch
      %246 = sbr.rel (%p243) target = $region12
    $region11: #{pepbart_forward.2} parent=5 // pred_region
      %s247 = ssub.s32 %s13, 1
      // Predicated region
      $region13: #{pepbart_forward.2} parent=11 // pred_check
        %p248 = pneg %p51
      $region14: #{pepbart_forward.2} parent=11 // pred_check_branch
        %250 = sbr.rel (%p248) target = $region16
      $region15: #{pepbart_forward.2} parent=11 // pred_region
        %s251 = smul.u32 2, %s22
        %p252 = scmp.lt.s32.totalorder %s251, 1
        %s253 = scalar_select %p252, %s251, 1
        %s254 = smul.addr %s253, 8
        %s255 = scalar_lea.vmem %s0, %s254
        %s256 = smul.u32 2, %s22
      $region16: #{pepbart_forward.2} parent=11 // pred_fallthru
        _
      // Predicated region
      $region17: #{pepbart_forward.2} parent=11 // pred_check
        %p257 = pneg %p77
      $region18: #{pepbart_forward.2} parent=11 // pred_check_branch
        %259 = sbr.rel (%p257) target = $region20
      $region19: #{pepbart_forward.2} parent=11 // pred_region
        %s260 = smul.u32 2, %s22
        %p261 = scmp.lt.s32.totalorder %s260, 1
        %s262 = scalar_select %p261, %s260, 1
        %s263 = smul.addr %s262, 8
        %s264 = scalar_lea.vmem %s1, %s263
        %s265 = smul.u32 2, %s22
      $region20: #{pepbart_forward.2} parent=11 // pred_fallthru
        _
    $region12: #{pepbart_forward.2} parent=5 // pred_fallthru
      _
    %p266 = scmp.lt.s32.totalorder %s13, 2
    // Predicated region
    $region21: #{pepbart_forward.2} parent=5 // pred_check
      %p267 = pneg %p266
    $region22: #{pepbart_forward.2} parent=5 // pred_check_branch
      %269 = sbr.rel (%p267) target = $region24
    $region23: #{pepbart_forward.2} parent=5 // pred_region
      // Predicated region
      $region25: #{pepbart_forward.2} parent=23 // pred_check
        %p270 = pneg %p97
      $region26: #{pepbart_forward.2} parent=23 // pred_check_branch
        %272 = sbr.rel (%p270) target = $region28
      $region27: #{pepbart_forward.2} parent=23 // pred_region
        %p273 = scmp.lt.s32.totalorder %s21, 1
        %s274 = scalar_select %p273, %s21, 1
        %s275 = smul.addr %s274, 32
        %s276 = smul.addr %s275, 4
        %s277 = scalar_lea.vmem %s2, %s276
      $region28: #{pepbart_forward.2} parent=23 // pred_fallthru
        _
      // Predicated region
      $region29: #{pepbart_forward.2} parent=23 // pred_check
        %p278 = pneg %p123
      $region30: #{pepbart_forward.2} parent=23 // pred_check_branch
        %280 = sbr.rel (%p278) target = $region32
      $region31: #{pepbart_forward.2} parent=23 // pred_region
        %p281 = scmp.lt.s32.totalorder %s21, 1
        %s282 = scalar_select %p281, %s21, 1
        %s283 = smul.addr %s282, 4
        %s284 = smul.addr %s283, 4
        %s285 = scalar_lea.vmem %s3, %s284
      $region32: #{pepbart_forward.2} parent=23 // pred_fallthru
        _
      // Predicated region
      $region33: #{pepbart_forward.2} parent=23 // pred_check
        %p286 = pneg %p149
      $region34: #{pepbart_forward.2} parent=23 // pred_check_branch
        %288 = sbr.rel (%p286) target = $region36
      $region35: #{pepbart_forward.2} parent=23 // pred_region
        %p289 = scmp.lt.s32.totalorder %s21, 1
        %s290 = scalar_select %p289, %s21, 1
        %s291 = smul.addr %s290, 16
        %s292 = smul.addr %s291, 4
        %s293 = scalar_lea.vmem %s4, %s292
      $region36: #{pepbart_forward.2} parent=23 // pred_fallthru
        _
      // Predicated region
      $region37: #{pepbart_forward.2} parent=23 // pred_check
        %p294 = pneg %p175
      $region38: #{pepbart_forward.2} parent=23 // pred_check_branch
        %296 = sbr.rel (%p294) target = $region40
      $region39: #{pepbart_forward.2} parent=23 // pred_region
        %p297 = scmp.lt.s32.totalorder %s21, 1
        %s298 = scalar_select %p297, %s21, 1
        %s299 = smul.addr %s298, 2
        %s300 = smul.addr %s299, 8
        %s301 = scalar_lea.vmem %s5, %s300
      $region40: #{pepbart_forward.2} parent=23 // pred_fallthru
        _
      // Predicated region
      $region41: #{pepbart_forward.2} parent=23 // pred_check
        %p302 = pneg %p201
      $region42: #{pepbart_forward.2} parent=23 // pred_check_branch
        %304 = sbr.rel (%p302) target = $region44
      $region43: #{pepbart_forward.2} parent=23 // pred_region
        %p305 = scmp.lt.s32.totalorder %s21, 1
        %s306 = scalar_select %p305, %s21, 1
        %s307 = scalar_lea.vmem %s6, %s306
      $region44: #{pepbart_forward.2} parent=23 // pred_fallthru
        _
    $region24: #{pepbart_forward.2} parent=5 // pred_fallthru
      _
    %p308 = scmp.le.s32.totalorder 1, %s13
    %p309 = scmp.lt.s32.totalorder %s13, 3
    %p310 = pnand %p308, %p309
    %p311 = pneg %p310
    // Predicated region
    $region45: #{pepbart_forward.2} parent=5 // pred_check
      _
    $region46: #{pepbart_forward.2} parent=5 // pred_check_branch
      %313 = sbr.rel (%p310) target = $region48
    $region47: #{pepbart_forward.2} parent=5 // pred_region
      %s314 = ssub.s32 %s13, 1
      %s315 = smul.u32 2, %s22
      %p316 = scmp.lt.s32.totalorder %s315, 1
      %s317 = scalar_select %p316, %s315, 1
      %s318 = smul.addr %s317, 8
      %s319 = scalar_lea.vmem %s0, %s318
      %p320 = pneg %p51
      %p321 = pneg %p48
      %s322 = smul.u32 2, %s22
      %p323 = scmp.lt.s32.totalorder %s322, 1
      %s324 = scalar_select %p323, %s322, 1
      %s325 = smul.addr %s324, 8
      %s326 = scalar_lea.vmem %s1, %s325
      %p327 = pneg %p77
      %p328 = pneg %p74
      %p329 = scmp.lt.s32.totalorder %s23, 1
      %s330 = scalar_select %p329, %s23, 1
      %s331 = smul.addr %s330, 32
      %s332 = smul.addr %s331, 4
      %s333 = scalar_lea.vmem %s2, %s332
      %p334 = pneg %p103
      %p335 = pneg %p100
      %p336 = scmp.lt.s32.totalorder %s23, 1
      %s337 = scalar_select %p336, %s23, 1
      %s338 = smul.addr %s337, 4
      %s339 = smul.addr %s338, 4
      %s340 = scalar_lea.vmem %s3, %s339
      %p341 = pneg %p129
      %p342 = pneg %p126
      %p343 = scmp.lt.s32.totalorder %s23, 1
      %s344 = scalar_select %p343, %s23, 1
      %s345 = smul.addr %s344, 16
      %s346 = smul.addr %s345, 4
      %s347 = scalar_lea.vmem %s4, %s346
      %p348 = pneg %p155
      %p349 = pneg %p152
      %p350 = scmp.lt.s32.totalorder %s23, 1
      %s351 = scalar_select %p350, %s23, 1
      %s352 = smul.addr %s351, 2
      %s353 = smul.addr %s352, 8
      %s354 = scalar_lea.vmem %s5, %s353
      %p355 = pneg %p181
      %p356 = pneg %p178
      %p357 = scmp.lt.s32.totalorder %s23, 1
      %s358 = scalar_select %p357, %s23, 1
      %s359 = scalar_lea.vmem %s6, %s358
      %p360 = pneg %p207
      %p361 = pneg %p204
      %p362 = pneg %p233
      %p363 = pneg %p230
      %s364 = smul.u32 2, %s22
      %p365 = scmp.lt.s32.totalorder %s364, 1
      %s366 = scalar_select %p365, %s364, 1
      %s367 = smul.addr %s366, 8
      %s368 = scalar_lea.vmem %s7, %s367
      %s369 = smul.u32 2, %s22
      %p370 = scmp.lt.s32.totalorder %s369, 1
      %s371 = scalar_select %p370, %s369, 1
      %s372 = smul.addr %s371, 8
      %s373 = scalar_lea.vmem %s0, %s372
      %s374 = smul.u32 2, %s22
      %s375 = smul.u32 2, %s22
      %p376 = scmp.lt.s32.totalorder %s375, 1
      %s377 = scalar_select %p376, %s375, 1
      %s378 = smul.addr %s377, 8
      %s379 = scalar_lea.vmem %s1, %s378
      %s380 = smul.u32 2, %s22
      %p381 = scmp.lt.s32.totalorder %s23, 1
      %s382 = scalar_select %p381, %s23, 1
      %s383 = smul.addr %s382, 32
      %s384 = smul.addr %s383, 4
      %s385 = scalar_lea.vmem %s2, %s384
      %p386 = scmp.lt.s32.totalorder %s23, 1
      %s387 = scalar_select %p386, %s23, 1
      %s388 = smul.addr %s387, 4
      %s389 = smul.addr %s388, 4
      %s390 = scalar_lea.vmem %s3, %s389
      %p391 = scmp.lt.s32.totalorder %s23, 1
      %s392 = scalar_select %p391, %s23, 1
      %s393 = smul.addr %s392, 16
      %s394 = smul.addr %s393, 4
      %s395 = scalar_lea.vmem %s4, %s394
      %p396 = scmp.lt.s32.totalorder %s23, 1
      %s397 = scalar_select %p396, %s23, 1
      %s398 = smul.addr %s397, 2
      %s399 = smul.addr %s398, 8
      %s400 = scalar_lea.vmem %s5, %s399
      %p401 = scmp.lt.s32.totalorder %s23, 1
      %s402 = scalar_select %p401, %s23, 1
      %s403 = scalar_lea.vmem %s6, %s402
      %s404 = smul.u32 2, %s22
      %p405 = scmp.lt.s32.totalorder %s404, 1
      %s406 = scalar_select %p405, %s404, 1
      %s407 = smul.addr %s406, 8
      %s408 = scalar_lea.vmem %s7, %s407
      %s409 = smul.u32 2, %s22
      %p411 = scmp.eq.s32.totalorder %s23, 0
      // Predicated region
      $region49: #{pepbart_forward.2} parent=47 // pred_check
        %p412 = pneg %p411
      $region50: #{pepbart_forward.2} parent=47 // pred_check_branch
        %414 = sbr.rel (%p412) target = $region52
      $region51: #{pepbart_forward.2} parent=47 // pred_region
        %v415 = vld [vmem:[%s373] sm:$0xff]
        %v416 = vld [vmem:[%s373 + $0x8] sm:$0xff]
        %vm417 = vcmask 261120
        %418 = vst.msk [vmem:[#allocation2] sm:$0xff] %vm417, %v415
        %419 = vst.msk [vmem:[#allocation2 + $0x8] sm:$0xff] %vm417, %v416
        %v420 = vlaneseq
        %v421 = vshrl.u32 %v420, 7
        %v422 = vlaneseq
        %v423 = vand.u32 %v422, 127
        %vm424 = vcmp.gt.s32.totalorder %v423, %v421
        %v425 = vsel %vm424, -1e+30, 0.0
        %vm426 = vcmask 64512
        %427 = vst.msk [vmem:[#allocation3] sm:$0xff] %vm426, %v425
      $region52: #{pepbart_forward.2} parent=47 // pred_fallthru
        _
      %v428 = vld [vmem:[%s400] sm:$0xff]
      %v429 = vld [vmem:[%s400 + $0x8] sm:$0x7f]
      %v430 = vld [vmem:[#allocation2] sm:$0xff]
      %v431 = vld [vmem:[#allocation2 + $0x8] sm:$0xff]
      %v432 = vld [vmem:[%s379] sm:$0xff]
      %v433 = vld [vmem:[%s379 + $0x8] sm:$0xff]
      %vm434 = vcmask 261120
      %v435 = vsel %vm434, %v430, 0.0
      %436 = vadd.xlane.f32.xlu0 %v435
      %v437 = vpop.xlane.xlu0 %436
      %v438 = vsel %vm434, %v431, 0.0
      %439 = vadd.xlane.f32.xlu0 %v438
      %v440 = vpop.xlane.xlu0 %439
      %v441 = vrcp.pop 32.0
      %v442 = vmul.f32 %v437, %v441
      %v443 = vmul.f32 %v440, %v441
      %v444 = vsub.f32 %v430, %v442
      %v445 = vsub.f32 %v431, %v443
      %v446 = vmul.f32 %v444, %v444
      %v447 = vmul.f32 %v445, %v445
      %v448 = vsel %vm434, %v446, 0.0
      %449 = vadd.xlane.f32.xlu0 %v448
      %v450 = vpop.xlane.xlu0 %449
      %v451 = vsel %vm434, %v447, 0.0
      %452 = vadd.xlane.f32.xlu0 %v451
      %v453 = vpop.xlane.xlu0 %452
      %v454 = vmul.f32 %v450, %v441
      %v455 = vmul.f32 %v453, %v441
      %v456 = vadd.f32 %v454, 1e-05
      %v457 = vadd.f32 %v455, 1e-05
      %v458 = vrsqrt.pop %v456
      %v459 = vrsqrt.pop %v457
      %v460 = vmul.f32 %v444, %v458
      %v461 = vmul.f32 %v445, %v459
      %v462 = vlaneseq
      %v463 = vshrl.u32 %v462, 7
      %v464 = vsub.s32 0, %v463
      %v465 = vrot.slane %v428, %v464
      %v466 = vmul.f32 %v460, %v465
      %v467 = vmul.f32 %v461, %v465
      %v468 = vlaneseq
      %v469 = vshrl.u32 %v468, 7
      %v470 = vsub.s32 1, %v469
      %v471 = vrot.slane %v428, %v470
      %v472 = vadd.f32 %v466, %v471
      %v473 = vadd.f32 %v467, %v471
      %v474 = vld [vmem:[%s385] sm:$0xf]
      %v475 = vld [vmem:[%s385 + $0x4] sm:$0xf]
      %v476 = vld [vmem:[%s385 + $0x8] sm:$0xf]
      %v477 = vld [vmem:[%s385 + $0xc] sm:$0xf]
      %s478 = scalar_lea.vmem %s385, 16
      %v479 = vld [vmem:[%s478] sm:$0xf]
      %v480 = vld [vmem:[%s478 + $0x4] sm:$0xf]
      %v481 = vld [vmem:[%s478 + $0x8] sm:$0xf]
      %v482 = vld [vmem:[%s478 + $0xc] sm:$0xf]
      %s483 = scalar_lea.vmem %s385, 32
      %v484 = vld [vmem:[%s483] sm:$0xf]
      %v485 = vld [vmem:[%s483 + $0x4] sm:$0xf]
      %v486 = vld [vmem:[%s483 + $0x8] sm:$0xf]
      %v487 = vld [vmem:[%s483 + $0xc] sm:$0xf]
      %s488 = scalar_lea.vmem %s385, 48
      %v489 = vld [vmem:[%s488] sm:$0xf]
      %v490 = vld [vmem:[%s488 + $0x4] sm:$0xf]
      %v491 = vld [vmem:[%s488 + $0x8] sm:$0xf]
      %v492 = vld [vmem:[%s488 + $0xc] sm:$0xf]
      %v493 = vpack.c.bf16 %v473, %v472
      %v494 = vlaneseq
      %v495 = vshrl.u32 %v494, 7
      %v496 = vsub.s32 2, %v495
      %v497 = vrot.slane %v428, %v496
      %v502 = vunpack.c.l.b16 %v474
      %v503 = vunpack.c.l.b16 %v475
      %v504 = vunpack.c.l.b16 %v476
      %v505 = vunpack.c.l.b16 %v477
      %v506 = vpack.c.b16 %v503, %v502
      %v507 = vpack.c.b16 %v505, %v504
      %v511 = vsel %vm434, %v493, 0
      %513 = vmatprep.subr.bf16.mxu0 0
      %514 = vmatpush1.bf16.msra.mxu0 %v506
      %515 = vmatprep.subr.bf16.mxu0 0
      %516 = vmatpush1.bf16.msra.mxu0 %v507
      %517 = vmatprep.subr.bf16.mxu0 0
      %518 = vmatpush1.bf16.msra.mxu0 0
      %519 = vmatprep.subr.bf16.mxu0 0
      %520 = vmatpush1.bf16.msra.mxu0 0
      %521 = vmatprep.subr.bf16.mxu0 0
      %522 = vmatpush1.bf16.msra.mxu0 0
      %523 = vmatprep.subr.bf16.mxu0 0
      %524 = vmatpush1.bf16.msra.mxu0 0
      %525 = vmatprep.subr.bf16.mxu0 0
      %526 = vmatpush1.bf16.msra.mxu0 0
      %527 = vmatprep.subr.bf16.mxu0 0
      %528 = vmatpush1.bf16.msra.mxu0 0
      %529 = vmatprep.subr.bf16.mxu0 0
      %530 = vmatpush1.bf16.msra.mxu0 0
      %531 = vmatprep.subr.bf16.mxu0 0
      %532 = vmatpush1.bf16.msra.mxu0 0
      %533 = vmatprep.subr.bf16.mxu0 0
      %534 = vmatpush1.bf16.msra.mxu0 0
      %535 = vmatprep.subr.bf16.mxu0 0
      %536 = vmatpush1.bf16.msra.mxu0 0
      %537 = vmatprep.subr.bf16.mxu0 0
      %538 = vmatpush1.bf16.msra.mxu0 0
      %539 = vmatprep.subr.bf16.mxu0 0
      %540 = vmatpush1.bf16.msra.mxu0 0
      %541 = vmatprep.subr.bf16.mxu0 0
      %542 = vmatpush1.bf16.msra.mxu0 0
      %543 = vmatprep.subr.bf16.mxu0 0
      %544 = vmatpush1.bf16.msra.mxu0 0
      %545 = vmatprep.mubr.bf16.mxu0 0
      %546 = vmatmul.mubr.bf16.gmra.mrb[0].mxu0 %v511
      %v547 = vpop.f32.mrb[0].mxu0
      %v548 = vadd.f32 %v497, %v547
      %v549 = vpop.f32.mrb[0].mxu0
      %v550 = vpop.f32.mrb[0].mxu0
      %v551 = vadd.f32 %v497, %v550
      %v552 = vpop.f32.mrb[0].mxu0
      %553 = vdwg.mxu0
      %v554 = vlaneseq
      %v555 = vshrl.u32 %v554, 7
      %v556 = vsub.s32 3, %v555
      %v557 = vrot.slane %v428, %v556
      %v562 = vunpack.c.l.b16 %v479
      %v563 = vunpack.c.l.b16 %v480
      %v564 = vunpack.c.l.b16 %v481
      %v565 = vunpack.c.l.b16 %v482
      %v566 = vpack.c.b16 %v563, %v562
      %v567 = vpack.c.b16 %v565, %v564
      %570 = vmatprep.subr.bf16.mxu0 0
      %571 = vmatpush1.bf16.msra.mxu0 %v566
      %572 = vmatprep.subr.bf16.mxu0 0
      %573 = vmatpush1.bf16.msra.mxu0 %v567
      %574 = vmatprep.subr.bf16.mxu0 0
      %575 = vmatpush1.bf16.msra.mxu0 0
      %576 = vmatprep.subr.bf16.mxu0 0
      %577 = vmatpush1.bf16.msra.mxu0 0
      %578 = vmatprep.subr.bf16.mxu0 0
      %579 = vmatpush1.bf16.msra.mxu0 0
      %580 = vmatprep.subr.bf16.mxu0 0
      %581 = vmatpush1.bf16.msra.mxu0 0
      %582 = vmatprep.subr.bf16.mxu0 0
      %583 = vmatpush1.bf16.msra.mxu0 0
      %584 = vmatprep.subr.bf16.mxu0 0
      %585 = vmatpush1.bf16.msra.mxu0 0
      %586 = vmatprep.subr.bf16.mxu0 0
      %587 = vmatpush1.bf16.msra.mxu0 0
      %588 = vmatprep.subr.bf16.mxu0 0
      %589 = vmatpush1.bf16.msra.mxu0 0
      %590 = vmatprep.subr.bf16.mxu0 0
      %591 = vmatpush1.bf16.msra.mxu0 0
      %592 = vmatprep.subr.bf16.mxu0 0
      %593 = vmatpush1.bf16.msra.mxu0 0
      %594 = vmatprep.subr.bf16.mxu0 0
      %595 = vmatpush1.bf16.msra.mxu0 0
      %596 = vmatprep.subr.bf16.mxu0 0
      %597 = vmatpush1.bf16.msra.mxu0 0
      %598 = vmatprep.subr.bf16.mxu0 0
      %599 = vmatpush1.bf16.msra.mxu0 0
      %600 = vmatprep.subr.bf16.mxu0 0
      %601 = vmatpush1.bf16.msra.mxu0 0
      %602 = vmatprep.mubr.bf16.mxu0 0
      %603 = vmatmul.mubr.bf16.gmra.mrb[0].mxu0 %v511
      %v604 = vpop.f32.mrb[0].mxu0
      %v605 = vadd.f32 %v557, %v604
      %v606 = vpop.f32.mrb[0].mxu0
      %v607 = vpop.f32.mrb[0].mxu0
      %v608 = vadd.f32 %v557, %v607
      %v609 = vpop.f32.mrb[0].mxu0
      %610 = vdwg.mxu0
      %v611 = vlaneseq
      %v612 = vshrl.u32 %v611, 7
      %v613 = vsub.s32 4, %v612
      %v614 = vrot.slane %v428, %v613
      %v619 = vunpack.c.l.b16 %v484
      %v620 = vunpack.c.l.b16 %v485
      %v621 = vunpack.c.l.b16 %v486
      %v622 = vunpack.c.l.b16 %v487
      %v623 = vpack.c.b16 %v620, %v619
      %v624 = vpack.c.b16 %v622, %v621
      %627 = vmatprep.subr.bf16.mxu0 0
      %628 = vmatpush1.bf16.msra.mxu0 %v623
      %629 = vmatprep.subr.bf16.mxu0 0
      %630 = vmatpush1.bf16.msra.mxu0 %v624
      %631 = vmatprep.subr.bf16.mxu0 0
      %632 = vmatpush1.bf16.msra.mxu0 0
      %633 = vmatprep.subr.bf16.mxu0 0
      %634 = vmatpush1.bf16.msra.mxu0 0
      %635 = vmatprep.subr.bf16.mxu0 0
      %636 = vmatpush1.bf16.msra.mxu0 0
      %637 = vmatprep.subr.bf16.mxu0 0
      %638 = vmatpush1.bf16.msra.mxu0 0
      %639 = vmatprep.subr.bf16.mxu0 0
      %640 = vmatpush1.bf16.msra.mxu0 0
      %641 = vmatprep.subr.bf16.mxu0 0
      %642 = vmatpush1.bf16.msra.mxu0 0
      %643 = vmatprep.subr.bf16.mxu0 0
      %644 = vmatpush1.bf16.msra.mxu0 0
      %645 = vmatprep.subr.bf16.mxu0 0
      %646 = vmatpush1.bf16.msra.mxu0 0
      %647 = vmatprep.subr.bf16.mxu0 0
      %648 = vmatpush1.bf16.msra.mxu0 0
      %649 = vmatprep.subr.bf16.mxu0 0
      %650 = vmatpush1.bf16.msra.mxu0 0
      %651 = vmatprep.subr.bf16.mxu0 0
      %652 = vmatpush1.bf16.msra.mxu0 0
      %653 = vmatprep.subr.bf16.mxu0 0
      %654 = vmatpush1.bf16.msra.mxu0 0
      %655 = vmatprep.subr.bf16.mxu0 0
      %656 = vmatpush1.bf16.msra.mxu0 0
      %657 = vmatprep.subr.bf16.mxu0 0
      %658 = vmatpush1.bf16.msra.mxu0 0
      %659 = vmatprep.mubr.bf16.mxu0 0
      %660 = vmatmul.mubr.bf16.gmra.mrb[0].mxu0 %v511
      %v661 = vpop.f32.mrb[0].mxu0
      %v662 = vadd.f32 %v614, %v661
      %v663 = vpop.f32.mrb[0].mxu0
      %v664 = vpop.f32.mrb[0].mxu0
      %v665 = vadd.f32 %v614, %v664
      %v666 = vpop.f32.mrb[0].mxu0
      %667 = vdwg.mxu0
      %v668 = vmul.f32 %v548, 0.25
      %v669 = vmul.f32 %v551, 0.25
      %671 = vrot.lane.b32.xlu0 %v668, 112
      %v672 = vpop.permute.xlu0 %671
      %v674 = vcombine.high %v668, 0.0
      %v676 = vunpack.c.l.s4 1983009808
      %v677 = vunpack.c.0.s8 %v676
      %v678 = vlaneseq
      %v679 = vshrl.u32 %v678, 7
      %v680 = vsub.s32 %v677, %v679
      %v681 = vrot.slane %v668, %v680
      %v683 = vunpack.c.l.s4 1983009808
      %v684 = vunpack.c.0.s8 %v683
      %v685 = vlaneseq
      %v686 = vshrl.u32 %v685, 7
      %v687 = vsub.s32 %v684, %v686
      %v688 = vrot.slane %v674, %v687
      %v689 = vcombine.high %v672, 0.0
      %v691 = vunpack.c.l.s4 1983009808
      %v692 = vunpack.c.0.s8 %v691
      %v693 = vlaneseq
      %v694 = vshrl.u32 %v693, 7
      %v695 = vsub.s32 %v692, %v694
      %v696 = vrot.slane %v672, %v695
      %v698 = vunpack.c.l.s4 1983009808
      %v699 = vunpack.c.0.s8 %v698
      %v700 = vlaneseq
      %v701 = vshrl.u32 %v700, 7
      %v702 = vsub.s32 %v699, %v701
      %v703 = vrot.slane %v689, %v702
      %v704 = vcombine.low %v681, %v696
      %v705 = vcombine.high %v681, %v696
      %v707 = vunpack.c.l.s4 1934713408
      %v708 = vunpack.c.0.s8 %v707
      %v709 = vlaneseq
      %v710 = vshrl.u32 %v709, 7
      %v711 = vsub.s32 %v708, %v710
      %v712 = vrot.slane %v704, %v711
      %v714 = vunpack.c.l.s4 1934713408
      %v715 = vunpack.c.0.s8 %v714
      %v716 = vlaneseq
      %v717 = vshrl.u32 %v716, 7
      %v718 = vsub.s32 %v715, %v717
      %v719 = vrot.slane %v705, %v718
      %v720 = vcombine.low %v688, %v703
      %v721 = vcombine.high %v688, %v703
      %v723 = vunpack.c.l.s4 1934713408
      %v724 = vunpack.c.0.s8 %v723
      %v725 = vlaneseq
      %v726 = vshrl.u32 %v725, 7
      %v727 = vsub.s32 %v724, %v726
      %v728 = vrot.slane %v720, %v727
      %v730 = vunpack.c.l.s4 1934713408
      %v731 = vunpack.c.0.s8 %v730
      %v732 = vlaneseq
      %v733 = vshrl.u32 %v732, 7
      %v734 = vsub.s32 %v731, %v733
      %v735 = vrot.slane %v721, %v734
      %v736 = vcombine.high %v712, 0.0
      %v737 = vcombine.high %v719, 0.0
      %v738 = vcombine.high %v728, 0.0
      %v739 = vcombine.high %v735, 0.0
      %v740 = vcombine.low %v712, %v719
      %v742 = vunpack.c.l.s4 1983009808
      %v743 = vunpack.c.0.s8 %v742
      %v744 = vlaneseq
      %v745 = vshrl.u32 %v744, 7
      %v746 = vsub.s32 %v743, %v745
      %v747 = vrot.slane %v740, %v746
      %v748 = vcombine.low %v736, %v737
      %v750 = vunpack.c.l.s4 1983009808
      %v751 = vunpack.c.0.s8 %v750
      %v752 = vlaneseq
      %v753 = vshrl.u32 %v752, 7
      %v754 = vsub.s32 %v751, %v753
      %v755 = vrot.slane %v748, %v754
      %v756 = vcombine.low %v728, %v735
      %v758 = vunpack.c.l.s4 1983009808
      %v759 = vunpack.c.0.s8 %v758
      %v760 = vlaneseq
      %v761 = vshrl.u32 %v760, 7
      %v762 = vsub.s32 %v759, %v761
      %v763 = vrot.slane %v756, %v762
      %v764 = vcombine.low %v738, %v739
      %v766 = vunpack.c.l.s4 1983009808
      %v767 = vunpack.c.0.s8 %v766
      %v768 = vlaneseq
      %v769 = vshrl.u32 %v768, 7
      %v770 = vsub.s32 %v767, %v769
      %v771 = vrot.slane %v764, %v770
      %v772 = vcombine.low %v747, %v755
      %v774 = vunpack.c.l.s4 1934713408
      %v775 = vunpack.c.0.s8 %v774
      %v776 = vlaneseq
      %v777 = vshrl.u32 %v776, 7
      %v778 = vsub.s32 %v775, %v777
      %v779 = vrot.slane %v772, %v778
      %v780 = vcombine.low %v763, %v771
      %v782 = vunpack.c.l.s4 1934713408
      %v783 = vunpack.c.0.s8 %v782
      %v784 = vlaneseq
      %v785 = vshrl.u32 %v784, 7
      %v786 = vsub.s32 %v783, %v785
      %v787 = vrot.slane %v780, %v786
      %v788 = vcombine.low %v779, %v787
      %v789 = vcombine.high %v779, %v787
      %791 = vrot.lane.b32.xlu0 %v605, 112
      %v792 = vpop.permute.xlu0 %791
      %v794 = vcombine.high %v605, 0.0
      %v796 = vunpack.c.l.s4 1983009808
      %v797 = vunpack.c.0.s8 %v796
      %v798 = vlaneseq
      %v799 = vshrl.u32 %v798, 7
      %v800 = vsub.s32 %v797, %v799
      %v801 = vrot.slane %v605, %v800
      %v803 = vunpack.c.l.s4 1983009808
      %v804 = vunpack.c.0.s8 %v803
      %v805 = vlaneseq
      %v806 = vshrl.u32 %v805, 7
      %v807 = vsub.s32 %v804, %v806
      %v808 = vrot.slane %v794, %v807
      %v809 = vcombine.high %v792, 0.0
      %v811 = vunpack.c.l.s4 1983009808
      %v812 = vunpack.c.0.s8 %v811
      %v813 = vlaneseq
      %v814 = vshrl.u32 %v813, 7
      %v815 = vsub.s32 %v812, %v814
      %v816 = vrot.slane %v792, %v815
      %v818 = vunpack.c.l.s4 1983009808
      %v819 = vunpack.c.0.s8 %v818
      %v820 = vlaneseq
      %v821 = vshrl.u32 %v820, 7
      %v822 = vsub.s32 %v819, %v821
      %v823 = vrot.slane %v809, %v822
      %v824 = vcombine.low %v801, %v816
      %v825 = vcombine.high %v801, %v816
      %v827 = vunpack.c.l.s4 1934713408
      %v828 = vunpack.c.0.s8 %v827
      %v829 = vlaneseq
      %v830 = vshrl.u32 %v829, 7
      %v831 = vsub.s32 %v828, %v830
      %v832 = vrot.slane %v824, %v831
      %v834 = vunpack.c.l.s4 1934713408
      %v835 = vunpack.c.0.s8 %v834
      %v836 = vlaneseq
      %v837 = vshrl.u32 %v836, 7
      %v838 = vsub.s32 %v835, %v837
      %v839 = vrot.slane %v825, %v838
      %v840 = vcombine.low %v808, %v823
      %v841 = vcombine.high %v808, %v823
      %v843 = vunpack.c.l.s4 1934713408
      %v844 = vunpack.c.0.s8 %v843
      %v845 = vlaneseq
      %v846 = vshrl.u32 %v845, 7
      %v847 = vsub.s32 %v844, %v846
      %v848 = vrot.slane %v840, %v847
      %v850 = vunpack.c.l.s4 1934713408
      %v851 = vunpack.c.0.s8 %v850
      %v852 = vlaneseq
      %v853 = vshrl.u32 %v852, 7
      %v854 = vsub.s32 %v851, %v853
      %v855 = vrot.slane %v841, %v854
      %v856 = vcombine.high %v832, 0.0
      %v857 = vcombine.high %v839, 0.0
      %v858 = vcombine.high %v848, 0.0
      %v859 = vcombine.high %v855, 0.0
      %v860 = vcombine.low %v832, %v839
      %v862 = vunpack.c.l.s4 1983009808
      %v863 = vunpack.c.0.s8 %v862
      %v864 = vlaneseq
      %v865 = vshrl.u32 %v864, 7
      %v866 = vsub.s32 %v863, %v865
      %v867 = vrot.slane %v860, %v866
      %v868 = vcombine.low %v856, %v857
      %v870 = vunpack.c.l.s4 1983009808
      %v871 = vunpack.c.0.s8 %v870
      %v872 = vlaneseq
      %v873 = vshrl.u32 %v872, 7
      %v874 = vsub.s32 %v871, %v873
      %v875 = vrot.slane %v868, %v874
      %v876 = vcombine.low %v848, %v855
      %v878 = vunpack.c.l.s4 1983009808
      %v879 = vunpack.c.0.s8 %v878
      %v880 = vlaneseq
      %v881 = vshrl.u32 %v880, 7
      %v882 = vsub.s32 %v879, %v881
      %v883 = vrot.slane %v876, %v882
      %v884 = vcombine.low %v858, %v859
      %v886 = vunpack.c.l.s4 1983009808
      %v887 = vunpack.c.0.s8 %v886
      %v888 = vlaneseq
      %v889 = vshrl.u32 %v888, 7
      %v890 = vsub.s32 %v887, %v889
      %v891 = vrot.slane %v884, %v890
      %v892 = vcombine.low %v867, %v875
      %v894 = vunpack.c.l.s4 1934713408
      %v895 = vunpack.c.0.s8 %v894
      %v896 = vlaneseq
      %v897 = vshrl.u32 %v896, 7
      %v898 = vsub.s32 %v895, %v897
      %v899 = vrot.slane %v892, %v898
      %v900 = vcombine.low %v883, %v891
      %v902 = vunpack.c.l.s4 1934713408
      %v903 = vunpack.c.0.s8 %v902
      %v904 = vlaneseq
      %v905 = vshrl.u32 %v904, 7
      %v906 = vsub.s32 %v903, %v905
      %v907 = vrot.slane %v900, %v906
      %v908 = vcombine.low %v899, %v907
      %v909 = vcombine.high %v899, %v907
      %911 = vrot.lane.b32.xlu0 %v662, 112
      %v912 = vpop.permute.xlu0 %911
      %v914 = vcombine.high %v662, 0.0
      %v916 = vunpack.c.l.s4 1983009808
      %v917 = vunpack.c.0.s8 %v916
      %v918 = vlaneseq
      %v919 = vshrl.u32 %v918, 7
      %v920 = vsub.s32 %v917, %v919
      %v921 = vrot.slane %v662, %v920
      %v923 = vunpack.c.l.s4 1983009808
      %v924 = vunpack.c.0.s8 %v923
      %v925 = vlaneseq
      %v926 = vshrl.u32 %v925, 7
      %v927 = vsub.s32 %v924, %v926
      %v928 = vrot.slane %v914, %v927
      %v929 = vcombine.high %v912, 0.0
      %v931 = vunpack.c.l.s4 1983009808
      %v932 = vunpack.c.0.s8 %v931
      %v933 = vlaneseq
      %v934 = vshrl.u32 %v933, 7
      %v935 = vsub.s32 %v932, %v934
      %v936 = vrot.slane %v912, %v935
      %v938 = vunpack.c.l.s4 1983009808
      %v939 = vunpack.c.0.s8 %v938
      %v940 = vlaneseq
      %v941 = vshrl.u32 %v940, 7
      %v942 = vsub.s32 %v939, %v941
      %v943 = vrot.slane %v929, %v942
      %v944 = vcombine.low %v921, %v936
      %v945 = vcombine.high %v921, %v936
      %v947 = vunpack.c.l.s4 1934713408
      %v948 = vunpack.c.0.s8 %v947
      %v949 = vlaneseq
      %v950 = vshrl.u32 %v949, 7
      %v951 = vsub.s32 %v948, %v950
      %v952 = vrot.slane %v944, %v951
      %v954 = vunpack.c.l.s4 1934713408
      %v955 = vunpack.c.0.s8 %v954
      %v956 = vlaneseq
      %v957 = vshrl.u32 %v956, 7
      %v958 = vsub.s32 %v955, %v957
      %v959 = vrot.slane %v945, %v958
      %v960 = vcombine.low %v928, %v943
      %v961 = vcombine.high %v928, %v943
      %v963 = vunpack.c.l.s4 1934713408
      %v964 = vunpack.c.0.s8 %v963
      %v965 = vlaneseq
      %v966 = vshrl.u32 %v965, 7
      %v967 = vsub.s32 %v964, %v966
      %v968 = vrot.slane %v960, %v967
      %v970 = vunpack.c.l.s4 1934713408
      %v971 = vunpack.c.0.s8 %v970
      %v972 = vlaneseq
      %v973 = vshrl.u32 %v972, 7
      %v974 = vsub.s32 %v971, %v973
      %v975 = vrot.slane %v961, %v974
      %v976 = vcombine.high %v952, 0.0
      %v977 = vcombine.high %v959, 0.0
      %v978 = vcombine.high %v968, 0.0
      %v979 = vcombine.high %v975, 0.0
      %v980 = vcombine.low %v952, %v959
      %v982 = vunpack.c.l.s4 1983009808
      %v983 = vunpack.c.0.s8 %v982
      %v984 = vlaneseq
      %v985 = vshrl.u32 %v984, 7
      %v986 = vsub.s32 %v983, %v985
      %v987 = vrot.slane %v980, %v986
      %v988 = vcombine.low %v976, %v977
      %v990 = vunpack.c.l.s4 1983009808
      %v991 = vunpack.c.0.s8 %v990
      %v992 = vlaneseq
      %v993 = vshrl.u32 %v992, 7
      %v994 = vsub.s32 %v991, %v993
      %v995 = vrot.slane %v988, %v994
      %v996 = vcombine.low %v968, %v975
      %v998 = vunpack.c.l.s4 1983009808
      %v999 = vunpack.c.0.s8 %v998
      %v1000 = vlaneseq
      %v1001 = vshrl.u32 %v1000, 7
      %v1002 = vsub.s32 %v999, %v1001
      %v1003 = vrot.slane %v996, %v1002
      %v1004 = vcombine.low %v978, %v979
      %v1006 = vunpack.c.l.s4 1983009808
      %v1007 = vunpack.c.0.s8 %v1006
      %v1008 = vlaneseq
      %v1009 = vshrl.u32 %v1008, 7
      %v1010 = vsub.s32 %v1007, %v1009
      %v1011 = vrot.slane %v1004, %v1010
      %v1012 = vcombine.low %v987, %v995
      %v1014 = vunpack.c.l.s4 1934713408
      %v1015 = vunpack.c.0.s8 %v1014
      %v1016 = vlaneseq
      %v1017 = vshrl.u32 %v1016, 7
      %v1018 = vsub.s32 %v1015, %v1017
      %v1019 = vrot.slane %v1012, %v1018
      %v1020 = vcombine.low %v1003, %v1011
      %v1022 = vunpack.c.l.s4 1934713408
      %v1023 = vunpack.c.0.s8 %v1022
      %v1024 = vlaneseq
      %v1025 = vshrl.u32 %v1024, 7
      %v1026 = vsub.s32 %v1023, %v1025
      %v1027 = vrot.slane %v1020, %v1026
      %v1028 = vcombine.low %v1019, %v1027
      %v1029 = vcombine.high %v1019, %v1027
      %v1030 = vpack.c.bf16 %v788, %v788
      %v1031 = vpack.c.bf16 %v789, %v789
      %v1032 = vpack.c.bf16 %v908, %v908
      %v1033 = vpack.c.bf16 %v909, %v909
      %v1034 = vld [vmem:[#allocation3] sm:$0xff]
      %vm1035 = vcmask 130048
      %v1037 = vsel %vm1035, %v1030, 0
      %v1040 = vsel %vm1035, %v1032, 0
      %1042 = vmatprep.subr.bf16.mxu0 0
      %1043 = vmatpush1.bf16.xpose.msra.mxu0 %v1040
      %1044 = vmatprep.subr.bf16.mxu0 0
      %1045 = vmatpush1.bf16.xpose.msra.mxu0 0
      %1046 = vmatprep.subr.bf16.mxu0 0
      %1047 = vmatpush1.bf16.xpose.msra.mxu0 0
      %1048 = vmatprep.subr.bf16.mxu0 0
      %1049 = vmatpush1.bf16.xpose.msra.mxu0 0
      %1050 = vmatprep.subr.bf16.mxu0 0
      %1051 = vmatpush1.bf16.xpose.msra.mxu0 0
      %1052 = vmatprep.subr.bf16.mxu0 0
      %1053 = vmatpush1.bf16.xpose.msra.mxu0 0
      %1054 = vmatprep.subr.bf16.mxu0 0
      %1055 = vmatpush1.bf16.xpose.msra.mxu0 0
      %1056 = vmatprep.subr.bf16.mxu0 0
      %1057 = vmatpush1.bf16.xpose.msra.mxu0 0
      %1058 = vmatprep.subr.bf16.mxu0 0
      %1059 = vmatpush1.bf16.xpose.msra.mxu0 0
      %1060 = vmatprep.subr.bf16.mxu0 0
      %1061 = vmatpush1.bf16.xpose.msra.mxu0 0
      %1062 = vmatprep.subr.bf16.mxu0 0
      %1063 = vmatpush1.bf16.xpose.msra.mxu0 0
      %1064 = vmatprep.subr.bf16.mxu0 0
      %1065 = vmatpush1.bf16.xpose.msra.mxu0 0
      %1066 = vmatprep.subr.bf16.mxu0 0
      %1067 = vmatpush1.bf16.xpose.msra.mxu0 0
      %1068 = vmatprep.subr.bf16.mxu0 0
      %1069 = vmatpush1.bf16.xpose.msra.mxu0 0
      %1070 = vmatprep.subr.bf16.mxu0 0
      %1071 = vmatpush1.bf16.xpose.msra.mxu0 0
      %1072 = vmatprep.subr.bf16.mxu0 0
      %1073 = vmatpush1.bf16.xpose.msra.mxu0 0
      %1074 = vmatprep.mubr.bf16.mxu0 0
      %1075 = vmatmul.mubr.bf16.gmra.mrb[0].mxu0 %v1037
      %v1076 = vpop.f32.mrb[0].mxu0
      %v1077 = vadd.f32 %v1034, %v1076
      %v1078 = vpop.f32.mrb[0].mxu0
      %v1079 = vpop.f32.mrb[0].mxu0
      %v1080 = vpop.f32.mrb[0].mxu0
      %1081 = vdwg.mxu0
      %v1083 = vsel %vm1035, %v1031, 0
      %v1086 = vsel %vm1035, %v1033, 0
      %1088 = vmatprep.subr.bf16.mxu0 0
      %1089 = vmatpush1.bf16.xpose.msra.mxu0 %v1086
      %1090 = vmatprep.subr.bf16.mxu0 0
      %1091 = vmatpush1.bf16.xpose.msra.mxu0 0
      %1092 = vmatprep.subr.bf16.mxu0 0
      %1093 = vmatpush1.bf16.xpose.msra.mxu0 0
      %1094 = vmatprep.subr.bf16.mxu0 0
      %1095 = vmatpush1.bf16.xpose.msra.mxu0 0
      %1096 = vmatprep.subr.bf16.mxu0 0
      %1097 = vmatpush1.bf16.xpose.msra.mxu0 0
      %1098 = vmatprep.subr.bf16.mxu0 0
      %1099 = vmatpush1.bf16.xpose.msra.mxu0 0
      %1100 = vmatprep.subr.bf16.mxu0 0
      %1101 = vmatpush1.bf16.xpose.msra.mxu0 0
      %1102 = vmatprep.subr.bf16.mxu0 0
      %1103 = vmatpush1.bf16.xpose.msra.mxu0 0
      %1104 = vmatprep.subr.bf16.mxu0 0
      %1105 = vmatpush1.bf16.xpose.msra.mxu0 0
      %1106 = vmatprep.subr.bf16.mxu0 0
      %1107 = vmatpush1.bf16.xpose.msra.mxu0 0
      %1108 = vmatprep.subr.bf16.mxu0 0
      %1109 = vmatpush1.bf16.xpose.msra.mxu0 0
      %1110 = vmatprep.subr.bf16.mxu0 0
      %1111 = vmatpush1.bf16.xpose.msra.mxu0 0
      %1112 = vmatprep.subr.bf16.mxu0 0
      %1113 = vmatpush1.bf16.xpose.msra.mxu0 0
      %1114 = vmatprep.subr.bf16.mxu0 0
      %1115 = vmatpush1.bf16.xpose.msra.mxu0 0
      %1116 = vmatprep.subr.bf16.mxu0 0
      %1117 = vmatpush1.bf16.xpose.msra.mxu0 0
      %1118 = vmatprep.subr.bf16.mxu0 0
      %1119 = vmatpush1.bf16.xpose.msra.mxu0 0
      %1120 = vmatprep.mubr.bf16.mxu0 0
      %1121 = vmatmul.mubr.bf16.gmra.mrb[0].mxu0 %v1083
      %v1122 = vpop.f32.mrb[0].mxu0
      %v1123 = vadd.f32 %v1034, %v1122
      %v1124 = vpop.f32.mrb[0].mxu0
      %v1125 = vpop.f32.mrb[0].mxu0
      %v1126 = vpop.f32.mrb[0].mxu0
      %1127 = vdwg.mxu0
      %vm1128 = vcmask 64512
      %v1129 = vsel %vm1128, %v1077, -inf
      %1130 = vmax.xlane.f32.xlu0 %v1129
      %v1131 = vpop.xlane.xlu0 %1130
      %v1132 = vsel %vm1128, %v1123, -inf
      %1133 = vmax.xlane.f32.xlu0 %v1132
      %v1134 = vpop.xlane.xlu0 %1133
      %v1135 = vsub.f32 %v1077, %v1131
      %v1136 = vsub.f32 %v1123, %v1134
      %v1137 = vmul.f32 %v1135, 1.442695
      %v1138 = vpow.pop %v1137
      %v1139 = vmul.f32 %v1136, 1.442695
      %v1140 = vpow.pop %v1139
      %v1141 = vsel %vm1128, %v1138, 0.0
      %1142 = vadd.xlane.f32.xlu0 %v1141
      %v1143 = vpop.xlane.xlu0 %1142
      %v1144 = vsel %vm1128, %v1140, 0.0
      %1145 = vadd.xlane.f32.xlu0 %v1144
      %v1146 = vpop.xlane.xlu0 %1145
      %v1147 = vrcp.pop %v1143
      %v1148 = vmul.f32 %v1138, %v1147
      %v1149 = vrcp.pop %v1146
      %v1150 = vmul.f32 %v1140, %v1149
      %v1151 = vpack.c.bf16 %v1148, %v1148
      %v1152 = vpack.c.bf16 %v1150, %v1150
      %v1153 = vpack.c.bf16 %v1028, %v1028
      %v1154 = vpack.c.bf16 %v1029, %v1029
      %v1156 = vsel %vm1128, %v1151, 0
      %vm1158 = vcmask 1043456
      %v1160 = vsel %vm1158, %v1153, 0
      %1162 = vmatprep.subr.bf16.mxu0 0
      %1163 = vmatpush1.bf16.msra.mxu0 %v1160
      %1164 = vmatprep.subr.bf16.mxu0 0
      %1165 = vmatpush1.bf16.msra.mxu0 0
      %1166 = vmatprep.subr.bf16.mxu0 0
      %1167 = vmatpush1.bf16.msra.mxu0 0
      %1168 = vmatprep.subr.bf16.mxu0 0
      %1169 = vmatpush1.bf16.msra.mxu0 0
      %1170 = vmatprep.subr.bf16.mxu0 0
      %1171 = vmatpush1.bf16.msra.mxu0 0
      %1172 = vmatprep.subr.bf16.mxu0 0
      %1173 = vmatpush1.bf16.msra.mxu0 0
      %1174 = vmatprep.subr.bf16.mxu0 0
      %1175 = vmatpush1.bf16.msra.mxu0 0
      %1176 = vmatprep.subr.bf16.mxu0 0
      %1177 = vmatpush1.bf16.msra.mxu0 0
      %1178 = vmatprep.subr.bf16.mxu0 0
      %1179 = vmatpush1.bf16.msra.mxu0 0
      %1180 = vmatprep.subr.bf16.mxu0 0
      %1181 = vmatpush1.bf16.msra.mxu0 0
      %1182 = vmatprep.subr.bf16.mxu0 0
      %1183 = vmatpush1.bf16.msra.mxu0 0
      %1184 = vmatprep.subr.bf16.mxu0 0
      %1185 = vmatpush1.bf16.msra.mxu0 0
      %1186 = vmatprep.subr.bf16.mxu0 0
      %1187 = vmatpush1.bf16.msra.mxu0 0
      %1188 = vmatprep.subr.bf16.mxu0 0
      %1189 = vmatpush1.bf16.msra.mxu0 0
      %1190 = vmatprep.subr.bf16.mxu0 0
      %1191 = vmatpush1.bf16.msra.mxu0 0
      %1192 = vmatprep.subr.bf16.mxu0 0
      %1193 = vmatpush1.bf16.msra.mxu0 0
      %1194 = vmatprep.mubr.bf16.mxu0 0
      %1195 = vmatmul.mubr.bf16.gmra.mrb[0].mxu0 %v1156
      %v1196 = vpop.f32.mrb[0].mxu0
      %v1197 = vadd.f32 0.0, %v1196
      %v1198 = vpop.f32.mrb[0].mxu0
      %v1199 = vpop.f32.mrb[0].mxu0
      %v1200 = vpop.f32.mrb[0].mxu0
      %1201 = vdwg.mxu0
      %v1203 = vsel %vm1128, %v1152, 0
      %v1206 = vsel %vm1158, %v1154, 0
      %1208 = vmatprep.subr.bf16.mxu0 0
      %1209 = vmatpush1.bf16.msra.mxu0 %v1206
      %1210 = vmatprep.subr.bf16.mxu0 0
      %1211 = vmatpush1.bf16.msra.mxu0 0
      %1212 = vmatprep.subr.bf16.mxu0 0
      %1213 = vmatpush1.bf16.msra.mxu0 0
      %1214 = vmatprep.subr.bf16.mxu0 0
      %1215 = vmatpush1.bf16.msra.mxu0 0
      %1216 = vmatprep.subr.bf16.mxu0 0
      %1217 = vmatpush1.bf16.msra.mxu0 0
      %1218 = vmatprep.subr.bf16.mxu0 0
      %1219 = vmatpush1.bf16.msra.mxu0 0
      %1220 = vmatprep.subr.bf16.mxu0 0
      %1221 = vmatpush1.bf16.msra.mxu0 0
      %1222 = vmatprep.subr.bf16.mxu0 0
      %1223 = vmatpush1.bf16.msra.mxu0 0
      %1224 = vmatprep.subr.bf16.mxu0 0
      %1225 = vmatpush1.bf16.msra.mxu0 0
      %1226 = vmatprep.subr.bf16.mxu0 0
      %1227 = vmatpush1.bf16.msra.mxu0 0
      %1228 = vmatprep.subr.bf16.mxu0 0
      %1229 = vmatpush1.bf16.msra.mxu0 0
      %1230 = vmatprep.subr.bf16.mxu0 0
      %1231 = vmatpush1.bf16.msra.mxu0 0
      %1232 = vmatprep.subr.bf16.mxu0 0
      %1233 = vmatpush1.bf16.msra.mxu0 0
      %1234 = vmatprep.subr.bf16.mxu0 0
      %1235 = vmatpush1.bf16.msra.mxu0 0
      %1236 = vmatprep.subr.bf16.mxu0 0
      %1237 = vmatpush1.bf16.msra.mxu0 0
      %1238 = vmatprep.subr.bf16.mxu0 0
      %1239 = vmatpush1.bf16.msra.mxu0 0
      %1240 = vmatprep.mubr.bf16.mxu0 0
      %1241 = vmatmul.mubr.bf16.gmra.mrb[0].mxu0 %v1203
      %v1242 = vpop.f32.mrb[0].mxu0
      %v1243 = vadd.f32 0.0, %v1242
      %v1244 = vpop.f32.mrb[0].mxu0
      %v1245 = vpop.f32.mrb[0].mxu0
      %v1246 = vpop.f32.mrb[0].mxu0
      %1247 = vdwg.mxu0
      %v1248 = vcombine.high %v1197, 0.0
      %v1250 = vunpack.c.l.s4 1983009808
      %v1251 = vunpack.c.0.s8 %v1250
      %v1252 = vlaneseq
      %v1253 = vshrl.u32 %v1252, 7
      %v1254 = vsub.s32 %v1251, %v1253
      %v1255 = vrot.slane %v1197, %v1254
      %v1257 = vunpack.c.l.s4 1983009808
      %v1258 = vunpack.c.0.s8 %v1257
      %v1259 = vlaneseq
      %v1260 = vshrl.u32 %v1259, 7
      %v1261 = vsub.s32 %v1258, %v1260
      %v1262 = vrot.slane %v1248, %v1261
      %v1263 = vcombine.high %v1243, 0.0
      %v1265 = vunpack.c.l.s4 1983009808
      %v1266 = vunpack.c.0.s8 %v1265
      %v1267 = vlaneseq
      %v1268 = vshrl.u32 %v1267, 7
      %v1269 = vsub.s32 %v1266, %v1268
      %v1270 = vrot.slane %v1243, %v1269
      %v1272 = vunpack.c.l.s4 1983009808
      %v1273 = vunpack.c.0.s8 %v1272
      %v1274 = vlaneseq
      %v1275 = vshrl.u32 %v1274, 7
      %v1276 = vsub.s32 %v1273, %v1275
      %v1277 = vrot.slane %v1263, %v1276
      %v1278 = vcombine.low %v1255, %v1270
      %v1279 = vcombine.high %v1255, %v1270
      %v1281 = vunpack.c.l.s4 1934713408
      %v1282 = vunpack.c.0.s8 %v1281
      %v1283 = vlaneseq
      %v1284 = vshrl.u32 %v1283, 7
      %v1285 = vsub.s32 %v1282, %v1284
      %v1286 = vrot.slane %v1278, %v1285
      %v1288 = vunpack.c.l.s4 1934713408
      %v1289 = vunpack.c.0.s8 %v1288
      %v1290 = vlaneseq
      %v1291 = vshrl.u32 %v1290, 7
      %v1292 = vsub.s32 %v1289, %v1291
      %v1293 = vrot.slane %v1279, %v1292
      %v1294 = vcombine.low %v1262, %v1277
      %v1295 = vcombine.high %v1262, %v1277
      %v1297 = vunpack.c.l.s4 1934713408
      %v1298 = vunpack.c.0.s8 %v1297
      %v1299 = vlaneseq
      %v1300 = vshrl.u32 %v1299, 7
      %v1301 = vsub.s32 %v1298, %v1300
      %v1302 = vrot.slane %v1294, %v1301
      %v1304 = vunpack.c.l.s4 1934713408
      %v1305 = vunpack.c.0.s8 %v1304
      %v1306 = vlaneseq
      %v1307 = vshrl.u32 %v1306, 7
      %v1308 = vsub.s32 %v1305, %v1307
      %v1309 = vrot.slane %v1295, %v1308
      %v1310 = vcombine.high %v1286, 0.0
      %v1311 = vcombine.high %v1293, 0.0
      %v1312 = vcombine.high %v1302, 0.0
      %v1313 = vcombine.high %v1309, 0.0
      %v1314 = vcombine.low %v1286, %v1293
      %v1316 = vunpack.c.l.s4 1983009808
      %v1317 = vunpack.c.0.s8 %v1316
      %v1318 = vlaneseq
      %v1319 = vshrl.u32 %v1318, 7
      %v1320 = vsub.s32 %v1317, %v1319
      %v1321 = vrot.slane %v1314, %v1320
      %v1322 = vcombine.low %v1310, %v1311
      %v1324 = vunpack.c.l.s4 1983009808
      %v1325 = vunpack.c.0.s8 %v1324
      %v1326 = vlaneseq
      %v1327 = vshrl.u32 %v1326, 7
      %v1328 = vsub.s32 %v1325, %v1327
      %v1329 = vrot.slane %v1322, %v1328
      %v1330 = vcombine.low %v1302, %v1309
      %v1332 = vunpack.c.l.s4 1983009808
      %v1333 = vunpack.c.0.s8 %v1332
      %v1334 = vlaneseq
      %v1335 = vshrl.u32 %v1334, 7
      %v1336 = vsub.s32 %v1333, %v1335
      %v1337 = vrot.slane %v1330, %v1336
      %v1338 = vcombine.low %v1312, %v1313
      %v1340 = vunpack.c.l.s4 1983009808
      %v1341 = vunpack.c.0.s8 %v1340
      %v1342 = vlaneseq
      %v1343 = vshrl.u32 %v1342, 7
      %v1344 = vsub.s32 %v1341, %v1343
      %v1345 = vrot.slane %v1338, %v1344
      %v1346 = vcombine.low %v1321, %v1329
      %v1348 = vunpack.c.l.s4 1934713408
      %v1349 = vunpack.c.0.s8 %v1348
      %v1350 = vlaneseq
      %v1351 = vshrl.u32 %v1350, 7
      %v1352 = vsub.s32 %v1349, %v1351
      %v1353 = vrot.slane %v1346, %v1352
      %v1354 = vcombine.low %v1337, %v1345
      %v1356 = vunpack.c.l.s4 1934713408
      %v1357 = vunpack.c.0.s8 %v1356
      %v1358 = vlaneseq
      %v1359 = vshrl.u32 %v1358, 7
      %v1360 = vsub.s32 %v1357, %v1359
      %v1361 = vrot.slane %v1354, %v1360
      %v1362 = vcombine.low %v1353, %v1361
      %v1363 = vcombine.high %v1353, %v1361
      %1365 = vrot.lane.b32.xlu0 %v1363, 16
      %v1366 = vpop.permute.xlu0 %1365
      %v1368 = vsel %vm1035, %v1362, %v1366
      %v1369 = vpack.c.bf16 %v1368, %v1368
      %vm1370 = vcmask 257024
      %1371 = vst.msk [vmem:[#allocation4] sm:$0xf] %vm1370, %v1369
      %1373 = vrot.lane.b32.xlu0 %v669, 112
      %v1374 = vpop.permute.xlu0 %1373
      %v1376 = vcombine.high %v669, 0.0
      %v1378 = vunpack.c.l.s4 1983009808
      %v1379 = vunpack.c.0.s8 %v1378
      %v1380 = vlaneseq
      %v1381 = vshrl.u32 %v1380, 7
      %v1382 = vsub.s32 %v1379, %v1381
      %v1383 = vrot.slane %v669, %v1382
      %v1385 = vunpack.c.l.s4 1983009808
      %v1386 = vunpack.c.0.s8 %v1385
      %v1387 = vlaneseq
      %v1388 = vshrl.u32 %v1387, 7
      %v1389 = vsub.s32 %v1386, %v1388
      %v1390 = vrot.slane %v1376, %v1389
      %v1391 = vcombine.high %v1374, 0.0
      %v1393 = vunpack.c.l.s4 1983009808
      %v1394 = vunpack.c.0.s8 %v1393
      %v1395 = vlaneseq
      %v1396 = vshrl.u32 %v1395, 7
      %v1397 = vsub.s32 %v1394, %v1396
      %v1398 = vrot.slane %v1374, %v1397
      %v1400 = vunpack.c.l.s4 1983009808
      %v1401 = vunpack.c.0.s8 %v1400
      %v1402 = vlaneseq
      %v1403 = vshrl.u32 %v1402, 7
      %v1404 = vsub.s32 %v1401, %v1403
      %v1405 = vrot.slane %v1391, %v1404
      %v1406 = vcombine.low %v1383, %v1398
      %v1407 = vcombine.high %v1383, %v1398
      %v1409 = vunpack.c.l.s4 1934713408
      %v1410 = vunpack.c.0.s8 %v1409
      %v1411 = vlaneseq
      %v1412 = vshrl.u32 %v1411, 7
      %v1413 = vsub.s32 %v1410, %v1412
      %v1414 = vrot.slane %v1406, %v1413
      %v1416 = vunpack.c.l.s4 1934713408
      %v1417 = vunpack.c.0.s8 %v1416
      %v1418 = vlaneseq
      %v1419 = vshrl.u32 %v1418, 7
      %v1420 = vsub.s32 %v1417, %v1419
      %v1421 = vrot.slane %v1407, %v1420
      %v1422 = vcombine.low %v1390, %v1405
      %v1423 = vcombine.high %v1390, %v1405
      %v1425 = vunpack.c.l.s4 1934713408
      %v1426 = vunpack.c.0.s8 %v1425
      %v1427 = vlaneseq
      %v1428 = vshrl.u32 %v1427, 7
      %v1429 = vsub.s32 %v1426, %v1428
      %v1430 = vrot.slane %v1422, %v1429
      %v1432 = vunpack.c.l.s4 1934713408
      %v1433 = vunpack.c.0.s8 %v1432
      %v1434 = vlaneseq
      %v1435 = vshrl.u32 %v1434, 7
      %v1436 = vsub.s32 %v1433, %v1435
      %v1437 = vrot.slane %v1423, %v1436
      %v1438 = vcombine.high %v1414, 0.0
      %v1439 = vcombine.high %v1421, 0.0
      %v1440 = vcombine.high %v1430, 0.0
      %v1441 = vcombine.high %v1437, 0.0
      %v1442 = vcombine.low %v1414, %v1421
      %v1444 = vunpack.c.l.s4 1983009808
      %v1445 = vunpack.c.0.s8 %v1444
      %v1446 = vlaneseq
      %v1447 = vshrl.u32 %v1446, 7
      %v1448 = vsub.s32 %v1445, %v1447
      %v1449 = vrot.slane %v1442, %v1448
      %v1450 = vcombine.low %v1438, %v1439
      %v1452 = vunpack.c.l.s4 1983009808
      %v1453 = vunpack.c.0.s8 %v1452
      %v1454 = vlaneseq
      %v1455 = vshrl.u32 %v1454, 7
      %v1456 = vsub.s32 %v1453, %v1455
      %v1457 = vrot.slane %v1450, %v1456
      %v1458 = vcombine.low %v1430, %v1437
      %v1460 = vunpack.c.l.s4 1983009808
      %v1461 = vunpack.c.0.s8 %v1460
      %v1462 = vlaneseq
      %v1463 = vshrl.u32 %v1462, 7
      %v1464 = vsub.s32 %v1461, %v1463
      %v1465 = vrot.slane %v1458, %v1464
      %v1466 = vcombine.low %v1440, %v1441
      %v1468 = vunpack.c.l.s4 1983009808
      %v1469 = vunpack.c.0.s8 %v1468
      %v1470 = vlaneseq
      %v1471 = vshrl.u32 %v1470, 7
      %v1472 = vsub.s32 %v1469, %v1471
      %v1473 = vrot.slane %v1466, %v1472
      %v1474 = vcombine.low %v1449, %v1457
      %v1476 = vunpack.c.l.s4 1934713408
      %v1477 = vunpack.c.0.s8 %v1476
      %v1478 = vlaneseq
      %v1479 = vshrl.u32 %v1478, 7
      %v1480 = vsub.s32 %v1477, %v1479
      %v1481 = vrot.slane %v1474, %v1480
      %v1482 = vcombine.low %v1465, %v1473
      %v1484 = vunpack.c.l.s4 1934713408
      %v1485 = vunpack.c.0.s8 %v1484
      %v1486 = vlaneseq
      %v1487 = vshrl.u32 %v1486, 7
      %v1488 = vsub.s32 %v1485, %v1487
      %v1489 = vrot.slane %v1482, %v1488
      %v1490 = vcombine.low %v1481, %v1489
      %v1491 = vcombine.high %v1481, %v1489
      %1493 = vrot.lane.b32.xlu0 %v608, 112
      %v1494 = vpop.permute.xlu0 %1493
      %v1496 = vcombine.high %v608, 0.0
      %v1498 = vunpack.c.l.s4 1983009808
      %v1499 = vunpack.c.0.s8 %v1498
      %v1500 = vlaneseq
      %v1501 = vshrl.u32 %v1500, 7
      %v1502 = vsub.s32 %v1499, %v1501
      %v1503 = vrot.slane %v608, %v1502
      %v1505 = vunpack.c.l.s4 1983009808
      %v1506 = vunpack.c.0.s8 %v1505
      %v1507 = vlaneseq
      %v1508 = vshrl.u32 %v1507, 7
      %v1509 = vsub.s32 %v1506, %v1508
      %v1510 = vrot.slane %v1496, %v1509
      %v1511 = vcombine.high %v1494, 0.0
      %v1513 = vunpack.c.l.s4 1983009808
      %v1514 = vunpack.c.0.s8 %v1513
      %v1515 = vlaneseq
      %v1516 = vshrl.u32 %v1515, 7
      %v1517 = vsub.s32 %v1514, %v1516
      %v1518 = vrot.slane %v1494, %v1517
      %v1520 = vunpack.c.l.s4 1983009808
      %v1521 = vunpack.c.0.s8 %v1520
      %v1522 = vlaneseq
      %v1523 = vshrl.u32 %v1522, 7
      %v1524 = vsub.s32 %v1521, %v1523
      %v1525 = vrot.slane %v1511, %v1524
      %v1526 = vcombine.low %v1503, %v1518
      %v1527 = vcombine.high %v1503, %v1518
      %v1529 = vunpack.c.l.s4 1934713408
      %v1530 = vunpack.c.0.s8 %v1529
      %v1531 = vlaneseq
      %v1532 = vshrl.u32 %v1531, 7
      %v1533 = vsub.s32 %v1530, %v1532
      %v1534 = vrot.slane %v1526, %v1533
      %v1536 = vunpack.c.l.s4 1934713408
      %v1537 = vunpack.c.0.s8 %v1536
      %v1538 = vlaneseq
      %v1539 = vshrl.u32 %v1538, 7
      %v1540 = vsub.s32 %v1537, %v1539
      %v1541 = vrot.slane %v1527, %v1540
      %v1542 = vcombine.low %v1510, %v1525
      %v1543 = vcombine.high %v1510, %v1525
      %v1545 = vunpack.c.l.s4 1934713408
      %v1546 = vunpack.c.0.s8 %v1545
      %v1547 = vlaneseq
      %v1548 = vshrl.u32 %v1547, 7
      %v1549 = vsub.s32 %v1546, %v1548
      %v1550 = vrot.slane %v1542, %v1549
      %v1552 = vunpack.c.l.s4 1934713408
      %v1553 = vunpack.c.0.s8 %v1552
      %v1554 = vlaneseq
      %v1555 = vshrl.u32 %v1554, 7
      %v1556 = vsub.s32 %v1553, %v1555
      %v1557 = vrot.slane %v1543, %v1556
      %v1558 = vcombine.high %v1534, 0.0
      %v1559 = vcombine.high %v1541, 0.0
      %v1560 = vcombine.high %v1550, 0.0
      %v1561 = vcombine.high %v1557, 0.0
      %v1562 = vcombine.low %v1534, %v1541
      %v1564 = vunpack.c.l.s4 1983009808
      %v1565 = vunpack.c.0.s8 %v1564
      %v1566 = vlaneseq
      %v1567 = vshrl.u32 %v1566, 7
      %v1568 = vsub.s32 %v1565, %v1567
      %v1569 = vrot.slane %v1562, %v1568
      %v1570 = vcombine.low %v1558, %v1559
      %v1572 = vunpack.c.l.s4 1983009808
      %v1573 = vunpack.c.0.s8 %v1572
      %v1574 = vlaneseq
      %v1575 = vshrl.u32 %v1574, 7
      %v1576 = vsub.s32 %v1573, %v1575
      %v1577 = vrot.slane %v1570, %v1576
      %v1578 = vcombine.low %v1550, %v1557
      %v1580 = vunpack.c.l.s4 1983009808
      %v1581 = vunpack.c.0.s8 %v1580
      %v1582 = vlaneseq
      %v1583 = vshrl.u32 %v1582, 7
      %v1584 = vsub.s32 %v1581, %v1583
      %v1585 = vrot.slane %v1578, %v1584
      %v1586 = vcombine.low %v1560, %v1561
      %v1588 = vunpack.c.l.s4 1983009808
      %v1589 = vunpack.c.0.s8 %v1588
      %v1590 = vlaneseq
      %v1591 = vshrl.u32 %v1590, 7
      %v1592 = vsub.s32 %v1589, %v1591
      %v1593 = vrot.slane %v1586, %v1592
      %v1594 = vcombine.low %v1569, %v1577
      %v1596 = vunpack.c.l.s4 1934713408
      %v1597 = vunpack.c.0.s8 %v1596
      %v1598 = vlaneseq
      %v1599 = vshrl.u32 %v1598, 7
      %v1600 = vsub.s32 %v1597, %v1599
      %v1601 = vrot.slane %v1594, %v1600
      %v1602 = vcombine.low %v1585, %v1593
      %v1604 = vunpack.c.l.s4 1934713408
      %v1605 = vunpack.c.0.s8 %v1604
      %v1606 = vlaneseq
      %v1607 = vshrl.u32 %v1606, 7
      %v1608 = vsub.s32 %v1605, %v1607
      %v1609 = vrot.slane %v1602, %v1608
      %v1610 = vcombine.low %v1601, %v1609
      %v1611 = vcombine.high %v1601, %v1609
      %1613 = vrot.lane.b32.xlu0 %v665, 112
      %v1614 = vpop.permute.xlu0 %1613
      %v1616 = vcombine.high %v665, 0.0
      %v1618 = vunpack.c.l.s4 1983009808
      %v1619 = vunpack.c.0.s8 %v1618
      %v1620 = vlaneseq
      %v1621 = vshrl.u32 %v1620, 7
      %v1622 = vsub.s32 %v1619, %v1621
      %v1623 = vrot.slane %v665, %v1622
      %v1625 = vunpack.c.l.s4 1983009808
      %v1626 = vunpack.c.0.s8 %v1625
      %v1627 = vlaneseq
      %v1628 = vshrl.u32 %v1627, 7
      %v1629 = vsub.s32 %v1626, %v1628
      %v1630 = vrot.slane %v1616, %v1629
      %v1631 = vcombine.high %v1614, 0.0
      %v1633 = vunpack.c.l.s4 1983009808
      %v1634 = vunpack.c.0.s8 %v1633
      %v1635 = vlaneseq
      %v1636 = vshrl.u32 %v1635, 7
      %v1637 = vsub.s32 %v1634, %v1636
      %v1638 = vrot.slane %v1614, %v1637
      %v1640 = vunpack.c.l.s4 1983009808
      %v1641 = vunpack.c.0.s8 %v1640
      %v1642 = vlaneseq
      %v1643 = vshrl.u32 %v1642, 7
      %v1644 = vsub.s32 %v1641, %v1643
      %v1645 = vrot.slane %v1631, %v1644
      %v1646 = vcombine.low %v1623, %v1638
      %v1647 = vcombine.high %v1623, %v1638
      %v1649 = vunpack.c.l.s4 1934713408
      %v1650 = vunpack.c.0.s8 %v1649
      %v1651 = vlaneseq
      %v1652 = vshrl.u32 %v1651, 7
      %v1653 = vsub.s32 %v1650, %v1652
      %v1654 = vrot.slane %v1646, %v1653
      %v1656 = vunpack.c.l.s4 1934713408
      %v1657 = vunpack.c.0.s8 %v1656
      %v1658 = vlaneseq
      %v1659 = vshrl.u32 %v1658, 7
      %v1660 = vsub.s32 %v1657, %v1659
      %v1661 = vrot.slane %v1647, %v1660
      %v1662 = vcombine.low %v1630, %v1645
      %v1663 = vcombine.high %v1630, %v1645
      %v1665 = vunpack.c.l.s4 1934713408
      %v1666 = vunpack.c.0.s8 %v1665
      %v1667 = vlaneseq
      %v1668 = vshrl.u32 %v1667, 7
      %v1669 = vsub.s32 %v1666, %v1668
      %v1670 = vrot.slane %v1662, %v1669
      %v1672 = vunpack.c.l.s4 1934713408
      %v1673 = vunpack.c.0.s8 %v1672
      %v1674 = vlaneseq
      %v1675 = vshrl.u32 %v1674, 7
      %v1676 = vsub.s32 %v1673, %v1675
      %v1677 = vrot.slane %v1663, %v1676
      %v1678 = vcombine.high %v1654, 0.0
      %v1679 = vcombine.high %v1661, 0.0
      %v1680 = vcombine.high %v1670, 0.0
      %v1681 = vcombine.high %v1677, 0.0
      %v1682 = vcombine.low %v1654, %v1661
      %v1684 = vunpack.c.l.s4 1983009808
      %v1685 = vunpack.c.0.s8 %v1684
      %v1686 = vlaneseq
      %v1687 = vshrl.u32 %v1686, 7
      %v1688 = vsub.s32 %v1685, %v1687
      %v1689 = vrot.slane %v1682, %v1688
      %v1690 = vcombine.low %v1678, %v1679
      %v1692 = vunpack.c.l.s4 1983009808
      %v1693 = vunpack.c.0.s8 %v1692
      %v1694 = vlaneseq
      %v1695 = vshrl.u32 %v1694, 7
      %v1696 = vsub.s32 %v1693, %v1695
      %v1697 = vrot.slane %v1690, %v1696
      %v1698 = vcombine.low %v1670, %v1677
      %v1700 = vunpack.c.l.s4 1983009808
      %v1701 = vunpack.c.0.s8 %v1700
      %v1702 = vlaneseq
      %v1703 = vshrl.u32 %v1702, 7
      %v1704 = vsub.s32 %v1701, %v1703
      %v1705 = vrot.slane %v1698, %v1704
      %v1706 = vcombine.low %v1680, %v1681
      %v1708 = vunpack.c.l.s4 1983009808
      %v1709 = vunpack.c.0.s8 %v1708
      %v1710 = vlaneseq
      %v1711 = vshrl.u32 %v1710, 7
      %v1712 = vsub.s32 %v1709, %v1711
      %v1713 = vrot.slane %v1706, %v1712
      %v1714 = vcombine.low %v1689, %v1697
      %v1716 = vunpack.c.l.s4 1934713408
      %v1717 = vunpack.c.0.s8 %v1716
      %v1718 = vlaneseq
      %v1719 = vshrl.u32 %v1718, 7
      %v1720 = vsub.s32 %v1717, %v1719
      %v1721 = vrot.slane %v1714, %v1720
      %v1722 = vcombine.low %v1705, %v1713
      %v1724 = vunpack.c.l.s4 1934713408
      %v1725 = vunpack.c.0.s8 %v1724
      %v1726 = vlaneseq
      %v1727 = vshrl.u32 %v1726, 7
      %v1728 = vsub.s32 %v1725, %v1727
      %v1729 = vrot.slane %v1722, %v1728
      %v1730 = vcombine.low %v1721, %v1729
      %v1731 = vcombine.high %v1721, %v1729
      %v1732 = vpack.c.bf16 %v1490, %v1490
      %v1733 = vpack.c.bf16 %v1491, %v1491
      %v1734 = vpack.c.bf16 %v1610, %v1610
      %v1735 = vpack.c.bf16 %v1611, %v1611
      %v1736 = vld [vmem:[#allocation3] sm:$0xff]
      %v1738 = vsel %vm1035, %v1732, 0
      %v1741 = vsel %vm1035, %v1734, 0
      %1743 = vmatprep.subr.bf16.mxu0 0
      %1744 = vmatpush1.bf16.xpose.msra.mxu0 %v1741
      %1745 = vmatprep.subr.bf16.mxu0 0
      %1746 = vmatpush1.bf16.xpose.msra.mxu0 0
      %1747 = vmatprep.subr.bf16.mxu0 0
      %1748 = vmatpush1.bf16.xpose.msra.mxu0 0
      %1749 = vmatprep.subr.bf16.mxu0 0
      %1750 = vmatpush1.bf16.xpose.msra.mxu0 0
      %1751 = vmatprep.subr.bf16.mxu0 0
      %1752 = vmatpush1.bf16.xpose.msra.mxu0 0
      %1753 = vmatprep.subr.bf16.mxu0 0
      %1754 = vmatpush1.bf16.xpose.msra.mxu0 0
      %1755 = vmatprep.subr.bf16.mxu0 0
      %1756 = vmatpush1.bf16.xpose.msra.mxu0 0
      %1757 = vmatprep.subr.bf16.mxu0 0
      %1758 = vmatpush1.bf16.xpose.msra.mxu0 0
      %1759 = vmatprep.subr.bf16.mxu0 0
      %1760 = vmatpush1.bf16.xpose.msra.mxu0 0
      %1761 = vmatprep.subr.bf16.mxu0 0
      %1762 = vmatpush1.bf16.xpose.msra.mxu0 0
      %1763 = vmatprep.subr.bf16.mxu0 0
      %1764 = vmatpush1.bf16.xpose.msra.mxu0 0
      %1765 = vmatprep.subr.bf16.mxu0 0
      %1766 = vmatpush1.bf16.xpose.msra.mxu0 0
      %1767 = vmatprep.subr.bf16.mxu0 0
      %1768 = vmatpush1.bf16.xpose.msra.mxu0 0
      %1769 = vmatprep.subr.bf16.mxu0 0
      %1770 = vmatpush1.bf16.xpose.msra.mxu0 0
      %1771 = vmatprep.subr.bf16.mxu0 0
      %1772 = vmatpush1.bf16.xpose.msra.mxu0 0
      %1773 = vmatprep.subr.bf16.mxu0 0
      %1774 = vmatpush1.bf16.xpose.msra.mxu0 0
      %1775 = vmatprep.mubr.bf16.mxu0 0
      %1776 = vmatmul.mubr.bf16.gmra.mrb[0].mxu0 %v1738
      %v1777 = vpop.f32.mrb[0].mxu0
      %v1778 = vadd.f32 %v1736, %v1777
      %v1779 = vpop.f32.mrb[0].mxu0
      %v1780 = vpop.f32.mrb[0].mxu0
      %v1781 = vpop.f32.mrb[0].mxu0
      %1782 = vdwg.mxu0
      %v1784 = vsel %vm1035, %v1733, 0
      %v1787 = vsel %vm1035, %v1735, 0
      %1789 = vmatprep.subr.bf16.mxu0 0
      %1790 = vmatpush1.bf16.xpose.msra.mxu0 %v1787
      %1791 = vmatprep.subr.bf16.mxu0 0
      %1792 = vmatpush1.bf16.xpose.msra.mxu0 0
      %1793 = vmatprep.subr.bf16.mxu0 0
      %1794 = vmatpush1.bf16.xpose.msra.mxu0 0
      %1795 = vmatprep.subr.bf16.mxu0 0
      %1796 = vmatpush1.bf16.xpose.msra.mxu0 0
      %1797 = vmatprep.subr.bf16.mxu0 0
      %1798 = vmatpush1.bf16.xpose.msra.mxu0 0
      %1799 = vmatprep.subr.bf16.mxu0 0
      %1800 = vmatpush1.bf16.xpose.msra.mxu0 0
      %1801 = vmatprep.subr.bf16.mxu0 0
      %1802 = vmatpush1.bf16.xpose.msra.mxu0 0
      %1803 = vmatprep.subr.bf16.mxu0 0
      %1804 = vmatpush1.bf16.xpose.msra.mxu0 0
      %1805 = vmatprep.subr.bf16.mxu0 0
      %1806 = vmatpush1.bf16.xpose.msra.mxu0 0
      %1807 = vmatprep.subr.bf16.mxu0 0
      %1808 = vmatpush1.bf16.xpose.msra.mxu0 0
      %1809 = vmatprep.subr.bf16.mxu0 0
      %1810 = vmatpush1.bf16.xpose.msra.mxu0 0
      %1811 = vmatprep.subr.bf16.mxu0 0
      %1812 = vmatpush1.bf16.xpose.msra.mxu0 0
      %1813 = vmatprep.subr.bf16.mxu0 0
      %1814 = vmatpush1.bf16.xpose.msra.mxu0 0
      %1815 = vmatprep.subr.bf16.mxu0 0
      %1816 = vmatpush1.bf16.xpose.msra.mxu0 0
      %1817 = vmatprep.subr.bf16.mxu0 0
      %1818 = vmatpush1.bf16.xpose.msra.mxu0 0
      %1819 = vmatprep.subr.bf16.mxu0 0
      %1820 = vmatpush1.bf16.xpose.msra.mxu0 0
      %1821 = vmatprep.mubr.bf16.mxu0 0
      %1822 = vmatmul.mubr.bf16.gmra.mrb[0].mxu0 %v1784
      %v1823 = vpop.f32.mrb[0].mxu0
      %v1824 = vadd.f32 %v1736, %v1823
      %v1825 = vpop.f32.mrb[0].mxu0
      %v1826 = vpop.f32.mrb[0].mxu0
      %v1827 = vpop.f32.mrb[0].mxu0
      %1828 = vdwg.mxu0
      %v1829 = vsel %vm1128, %v1778, -inf
      %1830 = vmax.xlane.f32.xlu0 %v1829
      %v1831 = vpop.xlane.xlu0 %1830
      %v1832 = vsel %vm1128, %v1824, -inf
      %1833 = vmax.xlane.f32.xlu0 %v1832
      %v1834 = vpop.xlane.xlu0 %1833
      %v1835 = vsub.f32 %v1778, %v1831
      %v1836 = vsub.f32 %v1824, %v1834
      %v1837 = vmul.f32 %v1835, 1.442695
      %v1838 = vpow.pop %v1837
      %v1839 = vmul.f32 %v1836, 1.442695
      %v1840 = vpow.pop %v1839
      %v1841 = vsel %vm1128, %v1838, 0.0
      %1842 = vadd.xlane.f32.xlu0 %v1841
      %v1843 = vpop.xlane.xlu0 %1842
      %v1844 = vsel %vm1128, %v1840, 0.0
      %1845 = vadd.xlane.f32.xlu0 %v1844
      %v1846 = vpop.xlane.xlu0 %1845
      %v1847 = vrcp.pop %v1843
      %v1848 = vmul.f32 %v1838, %v1847
      %v1849 = vrcp.pop %v1846
      %v1850 = vmul.f32 %v1840, %v1849
      %v1851 = vpack.c.bf16 %v1848, %v1848
      %v1852 = vpack.c.bf16 %v1850, %v1850
      %v1853 = vpack.c.bf16 %v1730, %v1730
      %v1854 = vpack.c.bf16 %v1731, %v1731
      %v1856 = vsel %vm1128, %v1851, 0
      %v1859 = vsel %vm1158, %v1853, 0
      %1861 = vmatprep.subr.bf16.mxu0 0
      %1862 = vmatpush1.bf16.msra.mxu0 %v1859
      %1863 = vmatprep.subr.bf16.mxu0 0
      %1864 = vmatpush1.bf16.msra.mxu0 0
      %1865 = vmatprep.subr.bf16.mxu0 0
      %1866 = vmatpush1.bf16.msra.mxu0 0
      %1867 = vmatprep.subr.bf16.mxu0 0
      %1868 = vmatpush1.bf16.msra.mxu0 0
      %1869 = vmatprep.subr.bf16.mxu0 0
      %1870 = vmatpush1.bf16.msra.mxu0 0
      %1871 = vmatprep.subr.bf16.mxu0 0
      %1872 = vmatpush1.bf16.msra.mxu0 0
      %1873 = vmatprep.subr.bf16.mxu0 0
      %1874 = vmatpush1.bf16.msra.mxu0 0
      %1875 = vmatprep.subr.bf16.mxu0 0
      %1876 = vmatpush1.bf16.msra.mxu0 0
      %1877 = vmatprep.subr.bf16.mxu0 0
      %1878 = vmatpush1.bf16.msra.mxu0 0
      %1879 = vmatprep.subr.bf16.mxu0 0
      %1880 = vmatpush1.bf16.msra.mxu0 0
      %1881 = vmatprep.subr.bf16.mxu0 0
      %1882 = vmatpush1.bf16.msra.mxu0 0
      %1883 = vmatprep.subr.bf16.mxu0 0
      %1884 = vmatpush1.bf16.msra.mxu0 0
      %1885 = vmatprep.subr.bf16.mxu0 0
      %1886 = vmatpush1.bf16.msra.mxu0 0
      %1887 = vmatprep.subr.bf16.mxu0 0
      %1888 = vmatpush1.bf16.msra.mxu0 0
      %1889 = vmatprep.subr.bf16.mxu0 0
      %1890 = vmatpush1.bf16.msra.mxu0 0
      %1891 = vmatprep.subr.bf16.mxu0 0
      %1892 = vmatpush1.bf16.msra.mxu0 0
      %1893 = vmatprep.mubr.bf16.mxu0 0
      %1894 = vmatmul.mubr.bf16.gmra.mrb[0].mxu0 %v1856
      %v1895 = vpop.f32.mrb[0].mxu0
      %v1896 = vadd.f32 0.0, %v1895
      %v1897 = vpop.f32.mrb[0].mxu0
      %v1898 = vpop.f32.mrb[0].mxu0
      %v1899 = vpop.f32.mrb[0].mxu0
      %1900 = vdwg.mxu0
      %v1902 = vsel %vm1128, %v1852, 0
      %v1905 = vsel %vm1158, %v1854, 0
      %1907 = vmatprep.subr.bf16.mxu0 0
      %1908 = vmatpush1.bf16.msra.mxu0 %v1905
      %1909 = vmatprep.subr.bf16.mxu0 0
      %1910 = vmatpush1.bf16.msra.mxu0 0
      %1911 = vmatprep.subr.bf16.mxu0 0
      %1912 = vmatpush1.bf16.msra.mxu0 0
      %1913 = vmatprep.subr.bf16.mxu0 0
      %1914 = vmatpush1.bf16.msra.mxu0 0
      %1915 = vmatprep.subr.bf16.mxu0 0
      %1916 = vmatpush1.bf16.msra.mxu0 0
      %1917 = vmatprep.subr.bf16.mxu0 0
      %1918 = vmatpush1.bf16.msra.mxu0 0
      %1919 = vmatprep.subr.bf16.mxu0 0
      %1920 = vmatpush1.bf16.msra.mxu0 0
      %1921 = vmatprep.subr.bf16.mxu0 0
      %1922 = vmatpush1.bf16.msra.mxu0 0
      %1923 = vmatprep.subr.bf16.mxu0 0
      %1924 = vmatpush1.bf16.msra.mxu0 0
      %1925 = vmatprep.subr.bf16.mxu0 0
      %1926 = vmatpush1.bf16.msra.mxu0 0
      %1927 = vmatprep.subr.bf16.mxu0 0
      %1928 = vmatpush1.bf16.msra.mxu0 0
      %1929 = vmatprep.subr.bf16.mxu0 0
      %1930 = vmatpush1.bf16.msra.mxu0 0
      %1931 = vmatprep.subr.bf16.mxu0 0
      %1932 = vmatpush1.bf16.msra.mxu0 0
      %1933 = vmatprep.subr.bf16.mxu0 0
      %1934 = vmatpush1.bf16.msra.mxu0 0
      %1935 = vmatprep.subr.bf16.mxu0 0
      %1936 = vmatpush1.bf16.msra.mxu0 0
      %1937 = vmatprep.subr.bf16.mxu0 0
      %1938 = vmatpush1.bf16.msra.mxu0 0
      %1939 = vmatprep.mubr.bf16.mxu0 0
      %1940 = vmatmul.mubr.bf16.gmra.mrb[0].mxu0 %v1902
      %v1941 = vpop.f32.mrb[0].mxu0
      %v1942 = vadd.f32 0.0, %v1941
      %v1943 = vpop.f32.mrb[0].mxu0
      %v1944 = vpop.f32.mrb[0].mxu0
      %v1945 = vpop.f32.mrb[0].mxu0
      %1946 = vdwg.mxu0
      %v1947 = vcombine.high %v1896, 0.0
      %v1949 = vunpack.c.l.s4 1983009808
      %v1950 = vunpack.c.0.s8 %v1949
      %v1951 = vlaneseq
      %v1952 = vshrl.u32 %v1951, 7
      %v1953 = vsub.s32 %v1950, %v1952
      %v1954 = vrot.slane %v1896, %v1953
      %v1956 = vunpack.c.l.s4 1983009808
      %v1957 = vunpack.c.0.s8 %v1956
      %v1958 = vlaneseq
      %v1959 = vshrl.u32 %v1958, 7
      %v1960 = vsub.s32 %v1957, %v1959
      %v1961 = vrot.slane %v1947, %v1960
      %v1962 = vcombine.high %v1942, 0.0
      %v1964 = vunpack.c.l.s4 1983009808
      %v1965 = vunpack.c.0.s8 %v1964
      %v1966 = vlaneseq
      %v1967 = vshrl.u32 %v1966, 7
      %v1968 = vsub.s32 %v1965, %v1967
      %v1969 = vrot.slane %v1942, %v1968
      %v1971 = vunpack.c.l.s4 1983009808
      %v1972 = vunpack.c.0.s8 %v1971
      %v1973 = vlaneseq
      %v1974 = vshrl.u32 %v1973, 7
      %v1975 = vsub.s32 %v1972, %v1974
      %v1976 = vrot.slane %v1962, %v1975
      %v1977 = vcombine.low %v1954, %v1969
      %v1978 = vcombine.high %v1954, %v1969
      %v1980 = vunpack.c.l.s4 1934713408
      %v1981 = vunpack.c.0.s8 %v1980
      %v1982 = vlaneseq
      %v1983 = vshrl.u32 %v1982, 7
      %v1984 = vsub.s32 %v1981, %v1983
      %v1985 = vrot.slane %v1977, %v1984
      %v1987 = vunpack.c.l.s4 1934713408
      %v1988 = vunpack.c.0.s8 %v1987
      %v1989 = vlaneseq
      %v1990 = vshrl.u32 %v1989, 7
      %v1991 = vsub.s32 %v1988, %v1990
      %v1992 = vrot.slane %v1978, %v1991
      %v1993 = vcombine.low %v1961, %v1976
      %v1994 = vcombine.high %v1961, %v1976
      %v1996 = vunpack.c.l.s4 1934713408
      %v1997 = vunpack.c.0.s8 %v1996
      %v1998 = vlaneseq
      %v1999 = vshrl.u32 %v1998, 7
      %v2000 = vsub.s32 %v1997, %v1999
      %v2001 = vrot.slane %v1993, %v2000
      %v2003 = vunpack.c.l.s4 1934713408
      %v2004 = vunpack.c.0.s8 %v2003
      %v2005 = vlaneseq
      %v2006 = vshrl.u32 %v2005, 7
      %v2007 = vsub.s32 %v2004, %v2006
      %v2008 = vrot.slane %v1994, %v2007
      %v2009 = vcombine.high %v1985, 0.0
      %v2010 = vcombine.high %v1992, 0.0
      %v2011 = vcombine.high %v2001, 0.0
      %v2012 = vcombine.high %v2008, 0.0
      %v2013 = vcombine.low %v1985, %v1992
      %v2015 = vunpack.c.l.s4 1983009808
      %v2016 = vunpack.c.0.s8 %v2015
      %v2017 = vlaneseq
      %v2018 = vshrl.u32 %v2017, 7
      %v2019 = vsub.s32 %v2016, %v2018
      %v2020 = vrot.slane %v2013, %v2019
      %v2021 = vcombine.low %v2009, %v2010
      %v2023 = vunpack.c.l.s4 1983009808
      %v2024 = vunpack.c.0.s8 %v2023
      %v2025 = vlaneseq
      %v2026 = vshrl.u32 %v2025, 7
      %v2027 = vsub.s32 %v2024, %v2026
      %v2028 = vrot.slane %v2021, %v2027
      %v2029 = vcombine.low %v2001, %v2008
      %v2031 = vunpack.c.l.s4 1983009808
      %v2032 = vunpack.c.0.s8 %v2031
      %v2033 = vlaneseq
      %v2034 = vshrl.u32 %v2033, 7
      %v2035 = vsub.s32 %v2032, %v2034
      %v2036 = vrot.slane %v2029, %v2035
      %v2037 = vcombine.low %v2011, %v2012
      %v2039 = vunpack.c.l.s4 1983009808
      %v2040 = vunpack.c.0.s8 %v2039
      %v2041 = vlaneseq
      %v2042 = vshrl.u32 %v2041, 7
      %v2043 = vsub.s32 %v2040, %v2042
      %v2044 = vrot.slane %v2037, %v2043
      %v2045 = vcombine.low %v2020, %v2028
      %v2047 = vunpack.c.l.s4 1934713408
      %v2048 = vunpack.c.0.s8 %v2047
      %v2049 = vlaneseq
      %v2050 = vshrl.u32 %v2049, 7
      %v2051 = vsub.s32 %v2048, %v2050
      %v2052 = vrot.slane %v2045, %v2051
      %v2053 = vcombine.low %v2036, %v2044
      %v2055 = vunpack.c.l.s4 1934713408
      %v2056 = vunpack.c.0.s8 %v2055
      %v2057 = vlaneseq
      %v2058 = vshrl.u32 %v2057, 7
      %v2059 = vsub.s32 %v2056, %v2058
      %v2060 = vrot.slane %v2053, %v2059
      %v2061 = vcombine.low %v2052, %v2060
      %v2062 = vcombine.high %v2052, %v2060
      %2064 = vrot.lane.b32.xlu0 %v2062, 16
      %v2065 = vpop.permute.xlu0 %2064
      %v2067 = vsel %vm1035, %v2061, %v2065
      %v2068 = vpack.c.bf16 %v2067, %v2067
      %v2070 = vrot.slane %v2068, 4
      %vm2072 = vcmask 261124
      %2073 = vst.msk [vmem:[#allocation4] sm:$0xf0] %vm2072, %v2070
      %v2074 = vld [vmem:[#allocation4] sm:$0xff]
      %v2075 = vlaneseq
      %v2076 = vshrl.u32 %v2075, 7
      %v2077 = vsub.s32 5, %v2076
      %v2078 = vrot.slane %v428, %v2077
      %v2083 = vunpack.c.l.b16 %v489
      %v2084 = vunpack.c.l.b16 %v490
      %v2085 = vunpack.c.l.b16 %v491
      %v2086 = vunpack.c.l.b16 %v492
      %v2087 = vpack.c.b16 %v2084, %v2083
      %v2088 = vpack.c.b16 %v2086, %v2085
      %v2092 = vsel %vm434, %v2074, 0
      %2094 = vmatprep.subr.bf16.mxu0 0
      %2095 = vmatpush1.bf16.msra.mxu0 %v2087
      %2096 = vmatprep.subr.bf16.mxu0 0
      %2097 = vmatpush1.bf16.msra.mxu0 %v2088
      %2098 = vmatprep.subr.bf16.mxu0 0
      %2099 = vmatpush1.bf16.msra.mxu0 0
      %2100 = vmatprep.subr.bf16.mxu0 0
      %2101 = vmatpush1.bf16.msra.mxu0 0
      %2102 = vmatprep.subr.bf16.mxu0 0
      %2103 = vmatpush1.bf16.msra.mxu0 0
      %2104 = vmatprep.subr.bf16.mxu0 0
      %2105 = vmatpush1.bf16.msra.mxu0 0
      %2106 = vmatprep.subr.bf16.mxu0 0
      %2107 = vmatpush1.bf16.msra.mxu0 0
      %2108 = vmatprep.subr.bf16.mxu0 0
      %2109 = vmatpush1.bf16.msra.mxu0 0
      %2110 = vmatprep.subr.bf16.mxu0 0
      %2111 = vmatpush1.bf16.msra.mxu0 0
      %2112 = vmatprep.subr.bf16.mxu0 0
      %2113 = vmatpush1.bf16.msra.mxu0 0
      %2114 = vmatprep.subr.bf16.mxu0 0
      %2115 = vmatpush1.bf16.msra.mxu0 0
      %2116 = vmatprep.subr.bf16.mxu0 0
      %2117 = vmatpush1.bf16.msra.mxu0 0
      %2118 = vmatprep.subr.bf16.mxu0 0
      %2119 = vmatpush1.bf16.msra.mxu0 0
      %2120 = vmatprep.subr.bf16.mxu0 0
      %2121 = vmatpush1.bf16.msra.mxu0 0
      %2122 = vmatprep.subr.bf16.mxu0 0
      %2123 = vmatpush1.bf16.msra.mxu0 0
      %2124 = vmatprep.subr.bf16.mxu0 0
      %2125 = vmatpush1.bf16.msra.mxu0 0
      %2126 = vmatprep.mubr.bf16.mxu0 0
      %2127 = vmatmul.mubr.bf16.gmra.mrb[0].mxu0 %v2092
      %v2128 = vpop.f32.mrb[0].mxu0
      %v2129 = vadd.f32 %v2078, %v2128
      %v2130 = vpop.f32.mrb[0].mxu0
      %v2131 = vpop.f32.mrb[0].mxu0
      %v2132 = vadd.f32 %v2078, %v2131
      %v2133 = vpop.f32.mrb[0].mxu0
      %2134 = vdwg.mxu0
      %v2135 = vadd.f32 %v430, %v2129
      %v2136 = vadd.f32 %v431, %v2132
      %v2137 = vsel %vm434, %v2135, 0.0
      %2138 = vadd.xlane.f32.xlu0 %v2137
      %v2139 = vpop.xlane.xlu0 %2138
      %v2140 = vsel %vm434, %v2136, 0.0
      %2141 = vadd.xlane.f32.xlu0 %v2140
      %v2142 = vpop.xlane.xlu0 %2141
      %v2143 = vmul.f32 %v2139, %v441
      %v2144 = vmul.f32 %v2142, %v441
      %v2145 = vsub.f32 %v2135, %v2143
      %v2146 = vsub.f32 %v2136, %v2144
      %v2147 = vmul.f32 %v2145, %v2145
      %v2148 = vmul.f32 %v2146, %v2146
      %v2149 = vsel %vm434, %v2147, 0.0
      %2150 = vadd.xlane.f32.xlu0 %v2149
      %v2151 = vpop.xlane.xlu0 %2150
      %v2152 = vsel %vm434, %v2148, 0.0
      %2153 = vadd.xlane.f32.xlu0 %v2152
      %v2154 = vpop.xlane.xlu0 %2153
      %v2155 = vmul.f32 %v2151, %v441
      %v2156 = vmul.f32 %v2154, %v441
      %v2157 = vadd.f32 %v2155, 1e-05
      %v2158 = vadd.f32 %v2156, 1e-05
      %v2159 = vrsqrt.pop %v2157
      %v2160 = vrsqrt.pop %v2158
      %v2161 = vmul.f32 %v2145, %v2159
      %v2162 = vmul.f32 %v2146, %v2160
      %v2163 = vlaneseq
      %v2164 = vshrl.u32 %v2163, 7
      %v2165 = vsub.s32 6, %v2164
      %v2166 = vrot.slane %v428, %v2165
      %v2167 = vmul.f32 %v2161, %v2166
      %v2168 = vmul.f32 %v2162, %v2166
      %v2169 = vlaneseq
      %v2170 = vshrl.u32 %v2169, 7
      %v2171 = vsub.s32 7, %v2170
      %v2172 = vrot.slane %v428, %v2171
      %v2173 = vadd.f32 %v2167, %v2172
      %v2174 = vadd.f32 %v2168, %v2172
      %s2175 = scalar_lea.vmem %s385, 64
      %v2176 = vld [vmem:[%s2175] sm:$0xf]
      %v2177 = vld [vmem:[%s2175 + $0x4] sm:$0xf]
      %v2178 = vld [vmem:[%s2175 + $0x8] sm:$0xf]
      %v2179 = vld [vmem:[%s2175 + $0xc] sm:$0xf]
      %s2180 = scalar_lea.vmem %s385, 80
      %v2181 = vld [vmem:[%s2180] sm:$0xf]
      %v2182 = vld [vmem:[%s2180 + $0x4] sm:$0xf]
      %v2183 = vld [vmem:[%s2180 + $0x8] sm:$0xf]
      %v2184 = vld [vmem:[%s2180 + $0xc] sm:$0xf]
      %s2185 = scalar_lea.vmem %s385, 96
      %v2186 = vld [vmem:[%s2185] sm:$0xf]
      %v2187 = vld [vmem:[%s2185 + $0x4] sm:$0xf]
      %v2188 = vld [vmem:[%s2185 + $0x8] sm:$0xf]
      %v2189 = vld [vmem:[%s2185 + $0xc] sm:$0xf]
      %s2190 = scalar_lea.vmem %s385, 112
      %v2191 = vld [vmem:[%s2190] sm:$0xf]
      %v2192 = vld [vmem:[%s2190 + $0x4] sm:$0xf]
      %v2193 = vld [vmem:[%s2190 + $0x8] sm:$0xf]
      %v2194 = vld [vmem:[%s2190 + $0xc] sm:$0xf]
      %v2195 = vpack.c.bf16 %v2174, %v2173
      %v2196 = vlaneseq
      %v2197 = vshrl.u32 %v2196, 7
      %v2198 = vsub.s32 0, %v2197
      %v2199 = vrot.slane %v429, %v2198
      %v2204 = vunpack.c.l.b16 %v2176
      %v2205 = vunpack.c.l.b16 %v2177
      %v2206 = vunpack.c.l.b16 %v2178
      %v2207 = vunpack.c.l.b16 %v2179
      %v2208 = vpack.c.b16 %v2205, %v2204
      %v2209 = vpack.c.b16 %v2207, %v2206
      %v2213 = vsel %vm434, %v2195, 0
      %2215 = vmatprep.subr.bf16.mxu0 0
      %2216 = vmatpush1.bf16.msra.mxu0 %v2208
      %2217 = vmatprep.subr.bf16.mxu0 0
      %2218 = vmatpush1.bf16.msra.mxu0 %v2209
      %2219 = vmatprep.subr.bf16.mxu0 0
      %2220 = vmatpush1.bf16.msra.mxu0 0
      %2221 = vmatprep.subr.bf16.mxu0 0
      %2222 = vmatpush1.bf16.msra.mxu0 0
      %2223 = vmatprep.subr.bf16.mxu0 0
      %2224 = vmatpush1.bf16.msra.mxu0 0
      %2225 = vmatprep.subr.bf16.mxu0 0
      %2226 = vmatpush1.bf16.msra.mxu0 0
      %2227 = vmatprep.subr.bf16.mxu0 0
      %2228 = vmatpush1.bf16.msra.mxu0 0
      %2229 = vmatprep.subr.bf16.mxu0 0
      %2230 = vmatpush1.bf16.msra.mxu0 0
      %2231 = vmatprep.subr.bf16.mxu0 0
      %2232 = vmatpush1.bf16.msra.mxu0 0
      %2233 = vmatprep.subr.bf16.mxu0 0
      %2234 = vmatpush1.bf16.msra.mxu0 0
      %2235 = vmatprep.subr.bf16.mxu0 0
      %2236 = vmatpush1.bf16.msra.mxu0 0
      %2237 = vmatprep.subr.bf16.mxu0 0
      %2238 = vmatpush1.bf16.msra.mxu0 0
      %2239 = vmatprep.subr.bf16.mxu0 0
      %2240 = vmatpush1.bf16.msra.mxu0 0
      %2241 = vmatprep.subr.bf16.mxu0 0
      %2242 = vmatpush1.bf16.msra.mxu0 0
      %2243 = vmatprep.subr.bf16.mxu0 0
      %2244 = vmatpush1.bf16.msra.mxu0 0
      %2245 = vmatprep.subr.bf16.mxu0 0
      %2246 = vmatpush1.bf16.msra.mxu0 0
      %2247 = vmatprep.mubr.bf16.mxu0 0
      %2248 = vmatmul.mubr.bf16.gmra.mrb[0].mxu0 %v2213
      %v2249 = vpop.f32.mrb[0].mxu0
      %v2250 = vadd.f32 %v2199, %v2249
      %v2251 = vpop.f32.mrb[0].mxu0
      %v2252 = vpop.f32.mrb[0].mxu0
      %v2253 = vadd.f32 %v2199, %v2252
      %v2254 = vpop.f32.mrb[0].mxu0
      %2255 = vdwg.mxu0
      %v2256 = vpack.c.bf16 %v433, %v432
      %v2257 = vlaneseq
      %v2258 = vshrl.u32 %v2257, 7
      %v2259 = vsub.s32 1, %v2258
      %v2260 = vrot.slane %v429, %v2259
      %v2265 = vunpack.c.l.b16 %v2181
      %v2266 = vunpack.c.l.b16 %v2182
      %v2267 = vunpack.c.l.b16 %v2183
      %v2268 = vunpack.c.l.b16 %v2184
      %v2269 = vpack.c.b16 %v2266, %v2265
      %v2270 = vpack.c.b16 %v2268, %v2267
      %v2274 = vsel %vm434, %v2256, 0
      %2276 = vmatprep.subr.bf16.mxu0 0
      %2277 = vmatpush1.bf16.msra.mxu0 %v2269
      %2278 = vmatprep.subr.bf16.mxu0 0
      %2279 = vmatpush1.bf16.msra.mxu0 %v2270
      %2280 = vmatprep.subr.bf16.mxu0 0
      %2281 = vmatpush1.bf16.msra.mxu0 0
      %2282 = vmatprep.subr.bf16.mxu0 0
      %2283 = vmatpush1.bf16.msra.mxu0 0
      %2284 = vmatprep.subr.bf16.mxu0 0
      %2285 = vmatpush1.bf16.msra.mxu0 0
      %2286 = vmatprep.subr.bf16.mxu0 0
      %2287 = vmatpush1.bf16.msra.mxu0 0
      %2288 = vmatprep.subr.bf16.mxu0 0
      %2289 = vmatpush1.bf16.msra.mxu0 0
      %2290 = vmatprep.subr.bf16.mxu0 0
      %2291 = vmatpush1.bf16.msra.mxu0 0
      %2292 = vmatprep.subr.bf16.mxu0 0
      %2293 = vmatpush1.bf16.msra.mxu0 0
      %2294 = vmatprep.subr.bf16.mxu0 0
      %2295 = vmatpush1.bf16.msra.mxu0 0
      %2296 = vmatprep.subr.bf16.mxu0 0
      %2297 = vmatpush1.bf16.msra.mxu0 0
      %2298 = vmatprep.subr.bf16.mxu0 0
      %2299 = vmatpush1.bf16.msra.mxu0 0
      %2300 = vmatprep.subr.bf16.mxu0 0
      %2301 = vmatpush1.bf16.msra.mxu0 0
      %2302 = vmatprep.subr.bf16.mxu0 0
      %2303 = vmatpush1.bf16.msra.mxu0 0
      %2304 = vmatprep.subr.bf16.mxu0 0
      %2305 = vmatpush1.bf16.msra.mxu0 0
      %2306 = vmatprep.subr.bf16.mxu0 0
      %2307 = vmatpush1.bf16.msra.mxu0 0
      %2308 = vmatprep.mubr.bf16.mxu0 0
      %2309 = vmatmul.mubr.bf16.gmra.mrb[0].mxu0 %v2274
      %v2310 = vpop.f32.mrb[0].mxu0
      %v2311 = vadd.f32 %v2260, %v2310
      %v2312 = vpop.f32.mrb[0].mxu0
      %v2313 = vpop.f32.mrb[0].mxu0
      %v2314 = vadd.f32 %v2260, %v2313
      %v2315 = vpop.f32.mrb[0].mxu0
      %2316 = vdwg.mxu0
      %v2317 = vlaneseq
      %v2318 = vshrl.u32 %v2317, 7
      %v2319 = vsub.s32 2, %v2318
      %v2320 = vrot.slane %v429, %v2319
      %v2325 = vunpack.c.l.b16 %v2186
      %v2326 = vunpack.c.l.b16 %v2187
      %v2327 = vunpack.c.l.b16 %v2188
      %v2328 = vunpack.c.l.b16 %v2189
      %v2329 = vpack.c.b16 %v2326, %v2325
      %v2330 = vpack.c.b16 %v2328, %v2327
      %2333 = vmatprep.subr.bf16.mxu0 0
      %2334 = vmatpush1.bf16.msra.mxu0 %v2329
      %2335 = vmatprep.subr.bf16.mxu0 0
      %2336 = vmatpush1.bf16.msra.mxu0 %v2330
      %2337 = vmatprep.subr.bf16.mxu0 0
      %2338 = vmatpush1.bf16.msra.mxu0 0
      %2339 = vmatprep.subr.bf16.mxu0 0
      %2340 = vmatpush1.bf16.msra.mxu0 0
      %2341 = vmatprep.subr.bf16.mxu0 0
      %2342 = vmatpush1.bf16.msra.mxu0 0
      %2343 = vmatprep.subr.bf16.mxu0 0
      %2344 = vmatpush1.bf16.msra.mxu0 0
      %2345 = vmatprep.subr.bf16.mxu0 0
      %2346 = vmatpush1.bf16.msra.mxu0 0
      %2347 = vmatprep.subr.bf16.mxu0 0
      %2348 = vmatpush1.bf16.msra.mxu0 0
      %2349 = vmatprep.subr.bf16.mxu0 0
      %2350 = vmatpush1.bf16.msra.mxu0 0
      %2351 = vmatprep.subr.bf16.mxu0 0
      %2352 = vmatpush1.bf16.msra.mxu0 0
      %2353 = vmatprep.subr.bf16.mxu0 0
      %2354 = vmatpush1.bf16.msra.mxu0 0
      %2355 = vmatprep.subr.bf16.mxu0 0
      %2356 = vmatpush1.bf16.msra.mxu0 0
      %2357 = vmatprep.subr.bf16.mxu0 0
      %2358 = vmatpush1.bf16.msra.mxu0 0
      %2359 = vmatprep.subr.bf16.mxu0 0
      %2360 = vmatpush1.bf16.msra.mxu0 0
      %2361 = vmatprep.subr.bf16.mxu0 0
      %2362 = vmatpush1.bf16.msra.mxu0 0
      %2363 = vmatprep.subr.bf16.mxu0 0
      %2364 = vmatpush1.bf16.msra.mxu0 0
      %2365 = vmatprep.mubr.bf16.mxu0 0
      %2366 = vmatmul.mubr.bf16.gmra.mrb[0].mxu0 %v2274
      %v2367 = vpop.f32.mrb[0].mxu0
      %v2368 = vadd.f32 %v2320, %v2367
      %v2369 = vpop.f32.mrb[0].mxu0
      %v2370 = vpop.f32.mrb[0].mxu0
      %v2371 = vadd.f32 %v2320, %v2370
      %v2372 = vpop.f32.mrb[0].mxu0
      %2373 = vdwg.mxu0
      %v2374 = vmul.f32 %v2250, 0.25
      %v2375 = vmul.f32 %v2253, 0.25
      %2377 = vrot.lane.b32.xlu0 %v2374, 112
      %v2378 = vpop.permute.xlu0 %2377
      %v2380 = vcombine.high %v2374, 0.0
      %v2382 = vunpack.c.l.s4 1983009808
      %v2383 = vunpack.c.0.s8 %v2382
      %v2384 = vlaneseq
      %v2385 = vshrl.u32 %v2384, 7
      %v2386 = vsub.s32 %v2383, %v2385
      %v2387 = vrot.slane %v2374, %v2386
      %v2389 = vunpack.c.l.s4 1983009808
      %v2390 = vunpack.c.0.s8 %v2389
      %v2391 = vlaneseq
      %v2392 = vshrl.u32 %v2391, 7
      %v2393 = vsub.s32 %v2390, %v2392
      %v2394 = vrot.slane %v2380, %v2393
      %v2395 = vcombine.high %v2378, 0.0
      %v2397 = vunpack.c.l.s4 1983009808
      %v2398 = vunpack.c.0.s8 %v2397
      %v2399 = vlaneseq
      %v2400 = vshrl.u32 %v2399, 7
      %v2401 = vsub.s32 %v2398, %v2400
      %v2402 = vrot.slane %v2378, %v2401
      %v2404 = vunpack.c.l.s4 1983009808
      %v2405 = vunpack.c.0.s8 %v2404
      %v2406 = vlaneseq
      %v2407 = vshrl.u32 %v2406, 7
      %v2408 = vsub.s32 %v2405, %v2407
      %v2409 = vrot.slane %v2395, %v2408
      %v2410 = vcombine.low %v2387, %v2402
      %v2411 = vcombine.high %v2387, %v2402
      %v2413 = vunpack.c.l.s4 1934713408
      %v2414 = vunpack.c.0.s8 %v2413
      %v2415 = vlaneseq
      %v2416 = vshrl.u32 %v2415, 7
      %v2417 = vsub.s32 %v2414, %v2416
      %v2418 = vrot.slane %v2410, %v2417
      %v2420 = vunpack.c.l.s4 1934713408
      %v2421 = vunpack.c.0.s8 %v2420
      %v2422 = vlaneseq
      %v2423 = vshrl.u32 %v2422, 7
      %v2424 = vsub.s32 %v2421, %v2423
      %v2425 = vrot.slane %v2411, %v2424
      %v2426 = vcombine.low %v2394, %v2409
      %v2427 = vcombine.high %v2394, %v2409
      %v2429 = vunpack.c.l.s4 1934713408
      %v2430 = vunpack.c.0.s8 %v2429
      %v2431 = vlaneseq
      %v2432 = vshrl.u32 %v2431, 7
      %v2433 = vsub.s32 %v2430, %v2432
      %v2434 = vrot.slane %v2426, %v2433
      %v2436 = vunpack.c.l.s4 1934713408
      %v2437 = vunpack.c.0.s8 %v2436
      %v2438 = vlaneseq
      %v2439 = vshrl.u32 %v2438, 7
      %v2440 = vsub.s32 %v2437, %v2439
      %v2441 = vrot.slane %v2427, %v2440
      %v2442 = vcombine.high %v2418, 0.0
      %v2443 = vcombine.high %v2425, 0.0
      %v2444 = vcombine.high %v2434, 0.0
      %v2445 = vcombine.high %v2441, 0.0
      %v2446 = vcombine.low %v2418, %v2425
      %v2448 = vunpack.c.l.s4 1983009808
      %v2449 = vunpack.c.0.s8 %v2448
      %v2450 = vlaneseq
      %v2451 = vshrl.u32 %v2450, 7
      %v2452 = vsub.s32 %v2449, %v2451
      %v2453 = vrot.slane %v2446, %v2452
      %v2454 = vcombine.low %v2442, %v2443
      %v2456 = vunpack.c.l.s4 1983009808
      %v2457 = vunpack.c.0.s8 %v2456
      %v2458 = vlaneseq
      %v2459 = vshrl.u32 %v2458, 7
      %v2460 = vsub.s32 %v2457, %v2459
      %v2461 = vrot.slane %v2454, %v2460
      %v2462 = vcombine.low %v2434, %v2441
      %v2464 = vunpack.c.l.s4 1983009808
      %v2465 = vunpack.c.0.s8 %v2464
      %v2466 = vlaneseq
      %v2467 = vshrl.u32 %v2466, 7
      %v2468 = vsub.s32 %v2465, %v2467
      %v2469 = vrot.slane %v2462, %v2468
      %v2470 = vcombine.low %v2444, %v2445
      %v2472 = vunpack.c.l.s4 1983009808
      %v2473 = vunpack.c.0.s8 %v2472
      %v2474 = vlaneseq
      %v2475 = vshrl.u32 %v2474, 7
      %v2476 = vsub.s32 %v2473, %v2475
      %v2477 = vrot.slane %v2470, %v2476
      %v2478 = vcombine.low %v2453, %v2461
      %v2480 = vunpack.c.l.s4 1934713408
      %v2481 = vunpack.c.0.s8 %v2480
      %v2482 = vlaneseq
      %v2483 = vshrl.u32 %v2482, 7
      %v2484 = vsub.s32 %v2481, %v2483
      %v2485 = vrot.slane %v2478, %v2484
      %v2486 = vcombine.low %v2469, %v2477
      %v2488 = vunpack.c.l.s4 1934713408
      %v2489 = vunpack.c.0.s8 %v2488
      %v2490 = vlaneseq
      %v2491 = vshrl.u32 %v2490, 7
      %v2492 = vsub.s32 %v2489, %v2491
      %v2493 = vrot.slane %v2486, %v2492
      %v2494 = vcombine.low %v2485, %v2493
      %v2495 = vcombine.high %v2485, %v2493
      %2497 = vrot.lane.b32.xlu0 %v2311, 112
      %v2498 = vpop.permute.xlu0 %2497
      %v2500 = vcombine.high %v2311, 0.0
      %v2502 = vunpack.c.l.s4 1983009808
      %v2503 = vunpack.c.0.s8 %v2502
      %v2504 = vlaneseq
      %v2505 = vshrl.u32 %v2504, 7
      %v2506 = vsub.s32 %v2503, %v2505
      %v2507 = vrot.slane %v2311, %v2506
      %v2509 = vunpack.c.l.s4 1983009808
      %v2510 = vunpack.c.0.s8 %v2509
      %v2511 = vlaneseq
      %v2512 = vshrl.u32 %v2511, 7
      %v2513 = vsub.s32 %v2510, %v2512
      %v2514 = vrot.slane %v2500, %v2513
      %v2515 = vcombine.high %v2498, 0.0
      %v2517 = vunpack.c.l.s4 1983009808
      %v2518 = vunpack.c.0.s8 %v2517
      %v2519 = vlaneseq
      %v2520 = vshrl.u32 %v2519, 7
      %v2521 = vsub.s32 %v2518, %v2520
      %v2522 = vrot.slane %v2498, %v2521
      %v2524 = vunpack.c.l.s4 1983009808
      %v2525 = vunpack.c.0.s8 %v2524
      %v2526 = vlaneseq
      %v2527 = vshrl.u32 %v2526, 7
      %v2528 = vsub.s32 %v2525, %v2527
      %v2529 = vrot.slane %v2515, %v2528
      %v2530 = vcombine.low %v2507, %v2522
      %v2531 = vcombine.high %v2507, %v2522
      %v2533 = vunpack.c.l.s4 1934713408
      %v2534 = vunpack.c.0.s8 %v2533
      %v2535 = vlaneseq
      %v2536 = vshrl.u32 %v2535, 7
      %v2537 = vsub.s32 %v2534, %v2536
      %v2538 = vrot.slane %v2530, %v2537
      %v2540 = vunpack.c.l.s4 1934713408
      %v2541 = vunpack.c.0.s8 %v2540
      %v2542 = vlaneseq
      %v2543 = vshrl.u32 %v2542, 7
      %v2544 = vsub.s32 %v2541, %v2543
      %v2545 = vrot.slane %v2531, %v2544
      %v2546 = vcombine.low %v2514, %v2529
      %v2547 = vcombine.high %v2514, %v2529
      %v2549 = vunpack.c.l.s4 1934713408
      %v2550 = vunpack.c.0.s8 %v2549
      %v2551 = vlaneseq
      %v2552 = vshrl.u32 %v2551, 7
      %v2553 = vsub.s32 %v2550, %v2552
      %v2554 = vrot.slane %v2546, %v2553
      %v2556 = vunpack.c.l.s4 1934713408
      %v2557 = vunpack.c.0.s8 %v2556
      %v2558 = vlaneseq
      %v2559 = vshrl.u32 %v2558, 7
      %v2560 = vsub.s32 %v2557, %v2559
      %v2561 = vrot.slane %v2547, %v2560
      %v2562 = vcombine.high %v2538, 0.0
      %v2563 = vcombine.high %v2545, 0.0
      %v2564 = vcombine.high %v2554, 0.0
      %v2565 = vcombine.high %v2561, 0.0
      %v2566 = vcombine.low %v2538, %v2545
      %v2568 = vunpack.c.l.s4 1983009808
      %v2569 = vunpack.c.0.s8 %v2568
      %v2570 = vlaneseq
      %v2571 = vshrl.u32 %v2570, 7
      %v2572 = vsub.s32 %v2569, %v2571
      %v2573 = vrot.slane %v2566, %v2572
      %v2574 = vcombine.low %v2562, %v2563
      %v2576 = vunpack.c.l.s4 1983009808
      %v2577 = vunpack.c.0.s8 %v2576
      %v2578 = vlaneseq
      %v2579 = vshrl.u32 %v2578, 7
      %v2580 = vsub.s32 %v2577, %v2579
      %v2581 = vrot.slane %v2574, %v2580
      %v2582 = vcombine.low %v2554, %v2561
      %v2584 = vunpack.c.l.s4 1983009808
      %v2585 = vunpack.c.0.s8 %v2584
      %v2586 = vlaneseq
      %v2587 = vshrl.u32 %v2586, 7
      %v2588 = vsub.s32 %v2585, %v2587
      %v2589 = vrot.slane %v2582, %v2588
      %v2590 = vcombine.low %v2564, %v2565
      %v2592 = vunpack.c.l.s4 1983009808
      %v2593 = vunpack.c.0.s8 %v2592
      %v2594 = vlaneseq
      %v2595 = vshrl.u32 %v2594, 7
      %v2596 = vsub.s32 %v2593, %v2595
      %v2597 = vrot.slane %v2590, %v2596
      %v2598 = vcombine.low %v2573, %v2581
      %v2600 = vunpack.c.l.s4 1934713408
      %v2601 = vunpack.c.0.s8 %v2600
      %v2602 = vlaneseq
      %v2603 = vshrl.u32 %v2602, 7
      %v2604 = vsub.s32 %v2601, %v2603
      %v2605 = vrot.slane %v2598, %v2604
      %v2606 = vcombine.low %v2589, %v2597
      %v2608 = vunpack.c.l.s4 1934713408
      %v2609 = vunpack.c.0.s8 %v2608
      %v2610 = vlaneseq
      %v2611 = vshrl.u32 %v2610, 7
      %v2612 = vsub.s32 %v2609, %v2611
      %v2613 = vrot.slane %v2606, %v2612
      %v2614 = vcombine.low %v2605, %v2613
      %v2615 = vcombine.high %v2605, %v2613
      %2617 = vrot.lane.b32.xlu0 %v2368, 112
      %v2618 = vpop.permute.xlu0 %2617
      %v2620 = vcombine.high %v2368, 0.0
      %v2622 = vunpack.c.l.s4 1983009808
      %v2623 = vunpack.c.0.s8 %v2622
      %v2624 = vlaneseq
      %v2625 = vshrl.u32 %v2624, 7
      %v2626 = vsub.s32 %v2623, %v2625
      %v2627 = vrot.slane %v2368, %v2626
      %v2629 = vunpack.c.l.s4 1983009808
      %v2630 = vunpack.c.0.s8 %v2629
      %v2631 = vlaneseq
      %v2632 = vshrl.u32 %v2631, 7
      %v2633 = vsub.s32 %v2630, %v2632
      %v2634 = vrot.slane %v2620, %v2633
      %v2635 = vcombine.high %v2618, 0.0
      %v2637 = vunpack.c.l.s4 1983009808
      %v2638 = vunpack.c.0.s8 %v2637
      %v2639 = vlaneseq
      %v2640 = vshrl.u32 %v2639, 7
      %v2641 = vsub.s32 %v2638, %v2640
      %v2642 = vrot.slane %v2618, %v2641
      %v2644 = vunpack.c.l.s4 1983009808
      %v2645 = vunpack.c.0.s8 %v2644
      %v2646 = vlaneseq
      %v2647 = vshrl.u32 %v2646, 7
      %v2648 = vsub.s32 %v2645, %v2647
      %v2649 = vrot.slane %v2635, %v2648
      %v2650 = vcombine.low %v2627, %v2642
      %v2651 = vcombine.high %v2627, %v2642
      %v2653 = vunpack.c.l.s4 1934713408
      %v2654 = vunpack.c.0.s8 %v2653
      %v2655 = vlaneseq
      %v2656 = vshrl.u32 %v2655, 7
      %v2657 = vsub.s32 %v2654, %v2656
      %v2658 = vrot.slane %v2650, %v2657
      %v2660 = vunpack.c.l.s4 1934713408
      %v2661 = vunpack.c.0.s8 %v2660
      %v2662 = vlaneseq
      %v2663 = vshrl.u32 %v2662, 7
      %v2664 = vsub.s32 %v2661, %v2663
      %v2665 = vrot.slane %v2651, %v2664
      %v2666 = vcombine.low %v2634, %v2649
      %v2667 = vcombine.high %v2634, %v2649
      %v2669 = vunpack.c.l.s4 1934713408
      %v2670 = vunpack.c.0.s8 %v2669
      %v2671 = vlaneseq
      %v2672 = vshrl.u32 %v2671, 7
      %v2673 = vsub.s32 %v2670, %v2672
      %v2674 = vrot.slane %v2666, %v2673
      %v2676 = vunpack.c.l.s4 1934713408
      %v2677 = vunpack.c.0.s8 %v2676
      %v2678 = vlaneseq
      %v2679 = vshrl.u32 %v2678, 7
      %v2680 = vsub.s32 %v2677, %v2679
      %v2681 = vrot.slane %v2667, %v2680
      %v2682 = vcombine.high %v2658, 0.0
      %v2683 = vcombine.high %v2665, 0.0
      %v2684 = vcombine.high %v2674, 0.0
      %v2685 = vcombine.high %v2681, 0.0
      %v2686 = vcombine.low %v2658, %v2665
      %v2688 = vunpack.c.l.s4 1983009808
      %v2689 = vunpack.c.0.s8 %v2688
      %v2690 = vlaneseq
      %v2691 = vshrl.u32 %v2690, 7
      %v2692 = vsub.s32 %v2689, %v2691
      %v2693 = vrot.slane %v2686, %v2692
      %v2694 = vcombine.low %v2682, %v2683
      %v2696 = vunpack.c.l.s4 1983009808
      %v2697 = vunpack.c.0.s8 %v2696
      %v2698 = vlaneseq
      %v2699 = vshrl.u32 %v2698, 7
      %v2700 = vsub.s32 %v2697, %v2699
      %v2701 = vrot.slane %v2694, %v2700
      %v2702 = vcombine.low %v2674, %v2681
      %v2704 = vunpack.c.l.s4 1983009808
      %v2705 = vunpack.c.0.s8 %v2704
      %v2706 = vlaneseq
      %v2707 = vshrl.u32 %v2706, 7
      %v2708 = vsub.s32 %v2705, %v2707
      %v2709 = vrot.slane %v2702, %v2708
      %v2710 = vcombine.low %v2684, %v2685
      %v2712 = vunpack.c.l.s4 1983009808
      %v2713 = vunpack.c.0.s8 %v2712
      %v2714 = vlaneseq
      %v2715 = vshrl.u32 %v2714, 7
      %v2716 = vsub.s32 %v2713, %v2715
      %v2717 = vrot.slane %v2710, %v2716
      %v2718 = vcombine.low %v2693, %v2701
      %v2720 = vunpack.c.l.s4 1934713408
      %v2721 = vunpack.c.0.s8 %v2720
      %v2722 = vlaneseq
      %v2723 = vshrl.u32 %v2722, 7
      %v2724 = vsub.s32 %v2721, %v2723
      %v2725 = vrot.slane %v2718, %v2724
      %v2726 = vcombine.low %v2709, %v2717
      %v2728 = vunpack.c.l.s4 1934713408
      %v2729 = vunpack.c.0.s8 %v2728
      %v2730 = vlaneseq
      %v2731 = vshrl.u32 %v2730, 7
      %v2732 = vsub.s32 %v2729, %v2731
      %v2733 = vrot.slane %v2726, %v2732
      %v2734 = vcombine.low %v2725, %v2733
      %v2735 = vcombine.high %v2725, %v2733
      %v2736 = vpack.c.bf16 %v2494, %v2494
      %v2737 = vpack.c.bf16 %v2495, %v2495
      %v2738 = vpack.c.bf16 %v2614, %v2614
      %v2739 = vpack.c.bf16 %v2615, %v2615
      %v2741 = vsel %vm1035, %v2736, 0
      %v2744 = vsel %vm1035, %v2738, 0
      %2746 = vmatprep.subr.bf16.mxu0 0
      %2747 = vmatpush1.bf16.xpose.msra.mxu0 %v2744
      %2748 = vmatprep.subr.bf16.mxu0 0
      %2749 = vmatpush1.bf16.xpose.msra.mxu0 0
      %2750 = vmatprep.subr.bf16.mxu0 0
      %2751 = vmatpush1.bf16.xpose.msra.mxu0 0
      %2752 = vmatprep.subr.bf16.mxu0 0
      %2753 = vmatpush1.bf16.xpose.msra.mxu0 0
      %2754 = vmatprep.subr.bf16.mxu0 0
      %2755 = vmatpush1.bf16.xpose.msra.mxu0 0
      %2756 = vmatprep.subr.bf16.mxu0 0
      %2757 = vmatpush1.bf16.xpose.msra.mxu0 0
      %2758 = vmatprep.subr.bf16.mxu0 0
      %2759 = vmatpush1.bf16.xpose.msra.mxu0 0
      %2760 = vmatprep.subr.bf16.mxu0 0
      %2761 = vmatpush1.bf16.xpose.msra.mxu0 0
      %2762 = vmatprep.subr.bf16.mxu0 0
      %2763 = vmatpush1.bf16.xpose.msra.mxu0 0
      %2764 = vmatprep.subr.bf16.mxu0 0
      %2765 = vmatpush1.bf16.xpose.msra.mxu0 0
      %2766 = vmatprep.subr.bf16.mxu0 0
      %2767 = vmatpush1.bf16.xpose.msra.mxu0 0
      %2768 = vmatprep.subr.bf16.mxu0 0
      %2769 = vmatpush1.bf16.xpose.msra.mxu0 0
      %2770 = vmatprep.subr.bf16.mxu0 0
      %2771 = vmatpush1.bf16.xpose.msra.mxu0 0
      %2772 = vmatprep.subr.bf16.mxu0 0
      %2773 = vmatpush1.bf16.xpose.msra.mxu0 0
      %2774 = vmatprep.subr.bf16.mxu0 0
      %2775 = vmatpush1.bf16.xpose.msra.mxu0 0
      %2776 = vmatprep.subr.bf16.mxu0 0
      %2777 = vmatpush1.bf16.xpose.msra.mxu0 0
      %2778 = vmatprep.mubr.bf16.mxu0 0
      %2779 = vmatmul.mubr.bf16.gmra.mrb[0].mxu0 %v2741
      %v2780 = vpop.f32.mrb[0].mxu0
      %v2781 = vadd.f32 0.0, %v2780
      %v2782 = vpop.f32.mrb[0].mxu0
      %v2783 = vpop.f32.mrb[0].mxu0
      %v2784 = vpop.f32.mrb[0].mxu0
      %2785 = vdwg.mxu0
      %v2787 = vsel %vm1035, %v2737, 0
      %v2790 = vsel %vm1035, %v2739, 0
      %2792 = vmatprep.subr.bf16.mxu0 0
      %2793 = vmatpush1.bf16.xpose.msra.mxu0 %v2790
      %2794 = vmatprep.subr.bf16.mxu0 0
      %2795 = vmatpush1.bf16.xpose.msra.mxu0 0
      %2796 = vmatprep.subr.bf16.mxu0 0
      %2797 = vmatpush1.bf16.xpose.msra.mxu0 0
      %2798 = vmatprep.subr.bf16.mxu0 0
      %2799 = vmatpush1.bf16.xpose.msra.mxu0 0
      %2800 = vmatprep.subr.bf16.mxu0 0
      %2801 = vmatpush1.bf16.xpose.msra.mxu0 0
      %2802 = vmatprep.subr.bf16.mxu0 0
      %2803 = vmatpush1.bf16.xpose.msra.mxu0 0
      %2804 = vmatprep.subr.bf16.mxu0 0
      %2805 = vmatpush1.bf16.xpose.msra.mxu0 0
      %2806 = vmatprep.subr.bf16.mxu0 0
      %2807 = vmatpush1.bf16.xpose.msra.mxu0 0
      %2808 = vmatprep.subr.bf16.mxu0 0
      %2809 = vmatpush1.bf16.xpose.msra.mxu0 0
      %2810 = vmatprep.subr.bf16.mxu0 0
      %2811 = vmatpush1.bf16.xpose.msra.mxu0 0
      %2812 = vmatprep.subr.bf16.mxu0 0
      %2813 = vmatpush1.bf16.xpose.msra.mxu0 0
      %2814 = vmatprep.subr.bf16.mxu0 0
      %2815 = vmatpush1.bf16.xpose.msra.mxu0 0
      %2816 = vmatprep.subr.bf16.mxu0 0
      %2817 = vmatpush1.bf16.xpose.msra.mxu0 0
      %2818 = vmatprep.subr.bf16.mxu0 0
      %2819 = vmatpush1.bf16.xpose.msra.mxu0 0
      %2820 = vmatprep.subr.bf16.mxu0 0
      %2821 = vmatpush1.bf16.xpose.msra.mxu0 0
      %2822 = vmatprep.subr.bf16.mxu0 0
      %2823 = vmatpush1.bf16.xpose.msra.mxu0 0
      %2824 = vmatprep.mubr.bf16.mxu0 0
      %2825 = vmatmul.mubr.bf16.gmra.mrb[0].mxu0 %v2787
      %v2826 = vpop.f32.mrb[0].mxu0
      %v2827 = vadd.f32 0.0, %v2826
      %v2828 = vpop.f32.mrb[0].mxu0
      %v2829 = vpop.f32.mrb[0].mxu0
      %v2830 = vpop.f32.mrb[0].mxu0
      %2831 = vdwg.mxu0
      %v2832 = vsel %vm1128, %v2781, -inf
      %2833 = vmax.xlane.f32.xlu0 %v2832
      %v2834 = vpop.xlane.xlu0 %2833
      %v2835 = vsel %vm1128, %v2827, -inf
      %2836 = vmax.xlane.f32.xlu0 %v2835
      %v2837 = vpop.xlane.xlu0 %2836
      %v2838 = vsub.f32 %v2781, %v2834
      %v2839 = vsub.f32 %v2827, %v2837
      %v2840 = vmul.f32 %v2838, 1.442695
      %v2841 = vpow.pop %v2840
      %v2842 = vmul.f32 %v2839, 1.442695
      %v2843 = vpow.pop %v2842
      %v2844 = vsel %vm1128, %v2841, 0.0
      %2845 = vadd.xlane.f32.xlu0 %v2844
      %v2846 = vpop.xlane.xlu0 %2845
      %v2847 = vsel %vm1128, %v2843, 0.0
      %2848 = vadd.xlane.f32.xlu0 %v2847
      %v2849 = vpop.xlane.xlu0 %2848
      %v2850 = vrcp.pop %v2846
      %v2851 = vmul.f32 %v2841, %v2850
      %v2852 = vrcp.pop %v2849
      %v2853 = vmul.f32 %v2843, %v2852
      %v2854 = vpack.c.bf16 %v2851, %v2851
      %v2855 = vpack.c.bf16 %v2853, %v2853
      %v2856 = vpack.c.bf16 %v2734, %v2734
      %v2857 = vpack.c.bf16 %v2735, %v2735
      %v2859 = vsel %vm1128, %v2854, 0
      %v2862 = vsel %vm1158, %v2856, 0
      %2864 = vmatprep.subr.bf16.mxu0 0
      %2865 = vmatpush1.bf16.msra.mxu0 %v2862
      %2866 = vmatprep.subr.bf16.mxu0 0
      %2867 = vmatpush1.bf16.msra.mxu0 0
      %2868 = vmatprep.subr.bf16.mxu0 0
      %2869 = vmatpush1.bf16.msra.mxu0 0
      %2870 = vmatprep.subr.bf16.mxu0 0
      %2871 = vmatpush1.bf16.msra.mxu0 0
      %2872 = vmatprep.subr.bf16.mxu0 0
      %2873 = vmatpush1.bf16.msra.mxu0 0
      %2874 = vmatprep.subr.bf16.mxu0 0
      %2875 = vmatpush1.bf16.msra.mxu0 0
      %2876 = vmatprep.subr.bf16.mxu0 0
      %2877 = vmatpush1.bf16.msra.mxu0 0
      %2878 = vmatprep.subr.bf16.mxu0 0
      %2879 = vmatpush1.bf16.msra.mxu0 0
      %2880 = vmatprep.subr.bf16.mxu0 0
      %2881 = vmatpush1.bf16.msra.mxu0 0
      %2882 = vmatprep.subr.bf16.mxu0 0
      %2883 = vmatpush1.bf16.msra.mxu0 0
      %2884 = vmatprep.subr.bf16.mxu0 0
      %2885 = vmatpush1.bf16.msra.mxu0 0
      %2886 = vmatprep.subr.bf16.mxu0 0
      %2887 = vmatpush1.bf16.msra.mxu0 0
      %2888 = vmatprep.subr.bf16.mxu0 0
      %2889 = vmatpush1.bf16.msra.mxu0 0
      %2890 = vmatprep.subr.bf16.mxu0 0
      %2891 = vmatpush1.bf16.msra.mxu0 0
      %2892 = vmatprep.subr.bf16.mxu0 0
      %2893 = vmatpush1.bf16.msra.mxu0 0
      %2894 = vmatprep.subr.bf16.mxu0 0
      %2895 = vmatpush1.bf16.msra.mxu0 0
      %2896 = vmatprep.mubr.bf16.mxu0 0
      %2897 = vmatmul.mubr.bf16.gmra.mrb[0].mxu0 %v2859
      %v2898 = vpop.f32.mrb[0].mxu0
      %v2899 = vadd.f32 0.0, %v2898
      %v2900 = vpop.f32.mrb[0].mxu0
      %v2901 = vpop.f32.mrb[0].mxu0
      %v2902 = vpop.f32.mrb[0].mxu0
      %2903 = vdwg.mxu0
      %v2905 = vsel %vm1128, %v2855, 0
      %v2908 = vsel %vm1158, %v2857, 0
      %2910 = vmatprep.subr.bf16.mxu0 0
      %2911 = vmatpush1.bf16.msra.mxu0 %v2908
      %2912 = vmatprep.subr.bf16.mxu0 0
      %2913 = vmatpush1.bf16.msra.mxu0 0
      %2914 = vmatprep.subr.bf16.mxu0 0
      %2915 = vmatpush1.bf16.msra.mxu0 0
      %2916 = vmatprep.subr.bf16.mxu0 0
      %2917 = vmatpush1.bf16.msra.mxu0 0
      %2918 = vmatprep.subr.bf16.mxu0 0
      %2919 = vmatpush1.bf16.msra.mxu0 0
      %2920 = vmatprep.subr.bf16.mxu0 0
      %2921 = vmatpush1.bf16.msra.mxu0 0
      %2922 = vmatprep.subr.bf16.mxu0 0
      %2923 = vmatpush1.bf16.msra.mxu0 0
      %2924 = vmatprep.subr.bf16.mxu0 0
      %2925 = vmatpush1.bf16.msra.mxu0 0
      %2926 = vmatprep.subr.bf16.mxu0 0
      %2927 = vmatpush1.bf16.msra.mxu0 0
      %2928 = vmatprep.subr.bf16.mxu0 0
      %2929 = vmatpush1.bf16.msra.mxu0 0
      %2930 = vmatprep.subr.bf16.mxu0 0
      %2931 = vmatpush1.bf16.msra.mxu0 0
      %2932 = vmatprep.subr.bf16.mxu0 0
      %2933 = vmatpush1.bf16.msra.mxu0 0
      %2934 = vmatprep.subr.bf16.mxu0 0
      %2935 = vmatpush1.bf16.msra.mxu0 0
      %2936 = vmatprep.subr.bf16.mxu0 0
      %2937 = vmatpush1.bf16.msra.mxu0 0
      %2938 = vmatprep.subr.bf16.mxu0 0
      %2939 = vmatpush1.bf16.msra.mxu0 0
      %2940 = vmatprep.subr.bf16.mxu0 0
      %2941 = vmatpush1.bf16.msra.mxu0 0
      %2942 = vmatprep.mubr.bf16.mxu0 0
      %2943 = vmatmul.mubr.bf16.gmra.mrb[0].mxu0 %v2905
      %v2944 = vpop.f32.mrb[0].mxu0
      %v2945 = vadd.f32 0.0, %v2944
      %v2946 = vpop.f32.mrb[0].mxu0
      %v2947 = vpop.f32.mrb[0].mxu0
      %v2948 = vpop.f32.mrb[0].mxu0
      %2949 = vdwg.mxu0
      %v2950 = vcombine.high %v2899, 0.0
      %v2952 = vunpack.c.l.s4 1983009808
      %v2953 = vunpack.c.0.s8 %v2952
      %v2954 = vlaneseq
      %v2955 = vshrl.u32 %v2954, 7
      %v2956 = vsub.s32 %v2953, %v2955
      %v2957 = vrot.slane %v2899, %v2956
      %v2959 = vunpack.c.l.s4 1983009808
      %v2960 = vunpack.c.0.s8 %v2959
      %v2961 = vlaneseq
      %v2962 = vshrl.u32 %v2961, 7
      %v2963 = vsub.s32 %v2960, %v2962
      %v2964 = vrot.slane %v2950, %v2963
      %v2965 = vcombine.high %v2945, 0.0
      %v2967 = vunpack.c.l.s4 1983009808
      %v2968 = vunpack.c.0.s8 %v2967
      %v2969 = vlaneseq
      %v2970 = vshrl.u32 %v2969, 7
      %v2971 = vsub.s32 %v2968, %v2970
      %v2972 = vrot.slane %v2945, %v2971
      %v2974 = vunpack.c.l.s4 1983009808
      %v2975 = vunpack.c.0.s8 %v2974
      %v2976 = vlaneseq
      %v2977 = vshrl.u32 %v2976, 7
      %v2978 = vsub.s32 %v2975, %v2977
      %v2979 = vrot.slane %v2965, %v2978
      %v2980 = vcombine.low %v2957, %v2972
      %v2981 = vcombine.high %v2957, %v2972
      %v2983 = vunpack.c.l.s4 1934713408
      %v2984 = vunpack.c.0.s8 %v2983
      %v2985 = vlaneseq
      %v2986 = vshrl.u32 %v2985, 7
      %v2987 = vsub.s32 %v2984, %v2986
      %v2988 = vrot.slane %v2980, %v2987
      %v2990 = vunpack.c.l.s4 1934713408
      %v2991 = vunpack.c.0.s8 %v2990
      %v2992 = vlaneseq
      %v2993 = vshrl.u32 %v2992, 7
      %v2994 = vsub.s32 %v2991, %v2993
      %v2995 = vrot.slane %v2981, %v2994
      %v2996 = vcombine.low %v2964, %v2979
      %v2997 = vcombine.high %v2964, %v2979
      %v2999 = vunpack.c.l.s4 1934713408
      %v3000 = vunpack.c.0.s8 %v2999
      %v3001 = vlaneseq
      %v3002 = vshrl.u32 %v3001, 7
      %v3003 = vsub.s32 %v3000, %v3002
      %v3004 = vrot.slane %v2996, %v3003
      %v3006 = vunpack.c.l.s4 1934713408
      %v3007 = vunpack.c.0.s8 %v3006
      %v3008 = vlaneseq
      %v3009 = vshrl.u32 %v3008, 7
      %v3010 = vsub.s32 %v3007, %v3009
      %v3011 = vrot.slane %v2997, %v3010
      %v3012 = vcombine.high %v2988, 0.0
      %v3013 = vcombine.high %v2995, 0.0
      %v3014 = vcombine.high %v3004, 0.0
      %v3015 = vcombine.high %v3011, 0.0
      %v3016 = vcombine.low %v2988, %v2995
      %v3018 = vunpack.c.l.s4 1983009808
      %v3019 = vunpack.c.0.s8 %v3018
      %v3020 = vlaneseq
      %v3021 = vshrl.u32 %v3020, 7
      %v3022 = vsub.s32 %v3019, %v3021
      %v3023 = vrot.slane %v3016, %v3022
      %v3024 = vcombine.low %v3012, %v3013
      %v3026 = vunpack.c.l.s4 1983009808
      %v3027 = vunpack.c.0.s8 %v3026
      %v3028 = vlaneseq
      %v3029 = vshrl.u32 %v3028, 7
      %v3030 = vsub.s32 %v3027, %v3029
      %v3031 = vrot.slane %v3024, %v3030
      %v3032 = vcombine.low %v3004, %v3011
      %v3034 = vunpack.c.l.s4 1983009808
      %v3035 = vunpack.c.0.s8 %v3034
      %v3036 = vlaneseq
      %v3037 = vshrl.u32 %v3036, 7
      %v3038 = vsub.s32 %v3035, %v3037
      %v3039 = vrot.slane %v3032, %v3038
      %v3040 = vcombine.low %v3014, %v3015
      %v3042 = vunpack.c.l.s4 1983009808
      %v3043 = vunpack.c.0.s8 %v3042
      %v3044 = vlaneseq
      %v3045 = vshrl.u32 %v3044, 7
      %v3046 = vsub.s32 %v3043, %v3045
      %v3047 = vrot.slane %v3040, %v3046
      %v3048 = vcombine.low %v3023, %v3031
      %v3050 = vunpack.c.l.s4 1934713408
      %v3051 = vunpack.c.0.s8 %v3050
      %v3052 = vlaneseq
      %v3053 = vshrl.u32 %v3052, 7
      %v3054 = vsub.s32 %v3051, %v3053
      %v3055 = vrot.slane %v3048, %v3054
      %v3056 = vcombine.low %v3039, %v3047
      %v3058 = vunpack.c.l.s4 1934713408
      %v3059 = vunpack.c.0.s8 %v3058
      %v3060 = vlaneseq
      %v3061 = vshrl.u32 %v3060, 7
      %v3062 = vsub.s32 %v3059, %v3061
      %v3063 = vrot.slane %v3056, %v3062
      %v3064 = vcombine.low %v3055, %v3063
      %v3065 = vcombine.high %v3055, %v3063
      %3067 = vrot.lane.b32.xlu0 %v3065, 16
      %v3068 = vpop.permute.xlu0 %3067
      %v3070 = vsel %vm1035, %v3064, %v3068
      %v3071 = vpack.c.bf16 %v3070, %v3070
      %3072 = vst.msk [vmem:[#allocation4] sm:$0xf] %vm1370, %v3071
      %3074 = vrot.lane.b32.xlu0 %v2375, 112
      %v3075 = vpop.permute.xlu0 %3074
      %v3077 = vcombine.high %v2375, 0.0
      %v3079 = vunpack.c.l.s4 1983009808
      %v3080 = vunpack.c.0.s8 %v3079
      %v3081 = vlaneseq
      %v3082 = vshrl.u32 %v3081, 7
      %v3083 = vsub.s32 %v3080, %v3082
      %v3084 = vrot.slane %v2375, %v3083
      %v3086 = vunpack.c.l.s4 1983009808
      %v3087 = vunpack.c.0.s8 %v3086
      %v3088 = vlaneseq
      %v3089 = vshrl.u32 %v3088, 7
      %v3090 = vsub.s32 %v3087, %v3089
      %v3091 = vrot.slane %v3077, %v3090
      %v3092 = vcombine.high %v3075, 0.0
      %v3094 = vunpack.c.l.s4 1983009808
      %v3095 = vunpack.c.0.s8 %v3094
      %v3096 = vlaneseq
      %v3097 = vshrl.u32 %v3096, 7
      %v3098 = vsub.s32 %v3095, %v3097
      %v3099 = vrot.slane %v3075, %v3098
      %v3101 = vunpack.c.l.s4 1983009808
      %v3102 = vunpack.c.0.s8 %v3101
      %v3103 = vlaneseq
      %v3104 = vshrl.u32 %v3103, 7
      %v3105 = vsub.s32 %v3102, %v3104
      %v3106 = vrot.slane %v3092, %v3105
      %v3107 = vcombine.low %v3084, %v3099
      %v3108 = vcombine.high %v3084, %v3099
      %v3110 = vunpack.c.l.s4 1934713408
      %v3111 = vunpack.c.0.s8 %v3110
      %v3112 = vlaneseq
      %v3113 = vshrl.u32 %v3112, 7
      %v3114 = vsub.s32 %v3111, %v3113
      %v3115 = vrot.slane %v3107, %v3114
      %v3117 = vunpack.c.l.s4 1934713408
      %v3118 = vunpack.c.0.s8 %v3117
      %v3119 = vlaneseq
      %v3120 = vshrl.u32 %v3119, 7
      %v3121 = vsub.s32 %v3118, %v3120
      %v3122 = vrot.slane %v3108, %v3121
      %v3123 = vcombine.low %v3091, %v3106
      %v3124 = vcombine.high %v3091, %v3106
      %v3126 = vunpack.c.l.s4 1934713408
      %v3127 = vunpack.c.0.s8 %v3126
      %v3128 = vlaneseq
      %v3129 = vshrl.u32 %v3128, 7
      %v3130 = vsub.s32 %v3127, %v3129
      %v3131 = vrot.slane %v3123, %v3130
      %v3133 = vunpack.c.l.s4 1934713408
      %v3134 = vunpack.c.0.s8 %v3133
      %v3135 = vlaneseq
      %v3136 = vshrl.u32 %v3135, 7
      %v3137 = vsub.s32 %v3134, %v3136
      %v3138 = vrot.slane %v3124, %v3137
      %v3139 = vcombine.high %v3115, 0.0
      %v3140 = vcombine.high %v3122, 0.0
      %v3141 = vcombine.high %v3131, 0.0
      %v3142 = vcombine.high %v3138, 0.0
      %v3143 = vcombine.low %v3115, %v3122
      %v3145 = vunpack.c.l.s4 1983009808
      %v3146 = vunpack.c.0.s8 %v3145
      %v3147 = vlaneseq
      %v3148 = vshrl.u32 %v3147, 7
      %v3149 = vsub.s32 %v3146, %v3148
      %v3150 = vrot.slane %v3143, %v3149
      %v3151 = vcombine.low %v3139, %v3140
      %v3153 = vunpack.c.l.s4 1983009808
      %v3154 = vunpack.c.0.s8 %v3153
      %v3155 = vlaneseq
      %v3156 = vshrl.u32 %v3155, 7
      %v3157 = vsub.s32 %v3154, %v3156
      %v3158 = vrot.slane %v3151, %v3157
      %v3159 = vcombine.low %v3131, %v3138
      %v3161 = vunpack.c.l.s4 1983009808
      %v3162 = vunpack.c.0.s8 %v3161
      %v3163 = vlaneseq
      %v3164 = vshrl.u32 %v3163, 7
      %v3165 = vsub.s32 %v3162, %v3164
      %v3166 = vrot.slane %v3159, %v3165
      %v3167 = vcombine.low %v3141, %v3142
      %v3169 = vunpack.c.l.s4 1983009808
      %v3170 = vunpack.c.0.s8 %v3169
      %v3171 = vlaneseq
      %v3172 = vshrl.u32 %v3171, 7
      %v3173 = vsub.s32 %v3170, %v3172
      %v3174 = vrot.slane %v3167, %v3173
      %v3175 = vcombine.low %v3150, %v3158
      %v3177 = vunpack.c.l.s4 1934713408
      %v3178 = vunpack.c.0.s8 %v3177
      %v3179 = vlaneseq
      %v3180 = vshrl.u32 %v3179, 7
      %v3181 = vsub.s32 %v3178, %v3180
      %v3182 = vrot.slane %v3175, %v3181
      %v3183 = vcombine.low %v3166, %v3174
      %v3185 = vunpack.c.l.s4 1934713408
      %v3186 = vunpack.c.0.s8 %v3185
      %v3187 = vlaneseq
      %v3188 = vshrl.u32 %v3187, 7
      %v3189 = vsub.s32 %v3186, %v3188
      %v3190 = vrot.slane %v3183, %v3189
      %v3191 = vcombine.low %v3182, %v3190
      %v3192 = vcombine.high %v3182, %v3190
      %3194 = vrot.lane.b32.xlu0 %v2314, 112
      %v3195 = vpop.permute.xlu0 %3194
      %v3197 = vcombine.high %v2314, 0.0
      %v3199 = vunpack.c.l.s4 1983009808
      %v3200 = vunpack.c.0.s8 %v3199
      %v3201 = vlaneseq
      %v3202 = vshrl.u32 %v3201, 7
      %v3203 = vsub.s32 %v3200, %v3202
      %v3204 = vrot.slane %v2314, %v3203
      %v3206 = vunpack.c.l.s4 1983009808
      %v3207 = vunpack.c.0.s8 %v3206
      %v3208 = vlaneseq
      %v3209 = vshrl.u32 %v3208, 7
      %v3210 = vsub.s32 %v3207, %v3209
      %v3211 = vrot.slane %v3197, %v3210
      %v3212 = vcombine.high %v3195, 0.0
      %v3214 = vunpack.c.l.s4 1983009808
      %v3215 = vunpack.c.0.s8 %v3214
      %v3216 = vlaneseq
      %v3217 = vshrl.u32 %v3216, 7
      %v3218 = vsub.s32 %v3215, %v3217
      %v3219 = vrot.slane %v3195, %v3218
      %v3221 = vunpack.c.l.s4 1983009808
      %v3222 = vunpack.c.0.s8 %v3221
      %v3223 = vlaneseq
      %v3224 = vshrl.u32 %v3223, 7
      %v3225 = vsub.s32 %v3222, %v3224
      %v3226 = vrot.slane %v3212, %v3225
      %v3227 = vcombine.low %v3204, %v3219
      %v3228 = vcombine.high %v3204, %v3219
      %v3230 = vunpack.c.l.s4 1934713408
      %v3231 = vunpack.c.0.s8 %v3230
      %v3232 = vlaneseq
      %v3233 = vshrl.u32 %v3232, 7
      %v3234 = vsub.s32 %v3231, %v3233
      %v3235 = vrot.slane %v3227, %v3234
      %v3237 = vunpack.c.l.s4 1934713408
      %v3238 = vunpack.c.0.s8 %v3237
      %v3239 = vlaneseq
      %v3240 = vshrl.u32 %v3239, 7
      %v3241 = vsub.s32 %v3238, %v3240
      %v3242 = vrot.slane %v3228, %v3241
      %v3243 = vcombine.low %v3211, %v3226
      %v3244 = vcombine.high %v3211, %v3226
      %v3246 = vunpack.c.l.s4 1934713408
      %v3247 = vunpack.c.0.s8 %v3246
      %v3248 = vlaneseq
      %v3249 = vshrl.u32 %v3248, 7
      %v3250 = vsub.s32 %v3247, %v3249
      %v3251 = vrot.slane %v3243, %v3250
      %v3253 = vunpack.c.l.s4 1934713408
      %v3254 = vunpack.c.0.s8 %v3253
      %v3255 = vlaneseq
      %v3256 = vshrl.u32 %v3255, 7
      %v3257 = vsub.s32 %v3254, %v3256
      %v3258 = vrot.slane %v3244, %v3257
      %v3259 = vcombine.high %v3235, 0.0
      %v3260 = vcombine.high %v3242, 0.0
      %v3261 = vcombine.high %v3251, 0.0
      %v3262 = vcombine.high %v3258, 0.0
      %v3263 = vcombine.low %v3235, %v3242
      %v3265 = vunpack.c.l.s4 1983009808
      %v3266 = vunpack.c.0.s8 %v3265
      %v3267 = vlaneseq
      %v3268 = vshrl.u32 %v3267, 7
      %v3269 = vsub.s32 %v3266, %v3268
      %v3270 = vrot.slane %v3263, %v3269
      %v3271 = vcombine.low %v3259, %v3260
      %v3273 = vunpack.c.l.s4 1983009808
      %v3274 = vunpack.c.0.s8 %v3273
      %v3275 = vlaneseq
      %v3276 = vshrl.u32 %v3275, 7
      %v3277 = vsub.s32 %v3274, %v3276
      %v3278 = vrot.slane %v3271, %v3277
      %v3279 = vcombine.low %v3251, %v3258
      %v3281 = vunpack.c.l.s4 1983009808
      %v3282 = vunpack.c.0.s8 %v3281
      %v3283 = vlaneseq
      %v3284 = vshrl.u32 %v3283, 7
      %v3285 = vsub.s32 %v3282, %v3284
      %v3286 = vrot.slane %v3279, %v3285
      %v3287 = vcombine.low %v3261, %v3262
      %v3289 = vunpack.c.l.s4 1983009808
      %v3290 = vunpack.c.0.s8 %v3289
      %v3291 = vlaneseq
      %v3292 = vshrl.u32 %v3291, 7
      %v3293 = vsub.s32 %v3290, %v3292
      %v3294 = vrot.slane %v3287, %v3293
      %v3295 = vcombine.low %v3270, %v3278
      %v3297 = vunpack.c.l.s4 1934713408
      %v3298 = vunpack.c.0.s8 %v3297
      %v3299 = vlaneseq
      %v3300 = vshrl.u32 %v3299, 7
      %v3301 = vsub.s32 %v3298, %v3300
      %v3302 = vrot.slane %v3295, %v3301
      %v3303 = vcombine.low %v3286, %v3294
      %v3305 = vunpack.c.l.s4 1934713408
      %v3306 = vunpack.c.0.s8 %v3305
      %v3307 = vlaneseq
      %v3308 = vshrl.u32 %v3307, 7
      %v3309 = vsub.s32 %v3306, %v3308
      %v3310 = vrot.slane %v3303, %v3309
      %v3311 = vcombine.low %v3302, %v3310
      %v3312 = vcombine.high %v3302, %v3310
      %3314 = vrot.lane.b32.xlu0 %v2371, 112
      %v3315 = vpop.permute.xlu0 %3314
      %v3317 = vcombine.high %v2371, 0.0
      %v3319 = vunpack.c.l.s4 1983009808
      %v3320 = vunpack.c.0.s8 %v3319
      %v3321 = vlaneseq
      %v3322 = vshrl.u32 %v3321, 7
      %v3323 = vsub.s32 %v3320, %v3322
      %v3324 = vrot.slane %v2371, %v3323
      %v3326 = vunpack.c.l.s4 1983009808
      %v3327 = vunpack.c.0.s8 %v3326
      %v3328 = vlaneseq
      %v3329 = vshrl.u32 %v3328, 7
      %v3330 = vsub.s32 %v3327, %v3329
      %v3331 = vrot.slane %v3317, %v3330
      %v3332 = vcombine.high %v3315, 0.0
      %v3334 = vunpack.c.l.s4 1983009808
      %v3335 = vunpack.c.0.s8 %v3334
      %v3336 = vlaneseq
      %v3337 = vshrl.u32 %v3336, 7
      %v3338 = vsub.s32 %v3335, %v3337
      %v3339 = vrot.slane %v3315, %v3338
      %v3341 = vunpack.c.l.s4 1983009808
      %v3342 = vunpack.c.0.s8 %v3341
      %v3343 = vlaneseq
      %v3344 = vshrl.u32 %v3343, 7
      %v3345 = vsub.s32 %v3342, %v3344
      %v3346 = vrot.slane %v3332, %v3345
      %v3347 = vcombine.low %v3324, %v3339
      %v3348 = vcombine.high %v3324, %v3339
      %v3350 = vunpack.c.l.s4 1934713408
      %v3351 = vunpack.c.0.s8 %v3350
      %v3352 = vlaneseq
      %v3353 = vshrl.u32 %v3352, 7
      %v3354 = vsub.s32 %v3351, %v3353
      %v3355 = vrot.slane %v3347, %v3354
      %v3357 = vunpack.c.l.s4 1934713408
      %v3358 = vunpack.c.0.s8 %v3357
      %v3359 = vlaneseq
      %v3360 = vshrl.u32 %v3359, 7
      %v3361 = vsub.s32 %v3358, %v3360
      %v3362 = vrot.slane %v3348, %v3361
      %v3363 = vcombine.low %v3331, %v3346
      %v3364 = vcombine.high %v3331, %v3346
      %v3366 = vunpack.c.l.s4 1934713408
      %v3367 = vunpack.c.0.s8 %v3366
      %v3368 = vlaneseq
      %v3369 = vshrl.u32 %v3368, 7
      %v3370 = vsub.s32 %v3367, %v3369
      %v3371 = vrot.slane %v3363, %v3370
      %v3373 = vunpack.c.l.s4 1934713408
      %v3374 = vunpack.c.0.s8 %v3373
      %v3375 = vlaneseq
      %v3376 = vshrl.u32 %v3375, 7
      %v3377 = vsub.s32 %v3374, %v3376
      %v3378 = vrot.slane %v3364, %v3377
      %v3379 = vcombine.high %v3355, 0.0
      %v3380 = vcombine.high %v3362, 0.0
      %v3381 = vcombine.high %v3371, 0.0
      %v3382 = vcombine.high %v3378, 0.0
      %v3383 = vcombine.low %v3355, %v3362
      %v3385 = vunpack.c.l.s4 1983009808
      %v3386 = vunpack.c.0.s8 %v3385
      %v3387 = vlaneseq
      %v3388 = vshrl.u32 %v3387, 7
      %v3389 = vsub.s32 %v3386, %v3388
      %v3390 = vrot.slane %v3383, %v3389
      %v3391 = vcombine.low %v3379, %v3380
      %v3393 = vunpack.c.l.s4 1983009808
      %v3394 = vunpack.c.0.s8 %v3393
      %v3395 = vlaneseq
      %v3396 = vshrl.u32 %v3395, 7
      %v3397 = vsub.s32 %v3394, %v3396
      %v3398 = vrot.slane %v3391, %v3397
      %v3399 = vcombine.low %v3371, %v3378
      %v3401 = vunpack.c.l.s4 1983009808
      %v3402 = vunpack.c.0.s8 %v3401
      %v3403 = vlaneseq
      %v3404 = vshrl.u32 %v3403, 7
      %v3405 = vsub.s32 %v3402, %v3404
      %v3406 = vrot.slane %v3399, %v3405
      %v3407 = vcombine.low %v3381, %v3382
      %v3409 = vunpack.c.l.s4 1983009808
      %v3410 = vunpack.c.0.s8 %v3409
      %v3411 = vlaneseq
      %v3412 = vshrl.u32 %v3411, 7
      %v3413 = vsub.s32 %v3410, %v3412
      %v3414 = vrot.slane %v3407, %v3413
      %v3415 = vcombine.low %v3390, %v3398
      %v3417 = vunpack.c.l.s4 1934713408
      %v3418 = vunpack.c.0.s8 %v3417
      %v3419 = vlaneseq
      %v3420 = vshrl.u32 %v3419, 7
      %v3421 = vsub.s32 %v3418, %v3420
      %v3422 = vrot.slane %v3415, %v3421
      %v3423 = vcombine.low %v3406, %v3414
      %v3425 = vunpack.c.l.s4 1934713408
      %v3426 = vunpack.c.0.s8 %v3425
      %v3427 = vlaneseq
      %v3428 = vshrl.u32 %v3427, 7
      %v3429 = vsub.s32 %v3426, %v3428
      %v3430 = vrot.slane %v3423, %v3429
      %v3431 = vcombine.low %v3422, %v3430
      %v3432 = vcombine.high %v3422, %v3430
      %v3433 = vpack.c.bf16 %v3191, %v3191
      %v3434 = vpack.c.bf16 %v3192, %v3192
      %v3435 = vpack.c.bf16 %v3311, %v3311
      %v3436 = vpack.c.bf16 %v3312, %v3312
      %v3438 = vsel %vm1035, %v3433, 0
      %v3441 = vsel %vm1035, %v3435, 0
      %3443 = vmatprep.subr.bf16.mxu0 0
      %3444 = vmatpush1.bf16.xpose.msra.mxu0 %v3441
      %3445 = vmatprep.subr.bf16.mxu0 0
      %3446 = vmatpush1.bf16.xpose.msra.mxu0 0
      %3447 = vmatprep.subr.bf16.mxu0 0
      %3448 = vmatpush1.bf16.xpose.msra.mxu0 0
      %3449 = vmatprep.subr.bf16.mxu0 0
      %3450 = vmatpush1.bf16.xpose.msra.mxu0 0
      %3451 = vmatprep.subr.bf16.mxu0 0
      %3452 = vmatpush1.bf16.xpose.msra.mxu0 0
      %3453 = vmatprep.subr.bf16.mxu0 0
      %3454 = vmatpush1.bf16.xpose.msra.mxu0 0
      %3455 = vmatprep.subr.bf16.mxu0 0
      %3456 = vmatpush1.bf16.xpose.msra.mxu0 0
      %3457 = vmatprep.subr.bf16.mxu0 0
      %3458 = vmatpush1.bf16.xpose.msra.mxu0 0
      %3459 = vmatprep.subr.bf16.mxu0 0
      %3460 = vmatpush1.bf16.xpose.msra.mxu0 0
      %3461 = vmatprep.subr.bf16.mxu0 0
      %3462 = vmatpush1.bf16.xpose.msra.mxu0 0
      %3463 = vmatprep.subr.bf16.mxu0 0
      %3464 = vmatpush1.bf16.xpose.msra.mxu0 0
      %3465 = vmatprep.subr.bf16.mxu0 0
      %3466 = vmatpush1.bf16.xpose.msra.mxu0 0
      %3467 = vmatprep.subr.bf16.mxu0 0
      %3468 = vmatpush1.bf16.xpose.msra.mxu0 0
      %3469 = vmatprep.subr.bf16.mxu0 0
      %3470 = vmatpush1.bf16.xpose.msra.mxu0 0
      %3471 = vmatprep.subr.bf16.mxu0 0
      %3472 = vmatpush1.bf16.xpose.msra.mxu0 0
      %3473 = vmatprep.subr.bf16.mxu0 0
      %3474 = vmatpush1.bf16.xpose.msra.mxu0 0
      %3475 = vmatprep.mubr.bf16.mxu0 0
      %3476 = vmatmul.mubr.bf16.gmra.mrb[0].mxu0 %v3438
      %v3477 = vpop.f32.mrb[0].mxu0
      %v3478 = vadd.f32 0.0, %v3477
      %v3479 = vpop.f32.mrb[0].mxu0
      %v3480 = vpop.f32.mrb[0].mxu0
      %v3481 = vpop.f32.mrb[0].mxu0
      %3482 = vdwg.mxu0
      %v3484 = vsel %vm1035, %v3434, 0
      %v3487 = vsel %vm1035, %v3436, 0
      %3489 = vmatprep.subr.bf16.mxu0 0
      %3490 = vmatpush1.bf16.xpose.msra.mxu0 %v3487
      %3491 = vmatprep.subr.bf16.mxu0 0
      %3492 = vmatpush1.bf16.xpose.msra.mxu0 0
      %3493 = vmatprep.subr.bf16.mxu0 0
      %3494 = vmatpush1.bf16.xpose.msra.mxu0 0
      %3495 = vmatprep.subr.bf16.mxu0 0
      %3496 = vmatpush1.bf16.xpose.msra.mxu0 0
      %3497 = vmatprep.subr.bf16.mxu0 0
      %3498 = vmatpush1.bf16.xpose.msra.mxu0 0
      %3499 = vmatprep.subr.bf16.mxu0 0
      %3500 = vmatpush1.bf16.xpose.msra.mxu0 0
      %3501 = vmatprep.subr.bf16.mxu0 0
      %3502 = vmatpush1.bf16.xpose.msra.mxu0 0
      %3503 = vmatprep.subr.bf16.mxu0 0
      %3504 = vmatpush1.bf16.xpose.msra.mxu0 0
      %3505 = vmatprep.subr.bf16.mxu0 0
      %3506 = vmatpush1.bf16.xpose.msra.mxu0 0
      %3507 = vmatprep.subr.bf16.mxu0 0
      %3508 = vmatpush1.bf16.xpose.msra.mxu0 0
      %3509 = vmatprep.subr.bf16.mxu0 0
      %3510 = vmatpush1.bf16.xpose.msra.mxu0 0
      %3511 = vmatprep.subr.bf16.mxu0 0
      %3512 = vmatpush1.bf16.xpose.msra.mxu0 0
      %3513 = vmatprep.subr.bf16.mxu0 0
      %3514 = vmatpush1.bf16.xpose.msra.mxu0 0
      %3515 = vmatprep.subr.bf16.mxu0 0
      %3516 = vmatpush1.bf16.xpose.msra.mxu0 0
      %3517 = vmatprep.subr.bf16.mxu0 0
      %3518 = vmatpush1.bf16.xpose.msra.mxu0 0
      %3519 = vmatprep.subr.bf16.mxu0 0
      %3520 = vmatpush1.bf16.xpose.msra.mxu0 0
      %3521 = vmatprep.mubr.bf16.mxu0 0
      %3522 = vmatmul.mubr.bf16.gmra.mrb[0].mxu0 %v3484
      %v3523 = vpop.f32.mrb[0].mxu0
      %v3524 = vadd.f32 0.0, %v3523
      %v3525 = vpop.f32.mrb[0].mxu0
      %v3526 = vpop.f32.mrb[0].mxu0
      %v3527 = vpop.f32.mrb[0].mxu0
      %3528 = vdwg.mxu0
      %v3529 = vsel %vm1128, %v3478, -inf
      %3530 = vmax.xlane.f32.xlu0 %v3529
      %v3531 = vpop.xlane.xlu0 %3530
      %v3532 = vsel %vm1128, %v3524, -inf
      %3533 = vmax.xlane.f32.xlu0 %v3532
      %v3534 = vpop.xlane.xlu0 %3533
      %v3535 = vsub.f32 %v3478, %v3531
      %v3536 = vsub.f32 %v3524, %v3534
      %v3537 = vmul.f32 %v3535, 1.442695
      %v3538 = vpow.pop %v3537
      %v3539 = vmul.f32 %v3536, 1.442695
      %v3540 = vpow.pop %v3539
      %v3541 = vsel %vm1128, %v3538, 0.0
      %3542 = vadd.xlane.f32.xlu0 %v3541
      %v3543 = vpop.xlane.xlu0 %3542
      %v3544 = vsel %vm1128, %v3540, 0.0
      %3545 = vadd.xlane.f32.xlu0 %v3544
      %v3546 = vpop.xlane.xlu0 %3545
      %v3547 = vrcp.pop %v3543
      %v3548 = vmul.f32 %v3538, %v3547
      %v3549 = vrcp.pop %v3546
      %v3550 = vmul.f32 %v3540, %v3549
      %v3551 = vpack.c.bf16 %v3548, %v3548
      %v3552 = vpack.c.bf16 %v3550, %v3550
      %v3553 = vpack.c.bf16 %v3431, %v3431
      %v3554 = vpack.c.bf16 %v3432, %v3432
      %v3556 = vsel %vm1128, %v3551, 0
      %v3559 = vsel %vm1158, %v3553, 0
      %3561 = vmatprep.subr.bf16.mxu0 0
      %3562 = vmatpush1.bf16.msra.mxu0 %v3559
      %3563 = vmatprep.subr.bf16.mxu0 0
      %3564 = vmatpush1.bf16.msra.mxu0 0
      %3565 = vmatprep.subr.bf16.mxu0 0
      %3566 = vmatpush1.bf16.msra.mxu0 0
      %3567 = vmatprep.subr.bf16.mxu0 0
      %3568 = vmatpush1.bf16.msra.mxu0 0
      %3569 = vmatprep.subr.bf16.mxu0 0
      %3570 = vmatpush1.bf16.msra.mxu0 0
      %3571 = vmatprep.subr.bf16.mxu0 0
      %3572 = vmatpush1.bf16.msra.mxu0 0
      %3573 = vmatprep.subr.bf16.mxu0 0
      %3574 = vmatpush1.bf16.msra.mxu0 0
      %3575 = vmatprep.subr.bf16.mxu0 0
      %3576 = vmatpush1.bf16.msra.mxu0 0
      %3577 = vmatprep.subr.bf16.mxu0 0
      %3578 = vmatpush1.bf16.msra.mxu0 0
      %3579 = vmatprep.subr.bf16.mxu0 0
      %3580 = vmatpush1.bf16.msra.mxu0 0
      %3581 = vmatprep.subr.bf16.mxu0 0
      %3582 = vmatpush1.bf16.msra.mxu0 0
      %3583 = vmatprep.subr.bf16.mxu0 0
      %3584 = vmatpush1.bf16.msra.mxu0 0
      %3585 = vmatprep.subr.bf16.mxu0 0
      %3586 = vmatpush1.bf16.msra.mxu0 0
      %3587 = vmatprep.subr.bf16.mxu0 0
      %3588 = vmatpush1.bf16.msra.mxu0 0
      %3589 = vmatprep.subr.bf16.mxu0 0
      %3590 = vmatpush1.bf16.msra.mxu0 0
      %3591 = vmatprep.subr.bf16.mxu0 0
      %3592 = vmatpush1.bf16.msra.mxu0 0
      %3593 = vmatprep.mubr.bf16.mxu0 0
      %3594 = vmatmul.mubr.bf16.gmra.mrb[0].mxu0 %v3556
      %v3595 = vpop.f32.mrb[0].mxu0
      %v3596 = vadd.f32 0.0, %v3595
      %v3597 = vpop.f32.mrb[0].mxu0
      %v3598 = vpop.f32.mrb[0].mxu0
      %v3599 = vpop.f32.mrb[0].mxu0
      %3600 = vdwg.mxu0
      %v3602 = vsel %vm1128, %v3552, 0
      %v3605 = vsel %vm1158, %v3554, 0
      %3607 = vmatprep.subr.bf16.mxu0 0
      %3608 = vmatpush1.bf16.msra.mxu0 %v3605
      %3609 = vmatprep.subr.bf16.mxu0 0
      %3610 = vmatpush1.bf16.msra.mxu0 0
      %3611 = vmatprep.subr.bf16.mxu0 0
      %3612 = vmatpush1.bf16.msra.mxu0 0
      %3613 = vmatprep.subr.bf16.mxu0 0
      %3614 = vmatpush1.bf16.msra.mxu0 0
      %3615 = vmatprep.subr.bf16.mxu0 0
      %3616 = vmatpush1.bf16.msra.mxu0 0
      %3617 = vmatprep.subr.bf16.mxu0 0
      %3618 = vmatpush1.bf16.msra.mxu0 0
      %3619 = vmatprep.subr.bf16.mxu0 0
      %3620 = vmatpush1.bf16.msra.mxu0 0
      %3621 = vmatprep.subr.bf16.mxu0 0
      %3622 = vmatpush1.bf16.msra.mxu0 0
      %3623 = vmatprep.subr.bf16.mxu0 0
      %3624 = vmatpush1.bf16.msra.mxu0 0
      %3625 = vmatprep.subr.bf16.mxu0 0
      %3626 = vmatpush1.bf16.msra.mxu0 0
      %3627 = vmatprep.subr.bf16.mxu0 0
      %3628 = vmatpush1.bf16.msra.mxu0 0
      %3629 = vmatprep.subr.bf16.mxu0 0
      %3630 = vmatpush1.bf16.msra.mxu0 0
      %3631 = vmatprep.subr.bf16.mxu0 0
      %3632 = vmatpush1.bf16.msra.mxu0 0
      %3633 = vmatprep.subr.bf16.mxu0 0
      %3634 = vmatpush1.bf16.msra.mxu0 0
      %3635 = vmatprep.subr.bf16.mxu0 0
      %3636 = vmatpush1.bf16.msra.mxu0 0
      %3637 = vmatprep.subr.bf16.mxu0 0
      %3638 = vmatpush1.bf16.msra.mxu0 0
      %3639 = vmatprep.mubr.bf16.mxu0 0
      %3640 = vmatmul.mubr.bf16.gmra.mrb[0].mxu0 %v3602
      %v3641 = vpop.f32.mrb[0].mxu0
      %v3642 = vadd.f32 0.0, %v3641
      %v3643 = vpop.f32.mrb[0].mxu0
      %v3644 = vpop.f32.mrb[0].mxu0
      %v3645 = vpop.f32.mrb[0].mxu0
      %3646 = vdwg.mxu0
      %v3647 = vcombine.high %v3596, 0.0
      %v3649 = vunpack.c.l.s4 1983009808
      %v3650 = vunpack.c.0.s8 %v3649
      %v3651 = vlaneseq
      %v3652 = vshrl.u32 %v3651, 7
      %v3653 = vsub.s32 %v3650, %v3652
      %v3654 = vrot.slane %v3596, %v3653
      %v3656 = vunpack.c.l.s4 1983009808
      %v3657 = vunpack.c.0.s8 %v3656
      %v3658 = vlaneseq
      %v3659 = vshrl.u32 %v3658, 7
      %v3660 = vsub.s32 %v3657, %v3659
      %v3661 = vrot.slane %v3647, %v3660
      %v3662 = vcombine.high %v3642, 0.0
      %v3664 = vunpack.c.l.s4 1983009808
      %v3665 = vunpack.c.0.s8 %v3664
      %v3666 = vlaneseq
      %v3667 = vshrl.u32 %v3666, 7
      %v3668 = vsub.s32 %v3665, %v3667
      %v3669 = vrot.slane %v3642, %v3668
      %v3671 = vunpack.c.l.s4 1983009808
      %v3672 = vunpack.c.0.s8 %v3671
      %v3673 = vlaneseq
      %v3674 = vshrl.u32 %v3673, 7
      %v3675 = vsub.s32 %v3672, %v3674
      %v3676 = vrot.slane %v3662, %v3675
      %v3677 = vcombine.low %v3654, %v3669
      %v3678 = vcombine.high %v3654, %v3669
      %v3680 = vunpack.c.l.s4 1934713408
      %v3681 = vunpack.c.0.s8 %v3680
      %v3682 = vlaneseq
      %v3683 = vshrl.u32 %v3682, 7
      %v3684 = vsub.s32 %v3681, %v3683
      %v3685 = vrot.slane %v3677, %v3684
      %v3687 = vunpack.c.l.s4 1934713408
      %v3688 = vunpack.c.0.s8 %v3687
      %v3689 = vlaneseq
      %v3690 = vshrl.u32 %v3689, 7
      %v3691 = vsub.s32 %v3688, %v3690
      %v3692 = vrot.slane %v3678, %v3691
      %v3693 = vcombine.low %v3661, %v3676
      %v3694 = vcombine.high %v3661, %v3676
      %v3696 = vunpack.c.l.s4 1934713408
      %v3697 = vunpack.c.0.s8 %v3696
      %v3698 = vlaneseq
      %v3699 = vshrl.u32 %v3698, 7
      %v3700 = vsub.s32 %v3697, %v3699
      %v3701 = vrot.slane %v3693, %v3700
      %v3703 = vunpack.c.l.s4 1934713408
      %v3704 = vunpack.c.0.s8 %v3703
      %v3705 = vlaneseq
      %v3706 = vshrl.u32 %v3705, 7
      %v3707 = vsub.s32 %v3704, %v3706
      %v3708 = vrot.slane %v3694, %v3707
      %v3709 = vcombine.high %v3685, 0.0
      %v3710 = vcombine.high %v3692, 0.0
      %v3711 = vcombine.high %v3701, 0.0
      %v3712 = vcombine.high %v3708, 0.0
      %v3713 = vcombine.low %v3685, %v3692
      %v3715 = vunpack.c.l.s4 1983009808
      %v3716 = vunpack.c.0.s8 %v3715
      %v3717 = vlaneseq
      %v3718 = vshrl.u32 %v3717, 7
      %v3719 = vsub.s32 %v3716, %v3718
      %v3720 = vrot.slane %v3713, %v3719
      %v3721 = vcombine.low %v3709, %v3710
      %v3723 = vunpack.c.l.s4 1983009808
      %v3724 = vunpack.c.0.s8 %v3723
      %v3725 = vlaneseq
      %v3726 = vshrl.u32 %v3725, 7
      %v3727 = vsub.s32 %v3724, %v3726
      %v3728 = vrot.slane %v3721, %v3727
      %v3729 = vcombine.low %v3701, %v3708
      %v3731 = vunpack.c.l.s4 1983009808
      %v3732 = vunpack.c.0.s8 %v3731
      %v3733 = vlaneseq
      %v3734 = vshrl.u32 %v3733, 7
      %v3735 = vsub.s32 %v3732, %v3734
      %v3736 = vrot.slane %v3729, %v3735
      %v3737 = vcombine.low %v3711, %v3712
      %v3739 = vunpack.c.l.s4 1983009808
      %v3740 = vunpack.c.0.s8 %v3739
      %v3741 = vlaneseq
      %v3742 = vshrl.u32 %v3741, 7
      %v3743 = vsub.s32 %v3740, %v3742
      %v3744 = vrot.slane %v3737, %v3743
      %v3745 = vcombine.low %v3720, %v3728
      %v3747 = vunpack.c.l.s4 1934713408
      %v3748 = vunpack.c.0.s8 %v3747
      %v3749 = vlaneseq
      %v3750 = vshrl.u32 %v3749, 7
      %v3751 = vsub.s32 %v3748, %v3750
      %v3752 = vrot.slane %v3745, %v3751
      %v3753 = vcombine.low %v3736, %v3744
      %v3755 = vunpack.c.l.s4 1934713408
      %v3756 = vunpack.c.0.s8 %v3755
      %v3757 = vlaneseq
      %v3758 = vshrl.u32 %v3757, 7
      %v3759 = vsub.s32 %v3756, %v3758
      %v3760 = vrot.slane %v3753, %v3759
      %v3761 = vcombine.low %v3752, %v3760
      %v3762 = vcombine.high %v3752, %v3760
      %3764 = vrot.lane.b32.xlu0 %v3762, 16
      %v3765 = vpop.permute.xlu0 %3764
      %v3767 = vsel %vm1035, %v3761, %v3765
      %v3768 = vpack.c.bf16 %v3767, %v3767
      %v3770 = vrot.slane %v3768, 4
      %3772 = vst.msk [vmem:[#allocation4] sm:$0xf0] %vm2072, %v3770
      %v3773 = vld [vmem:[#allocation4] sm:$0xff]
      %v3774 = vlaneseq
      %v3775 = vshrl.u32 %v3774, 7
      %v3776 = vsub.s32 3, %v3775
      %v3777 = vrot.slane %v429, %v3776
      %v3782 = vunpack.c.l.b16 %v2191
      %v3783 = vunpack.c.l.b16 %v2192
      %v3784 = vunpack.c.l.b16 %v2193
      %v3785 = vunpack.c.l.b16 %v2194
      %v3786 = vpack.c.b16 %v3783, %v3782
      %v3787 = vpack.c.b16 %v3785, %v3784
      %v3791 = vsel %vm434, %v3773, 0
      %3793 = vmatprep.subr.bf16.mxu0 0
      %3794 = vmatpush1.bf16.msra.mxu0 %v3786
      %3795 = vmatprep.subr.bf16.mxu0 0
      %3796 = vmatpush1.bf16.msra.mxu0 %v3787
      %3797 = vmatprep.subr.bf16.mxu0 0
      %3798 = vmatpush1.bf16.msra.mxu0 0
      %3799 = vmatprep.subr.bf16.mxu0 0
      %3800 = vmatpush1.bf16.msra.mxu0 0
      %3801 = vmatprep.subr.bf16.mxu0 0
      %3802 = vmatpush1.bf16.msra.mxu0 0
      %3803 = vmatprep.subr.bf16.mxu0 0
      %3804 = vmatpush1.bf16.msra.mxu0 0
      %3805 = vmatprep.subr.bf16.mxu0 0
      %3806 = vmatpush1.bf16.msra.mxu0 0
      %3807 = vmatprep.subr.bf16.mxu0 0
      %3808 = vmatpush1.bf16.msra.mxu0 0
      %3809 = vmatprep.subr.bf16.mxu0 0
      %3810 = vmatpush1.bf16.msra.mxu0 0
      %3811 = vmatprep.subr.bf16.mxu0 0
      %3812 = vmatpush1.bf16.msra.mxu0 0
      %3813 = vmatprep.subr.bf16.mxu0 0
      %3814 = vmatpush1.bf16.msra.mxu0 0
      %3815 = vmatprep.subr.bf16.mxu0 0
      %3816 = vmatpush1.bf16.msra.mxu0 0
      %3817 = vmatprep.subr.bf16.mxu0 0
      %3818 = vmatpush1.bf16.msra.mxu0 0
      %3819 = vmatprep.subr.bf16.mxu0 0
      %3820 = vmatpush1.bf16.msra.mxu0 0
      %3821 = vmatprep.subr.bf16.mxu0 0
      %3822 = vmatpush1.bf16.msra.mxu0 0
      %3823 = vmatprep.subr.bf16.mxu0 0
      %3824 = vmatpush1.bf16.msra.mxu0 0
      %3825 = vmatprep.mubr.bf16.mxu0 0
      %3826 = vmatmul.mubr.bf16.gmra.mrb[0].mxu0 %v3791
      %v3827 = vpop.f32.mrb[0].mxu0
      %v3828 = vadd.f32 %v3777, %v3827
      %v3829 = vpop.f32.mrb[0].mxu0
      %v3830 = vpop.f32.mrb[0].mxu0
      %v3831 = vadd.f32 %v3777, %v3830
      %v3832 = vpop.f32.mrb[0].mxu0
      %3833 = vdwg.mxu0
      %v3834 = vadd.f32 %v2135, %v3828
      %v3835 = vadd.f32 %v2136, %v3831
      %v3836 = vsel %vm434, %v3834, 0.0
      %3837 = vadd.xlane.f32.xlu0 %v3836
      %v3838 = vpop.xlane.xlu0 %3837
      %v3839 = vsel %vm434, %v3835, 0.0
      %3840 = vadd.xlane.f32.xlu0 %v3839
      %v3841 = vpop.xlane.xlu0 %3840
      %v3842 = vmul.f32 %v3838, %v441
      %v3843 = vmul.f32 %v3841, %v441
      %v3844 = vsub.f32 %v3834, %v3842
      %v3845 = vsub.f32 %v3835, %v3843
      %v3846 = vmul.f32 %v3844, %v3844
      %v3847 = vmul.f32 %v3845, %v3845
      %v3848 = vsel %vm434, %v3846, 0.0
      %3849 = vadd.xlane.f32.xlu0 %v3848
      %v3850 = vpop.xlane.xlu0 %3849
      %v3851 = vsel %vm434, %v3847, 0.0
      %3852 = vadd.xlane.f32.xlu0 %v3851
      %v3853 = vpop.xlane.xlu0 %3852
      %v3854 = vmul.f32 %v3850, %v441
      %v3855 = vmul.f32 %v3853, %v441
      %v3856 = vadd.f32 %v3854, 1e-05
      %v3857 = vadd.f32 %v3855, 1e-05
      %v3858 = vrsqrt.pop %v3856
      %v3859 = vrsqrt.pop %v3857
      %v3860 = vmul.f32 %v3844, %v3858
      %v3861 = vmul.f32 %v3845, %v3859
      %v3862 = vlaneseq
      %v3863 = vshrl.u32 %v3862, 7
      %v3864 = vsub.s32 4, %v3863
      %v3865 = vrot.slane %v429, %v3864
      %v3866 = vmul.f32 %v3860, %v3865
      %v3867 = vmul.f32 %v3861, %v3865
      %v3868 = vlaneseq
      %v3869 = vshrl.u32 %v3868, 7
      %v3870 = vsub.s32 5, %v3869
      %v3871 = vrot.slane %v429, %v3870
      %v3872 = vadd.f32 %v3866, %v3871
      %v3873 = vadd.f32 %v3867, %v3871
      %v3874 = vpack.c.bf16 %v3873, %v3872
      %v3875 = vld [vmem:[%s390] sm:$0xf]
      %v3876 = vld [vmem:[%s390 + $0x4] sm:$0xf]
      %v3877 = vld [vmem:[%s390 + $0x8] sm:$0xf]
      %v3878 = vld [vmem:[%s390 + $0xc] sm:$0xf]
      %v3879 = vld [vmem:[%s403] sm:$0x1]
      %v3881 = vlaneseq
      %v3882 = vshrl.u32 %v3881, 7
      %v3883 = vsub.s32 0, %v3882
      %v3884 = vrot.slane %v3879, %v3883
      %v3890 = vunpack.c.l.b16 %v3875
      %v3891 = vunpack.c.l.b16 %v3876
      %v3892 = vunpack.c.l.b16 %v3877
      %v3893 = vunpack.c.l.b16 %v3878
      %v3894 = vpack.c.b16 %v3891, %v3890
      %v3895 = vpack.c.b16 %v3893, %v3892
      %v3899 = vsel %vm434, %v3874, 0
      %3901 = vmatprep.subr.bf16.mxu0 0
      %3902 = vmatpush1.bf16.msra.mxu0 %v3894
      %3903 = vmatprep.subr.bf16.mxu0 0
      %3904 = vmatpush1.bf16.msra.mxu0 %v3895
      %3905 = vmatprep.subr.bf16.mxu0 0
      %3906 = vmatpush1.bf16.msra.mxu0 0
      %3907 = vmatprep.subr.bf16.mxu0 0
      %3908 = vmatpush1.bf16.msra.mxu0 0
      %3909 = vmatprep.subr.bf16.mxu0 0
      %3910 = vmatpush1.bf16.msra.mxu0 0
      %3911 = vmatprep.subr.bf16.mxu0 0
      %3912 = vmatpush1.bf16.msra.mxu0 0
      %3913 = vmatprep.subr.bf16.mxu0 0
      %3914 = vmatpush1.bf16.msra.mxu0 0
      %3915 = vmatprep.subr.bf16.mxu0 0
      %3916 = vmatpush1.bf16.msra.mxu0 0
      %3917 = vmatprep.subr.bf16.mxu0 0
      %3918 = vmatpush1.bf16.msra.mxu0 0
      %3919 = vmatprep.subr.bf16.mxu0 0
      %3920 = vmatpush1.bf16.msra.mxu0 0
      %3921 = vmatprep.subr.bf16.mxu0 0
      %3922 = vmatpush1.bf16.msra.mxu0 0
      %3923 = vmatprep.subr.bf16.mxu0 0
      %3924 = vmatpush1.bf16.msra.mxu0 0
      %3925 = vmatprep.subr.bf16.mxu0 0
      %3926 = vmatpush1.bf16.msra.mxu0 0
      %3927 = vmatprep.subr.bf16.mxu0 0
      %3928 = vmatpush1.bf16.msra.mxu0 0
      %3929 = vmatprep.subr.bf16.mxu0 0
      %3930 = vmatpush1.bf16.msra.mxu0 0
      %3931 = vmatprep.subr.bf16.mxu0 0
      %3932 = vmatpush1.bf16.msra.mxu0 0
      %3933 = vmatprep.mubr.bf16.mxu0 0
      %3934 = vmatmul.mubr.bf16.gmra.mrb[0].mxu0 %v3899
      %v3935 = vpop.f32.mrb[0].mxu0
      %v3936 = vadd.f32 %v3884, %v3935
      %v3937 = vpop.f32.mrb[0].mxu0
      %v3938 = vpop.f32.mrb[0].mxu0
      %v3939 = vadd.f32 %v3884, %v3938
      %v3940 = vpop.f32.mrb[0].mxu0
      %3941 = vdwg.mxu0
      %v3942 = vmul.f32 %v3936, %v3936
      %v3943 = vmul.f32 %v3939, %v3939
      %v3944 = vmul.f32 %v3936, %v3942
      %v3945 = vmul.f32 %v3939, %v3943
      %v3946 = vmul.f32 %v3944, 0.044715
      %v3947 = vmul.f32 %v3945, 0.044715
      %v3948 = vadd.f32 %v3936, %v3946
      %v3949 = vadd.f32 %v3939, %v3947
      %v3950 = vmul.f32 %v3948, 0.7978846
      %v3951 = vmul.f32 %v3949, 0.7978846
      %v3952 = vtanh.pop %v3950
      %v3953 = vtanh.pop %v3951
      %v3954 = vadd.f32 %v3952, 1.0
      %v3955 = vadd.f32 %v3953, 1.0
      %v3956 = vmul.f32 %v3954, 0.5
      %v3957 = vmul.f32 %v3955, 0.5
      %v3958 = vmul.f32 %v3936, %v3956
      %v3959 = vmul.f32 %v3939, %v3957
      %v3960 = vpack.c.bf16 %v3959, %v3958
      %v3961 = vld [vmem:[%s395] sm:$0xf]
      %v3962 = vld [vmem:[%s395 + $0x4] sm:$0xf]
      %v3963 = vld [vmem:[%s395 + $0x8] sm:$0xf]
      %v3964 = vld [vmem:[%s395 + $0xc] sm:$0xf]
      %v3965 = vld [vmem:[%s395 + $0x10] sm:$0xf]
      %v3966 = vld [vmem:[%s395 + $0x14] sm:$0xf]
      %v3967 = vld [vmem:[%s395 + $0x18] sm:$0xf]
      %v3968 = vld [vmem:[%s395 + $0x1c] sm:$0xf]
      %v3969 = vld [vmem:[%s395 + $0x20] sm:$0xf]
      %v3970 = vld [vmem:[%s395 + $0x24] sm:$0xf]
      %v3971 = vld [vmem:[%s395 + $0x28] sm:$0xf]
      %v3972 = vld [vmem:[%s395 + $0x2c] sm:$0xf]
      %v3973 = vld [vmem:[%s395 + $0x30] sm:$0xf]
      %v3974 = vld [vmem:[%s395 + $0x34] sm:$0xf]
      %v3975 = vld [vmem:[%s395 + $0x38] sm:$0xf]
      %v3976 = vld [vmem:[%s395 + $0x3c] sm:$0xf]
      %v3993 = vunpack.c.l.b16 %v3961
      %v3994 = vunpack.c.l.b16 %v3962
      %v3995 = vunpack.c.l.b16 %v3963
      %v3996 = vunpack.c.l.b16 %v3964
      %v3997 = vunpack.c.l.b16 %v3965
      %v3998 = vunpack.c.l.b16 %v3966
      %v3999 = vunpack.c.l.b16 %v3967
      %v4000 = vunpack.c.l.b16 %v3968
      %v4001 = vunpack.c.l.b16 %v3969
      %v4002 = vunpack.c.l.b16 %v3970
      %v4003 = vunpack.c.l.b16 %v3971
      %v4004 = vunpack.c.l.b16 %v3972
      %v4005 = vunpack.c.l.b16 %v3973
      %v4006 = vunpack.c.l.b16 %v3974
      %v4007 = vunpack.c.l.b16 %v3975
      %v4008 = vunpack.c.l.b16 %v3976
      %v4009 = vpack.c.b16 %v3994, %v3993
      %v4010 = vpack.c.b16 %v3996, %v3995
      %v4011 = vpack.c.b16 %v3998, %v3997
      %v4012 = vpack.c.b16 %v4000, %v3999
      %v4013 = vpack.c.b16 %v4002, %v4001
      %v4014 = vpack.c.b16 %v4004, %v4003
      %v4015 = vpack.c.b16 %v4006, %v4005
      %v4016 = vpack.c.b16 %v4008, %v4007
      %4025 = vmatprep.subr.bf16.mxu0 0
      %4026 = vmatpush1.bf16.msra.mxu0 %v4009
      %4027 = vmatprep.subr.bf16.mxu0 0
      %4028 = vmatpush1.bf16.msra.mxu0 %v4010
      %4029 = vmatprep.subr.bf16.mxu0 0
      %4030 = vmatpush1.bf16.msra.mxu0 %v4011
      %4031 = vmatprep.subr.bf16.mxu0 0
      %4032 = vmatpush1.bf16.msra.mxu0 %v4012
      %4033 = vmatprep.subr.bf16.mxu0 0
      %4034 = vmatpush1.bf16.msra.mxu0 %v4013
      %4035 = vmatprep.subr.bf16.mxu0 0
      %4036 = vmatpush1.bf16.msra.mxu0 %v4014
      %4037 = vmatprep.subr.bf16.mxu0 0
      %4038 = vmatpush1.bf16.msra.mxu0 %v4015
      %4039 = vmatprep.subr.bf16.mxu0 0
      %4040 = vmatpush1.bf16.msra.mxu0 %v4016
      %4041 = vmatprep.subr.bf16.mxu0 0
      %4042 = vmatpush1.bf16.msra.mxu0 0
      %4043 = vmatprep.subr.bf16.mxu0 0
      %4044 = vmatpush1.bf16.msra.mxu0 0
      %4045 = vmatprep.subr.bf16.mxu0 0
      %4046 = vmatpush1.bf16.msra.mxu0 0
      %4047 = vmatprep.subr.bf16.mxu0 0
      %4048 = vmatpush1.bf16.msra.mxu0 0
      %4049 = vmatprep.subr.bf16.mxu0 0
      %4050 = vmatpush1.bf16.msra.mxu0 0
      %4051 = vmatprep.subr.bf16.mxu0 0
      %4052 = vmatpush1.bf16.msra.mxu0 0
      %4053 = vmatprep.subr.bf16.mxu0 0
      %4054 = vmatpush1.bf16.msra.mxu0 0
      %4055 = vmatprep.subr.bf16.mxu0 0
      %4056 = vmatpush1.bf16.msra.mxu0 0
      %4057 = vmatprep.mubr.bf16.mxu0 0
      %4058 = vmatmul.mubr.bf16.gmra.mrb[0].mxu0 %v3960
      %v4059 = vpop.f32.mrb[0].mxu0
      %v4060 = vadd.f32 0.0, %v4059
      %v4061 = vpop.f32.mrb[0].mxu0
      %v4062 = vpop.f32.mrb[0].mxu0
      %v4063 = vadd.f32 0.0, %v4062
      %v4064 = vpop.f32.mrb[0].mxu0
      %4065 = vdwg.mxu0
      %v4066 = vadd.f32 %v3834, %v4060
      %v4067 = vadd.f32 %v3835, %v4063
      %v4068 = vlaneseq
      %v4069 = vshrl.u32 %v4068, 7
      %v4070 = vsub.s32 6, %v4069
      %v4071 = vrot.slane %v429, %v4070
      %v4072 = vadd.f32 %v4066, %v4071
      %v4073 = vadd.f32 %v4067, %v4071
      %4074 = vst.msk [vmem:[#allocation2] sm:$0xff] %vm434, %v4072
      %4075 = vst.msk [vmem:[#allocation2 + $0x8] sm:$0xff] %vm434, %v4073
      %p4076 = scmp.eq.s32.totalorder %s23, 1
      // Predicated region
      $region53: #{pepbart_forward.2} parent=47 // pred_check
        %p4077 = pneg %p4076
      $region54: #{pepbart_forward.2} parent=47 // pred_check_branch
        %4079 = sbr.rel (%p4077) target = $region56
      $region55: #{pepbart_forward.2} parent=47 // pred_region
        %4080 = vst.msk [vmem:[%s408] sm:$0xff] %vm434, %v4072
        %4081 = vst.msk [vmem:[%s408 + $0x8] sm:$0xff] %vm434, %v4073
      $region56: #{pepbart_forward.2} parent=47 // pred_fallthru
        _
      %s4082 = smul.u32 2, %s22
      %p4083 = scmp.lt.s32.totalorder %s4082, 1
      %s4084 = scalar_select %p4083, %s4082, 1
      %s4085 = smul.addr %s4084, 8
      %s4086 = scalar_lea.vmem %s7, %s4085
      // Predicated region
      $region57: #{pepbart_forward.2} parent=47 // pred_check
        %p4087 = pneg %p230
      $region58: #{pepbart_forward.2} parent=47 // pred_check_branch
        %4089 = sbr.rel (%p4087) target = $region60
      $region59: #{pepbart_forward.2} parent=47 // pred_region
        %s4090 = smul.u32 2, %s22
      $region60: #{pepbart_forward.2} parent=47 // pred_fallthru
        _
      // Predicated region
      $region61: #{pepbart_forward.2} parent=47 // pred_check
        %p4091 = pneg %p230
      $region62: #{pepbart_forward.2} parent=47 // pred_check_branch
        %4093 = sbr.rel (%p4091) target = $region64
      $region63: #{pepbart_forward.2} parent=47 // pred_region
        %s4094 = smul.u32 2, %s22
        %p4095 = scmp.lt.s32.totalorder %s4094, 1
        %s4096 = scalar_select %p4095, %s4094, 1
        %s4097 = smul.addr %s4096, 8
        %s4098 = scalar_lea.vmem %s7, %s4097
      $region64: #{pepbart_forward.2} parent=47 // pred_fallthru
        _
    $region48: #{pepbart_forward.2} parent=5 // pred_fallthru
      _
    %p4099 = scmp.le.s32.totalorder 2, %s13
    // Predicated region
    $region65: #{pepbart_forward.2} parent=5 // pred_check
      %p4100 = pneg %p4099
    $region66: #{pepbart_forward.2} parent=5 // pred_check_branch
      %4102 = sbr.rel (%p4100) target = $region68
    $region67: #{pepbart_forward.2} parent=5 // pred_region
      %s4103 = ssub.s32 %s13, 2
    $region68: #{pepbart_forward.2} parent=5 // pred_fallthru
      _
  $region6: #{pepbart_forward.2} parent=0 // loop_footer
    %s17 = sadd.s32 1, %s13
  $region7: #{pepbart_forward.2} parent=0 // loop_footer_branch
    %12 = sbr.rel target = $region3
  $region8: #{pepbart_forward.2} parent=0 // loop_exit
    _

</llo_original>
